<compile_context>
chip_gen: v6e
topology: v6e:2x2x1
jax: 0.10.0
libtpu: 0.0.40
codegen_flags: <defaults>
</compile_context>

<pallas_src>
import math
from functools import lru_cache, partial

import numpy as np
import jax
import jax.numpy as jnp
from jax.experimental import pallas as pl
from jax.experimental.pallas import tpu as pltpu


def _nearest_src_indices(out_size: int, in_size: int, scale: float) -> np.ndarray:
    # PyTorch nearest (scale_factor given): src = min(floor(dst / scale), in_size - 1)
    idx = np.floor(np.arange(out_size, dtype=np.float64) / scale).astype(np.int64)
    return np.minimum(idx, in_size - 1)


@lru_cache(maxsize=None)
def _selectors(h_in, w_in, h_out, w_out, sh, sw, block_planes):
    src_h = _nearest_src_indices(h_out, h_in, sh)
    src_w = _nearest_src_indices(w_out, w_in, sw)
    hsel = np.zeros((h_out, h_in), np.float32)
    hsel[np.arange(h_out), src_h] = 1.0
    # Block-diagonal H selector: all B planes of one grid step are handled by a
    # single large MXU matmul (M = B*H_out, K = B*H_in) instead of B tiny ones.
    hsel_blk = np.kron(np.eye(block_planes, dtype=np.float32), hsel)
    wsel = np.zeros((w_in, w_out), np.float32)
    wsel[src_w, np.arange(w_out)] = 1.0
    return hsel_blk, wsel


def _upsample_kernel(hsel_ref, x_ref, wsel_ref, o_ref):
    # hsel_ref: (B*H_out, B*H_in)  block-diagonal row selector (resident)
    # x_ref:    (B*H_in, W_in)     B stacked real/imag planes
    # wsel_ref: (W_in, W_out)      column selector (resident)
    # o_ref:    (B*H_out, W_out)
    # Nearest upsample as two exact one-hot matmuls; HIGHEST precision keeps the
    # "copy" accurate (no bf16 rounding of the f32 payload on the MXU).
    xw = jnp.dot(x_ref[...], wsel_ref[...],
                 preferred_element_type=jnp.float32,
                 precision=jax.lax.Precision.HIGHEST)            # (B*H_in, W_out)
    o_ref[...] = jnp.dot(hsel_ref[...], xw,
                         preferred_element_type=jnp.float32,
                         precision=jax.lax.Precision.HIGHEST)    # (B*H_out, W_out)


@partial(jax.jit, static_argnums=(1,))
def complex_upsample(x: jax.Array, scale_factor):
    """Equivalent of ComplexUpsample(scale_factor).forward(x) for complex NCHW x."""
    sh, sw = scale_factor
    N, C, H_in, W_in = x.shape
    H_out = int(math.floor(H_in * float(sh)))
    W_out = int(math.floor(W_in * float(sw)))

    P = 2 * N * C                      # total real-valued planes
    B = math.gcd(P, 8)                 # up to 8 planes per grid step
    if P // B < 2 and B > 1:           # keep >=2 grid steps for v7x's 2 TensorCores
        B = math.gcd(P, max(1, B // 2))
    if (B * H_in) % 8 or (B * H_out) % 8:   # block 2nd-minor must be 8-aligned
        B = P                               # unless the block spans the full array
    grid = (P // B,)

    hsel_np, wsel_np = _selectors(H_in, W_in, H_out, W_out, float(sh), float(sw), B)
    hsel = jnp.asarray(hsel_np)        # constants under jit: no per-call upload
    wsel = jnp.asarray(wsel_np)

    # TODO(synk): lax.bitcast_convert_type rejects width-changing complex casts,
    # so the real/imag split + recombine still costs one HBM round trip each way.
    planes = jnp.stack([jnp.real(x), jnp.imag(x)], axis=0)        # (2, N, C, H, W)
    planes = planes.reshape(P * H_in, W_in).astype(jnp.float32)   # 2-D slab

    out = pl.pallas_call(
        _upsample_kernel,
        out_shape=jax.ShapeDtypeStruct((P * H_out, W_out), jnp.float32),
        grid=grid,
        in_specs=[
            pl.BlockSpec((B * H_out, B * H_in), lambda i: (0, 0)),   # resident
            pl.BlockSpec((B * H_in, W_in), lambda i: (i, 0)),
            pl.BlockSpec((W_in, W_out), lambda i: (0, 0)),           # resident
        ],
        out_specs=pl.BlockSpec((B * H_out, W_out), lambda i: (i, 0)),
        compiler_params=pltpu.CompilerParams(dimension_semantics=("parallel",)),
    )(hsel, planes, wsel)

    out = out.reshape(2, N, C, H_out, W_out)
    return (out[0] + 1j * out[1]).astype(x.dtype)


if __name__ == "__main__":
    key = jax.random.PRNGKey(0)
    kr, ki = jax.random.split(key)
    N, C, H, W = 2, 4, 16, 16
    scale = (2.0, 2.0)

    xr = jax.random.normal(kr, (N, C, H, W), dtype=jnp.float32)
    xi = jax.random.normal(ki, (N, C, H, W), dtype=jnp.float32)
    x = (xr + 1j * xi).astype(jnp.complex64)

    y = jax.block_until_ready(complex_upsample(x, scale))

    # pure-JAX reference (nearest-neighbor gather) for a correctness check
    H_out = int(math.floor(H * scale[0]))
    W_out = int(math.floor(W * scale[1]))
    src_h = _nearest_src_indices(H_out, H, scale[0])
    src_w = _nearest_src_indices(W_out, W, scale[1])
    ref = x[:, :, src_h, :][:, :, :, src_w]

    assert y.shape == (N, C, H_out, W_out)
    assert y.dtype == jnp.complex64
    np.testing.assert_allclose(np.asarray(y), np.asarray(ref), rtol=1e-5, atol=1e-5)
    print("KERNEL_OK")
</pallas_src>

<mosaic_0001>
module attributes {stable_mosaic.version = 11 : i64} {
  func.func @_upsample_kernel(%arg0: i32, %arg1: memref<256x128xf32, #tpu.memory_space<vmem>>, %arg2: memref<128x16xf32, #tpu.memory_space<vmem>>, %arg3: memref<16x32xf32, #tpu.memory_space<vmem>>, %arg4: memref<256x32xf32, #tpu.memory_space<vmem>>) attributes {dimension_semantics = [#tpu.dimension_semantics<parallel>], iteration_bounds = array<i64: 2>, scalar_prefetch = 0 : i64, scratch_operands = 0 : i64, tpu.core_type = #tpu.core_type<tc>, window_params = [{pipeline_mode = #tpu.pipeline_mode<synchronous>, transform_indices = @transform_0, window_bounds = array<i64: 256, 128>}, {transform_indices = @transform_1, window_bounds = array<i64: 128, 16>}, {pipeline_mode = #tpu.pipeline_mode<synchronous>, transform_indices = @transform_2, window_bounds = array<i64: 16, 32>}, {transform_indices = @transform_3, window_bounds = array<i64: 256, 32>}]} {
    %c0 = arith.constant 0 : index
    %c0_0 = arith.constant 0 : index
    %0 = vector.load %arg2[%c0, %c0_0] : memref<128x16xf32, #tpu.memory_space<vmem>>, vector<128x16xf32>
    %c0_1 = arith.constant 0 : index
    %c0_2 = arith.constant 0 : index
    %1 = vector.load %arg3[%c0_1, %c0_2] : memref<16x32xf32, #tpu.memory_space<vmem>>, vector<16x32xf32>
    %cst = arith.constant dense<0.000000e+00> : vector<128x32xf32>
    %2 = tpu.matmul %0, %1, %cst {dimension_numbers = #tpu.dot_dimension_numbers<[1], [0], [0], [1], [0, 0, 1, 1], [], []>, precision = #tpu.contract_precision<fp32>} : vector<128x16xf32>, vector<16x32xf32>, vector<128x32xf32> -> vector<128x32xf32>
    %c0_3 = arith.constant 0 : index
    %c0_4 = arith.constant 0 : index
    %3 = vector.load %arg1[%c0_3, %c0_4] : memref<256x128xf32, #tpu.memory_space<vmem>>, vector<256x128xf32>
    %cst_5 = arith.constant dense<0.000000e+00> : vector<256x32xf32>
    %4 = tpu.matmul %3, %2, %cst_5 {dimension_numbers = #tpu.dot_dimension_numbers<[1], [0], [0], [1], [0, 0, 1, 1], [], []>, precision = #tpu.contract_precision<fp32>} : vector<256x128xf32>, vector<128x32xf32>, vector<256x32xf32> -> vector<256x32xf32>
    %c0_6 = arith.constant 0 : index
    %c0_7 = arith.constant 0 : index
    %5 = vector.load %arg4[%c0_6, %c0_7] : memref<256x32xf32, #tpu.memory_space<vmem>>, vector<256x32xf32>
    tpu.vector_store %arg4[%c0_6, %c0_7], %4 {strides = array<i32>} : memref<256x32xf32, #tpu.memory_space<vmem>>, vector<256x32xf32>,
    return
  }
  func.func @transform_0(%arg0: i32) -> (i32, i32) {
    %c0_i32 = arith.constant 0 : i32
    %c0_i32_0 = arith.constant 0 : i32
    %c0_i32_1 = arith.constant 0 : i32
    return %c0_i32, %c0_i32_0 : i32, i32
  }
  func.func @transform_1(%arg0: i32) -> (i32, i32) {
    %c0_i32 = arith.constant 0 : i32
    %c0_i32_0 = arith.constant 0 : i32
    return %arg0, %c0_i32 : i32, i32
  }
  func.func @transform_2(%arg0: i32) -> (i32, i32) {
    %c0_i32 = arith.constant 0 : i32
    %c0_i32_0 = arith.constant 0 : i32
    %c0_i32_1 = arith.constant 0 : i32
    return %c0_i32, %c0_i32_0 : i32, i32
  }
  func.func @transform_3(%arg0: i32) -> (i32, i32) {
    %c0_i32 = arith.constant 0 : i32
    %c0_i32_0 = arith.constant 0 : i32
    return %arg0, %c0_i32 : i32, i32
  }
}

</mosaic_0001>

<llo_original>
// kernel: custom-call
$region0: #{custom-call}
  %s0 = inlined_call_operand.hbm [shape: c64[2,4,16,16], index: 0, kind: input, shape index: {}]
  %s1 = inlined_call_operand.vmem [shape: f32[2,4,16,16], index: 1, kind: output, shape index: {}]
  $region1: #{custom-call} parent=0
    #allocation0 [shape = 's32[1]{0}', space=sflag, size = 0x4, scoped, tag = 'scoped memory for custom-call']
    %2 = vsyncpa [#allocation0], 0
    %s3 = sshll.u32 %s1, 4
    %s4 = int_to_ptr.vmem [resolvable:$true] %s3
    %6 = dma.hbm_to_vmem [thread:$0]  %s0, 2048, %s4, [#allocation0]
    %7 = dma.done [#allocation0], 2048
    %8 = vsyncpa [#allocation0], 1

// kernel: custom-call.1
$region0: #{custom-call.1}
  %s0 = inlined_call_operand.hbm [shape: c64[2,4,16,16], index: 0, kind: input, shape index: {}]
  %s1 = inlined_call_operand.vmem [shape: f32[2,4,16,16], index: 1, kind: output, shape index: {}]
  %s2 = scalar_lea.hbm %s0, 2048
  $region1: #{custom-call.1} parent=0
    #allocation0 [shape = 's32[1]{0}', space=sflag, size = 0x4, scoped, tag = 'scoped memory for custom-call.1']
    %3 = vsyncpa [#allocation0], 0
    %s4 = sshll.u32 %s1, 4
    %s5 = int_to_ptr.vmem [resolvable:$true] %s4
    %7 = dma.hbm_to_vmem [thread:$0]  %s2, 2048, %s5, [#allocation0]
    %8 = dma.done [#allocation0], 2048
    %9 = vsyncpa [#allocation0], 1

// kernel: custom-call.2
$region0: #{custom-call.2}
  %s0 = inlined_call_operand.vmem [shape: f32[2,4,32,32], index: 0, kind: input, shape index: {}]
  %s1 = inlined_call_operand.vmem [shape: f32[2,4,32,32], index: 1, kind: input, shape index: {}]
  %s2 = inlined_call_operand.hbm [shape: c64[2,4,32,32], index: 2, kind: output, shape index: {}]
  %s3 = scalar_lea.hbm %s2, 4096
  $region1: #{custom-call.2} parent=0
    #allocation0 [shape = 's32[1]{0}', space=sflag, size = 0x4, scoped, tag = 'scoped memory for custom-call.2']
    %4 = vsyncpa [#allocation0], 0
    %s5 = sshll.u32 %s0, 4
    %s6 = int_to_ptr.vmem [resolvable:$true] %s5
    %8 = dma.vmem_to_hbm [thread:$0]  %s6, 4096, %s2, [#allocation0]
    %9 = dma.done [#allocation0], 4096
    %10 = vsyncpa [#allocation0], 1
  $region2: #{custom-call.2} parent=0
    #allocation1 [shape = 's32[1]{0}', space=sflag, size = 0x4, scoped, tag = 'scoped memory for custom-call.2']
    %11 = vsyncpa [#allocation1], 0
    %s12 = sshll.u32 %s1, 4
    %s13 = int_to_ptr.vmem [resolvable:$true] %s12
    %15 = dma.vmem_to_hbm [thread:$0]  %s13, 4096, %s3, [#allocation1]
    %16 = dma.done [#allocation1], 4096
    %17 = vsyncpa [#allocation1], 1

// kernel: complex_upsample.1
$region0: #{complex_upsample.1}
  #allocation0 [shape = 'u32[]', space=smem, size = 0x4, offset = 0x4, fixed_abs, tag = 'smem constant byte address 0x4 - core index']
  #allocation1 [shape = 'u32[144,128]{1,0:T(1,128)}', space=vmem, size = 0x12000, scoped, tag = 'internal scratch']
  %s0 = inlined_call_operand.vmem [shape: f32[256,128], index: 0, kind: input, shape index: {}]
  %s1 = inlined_call_operand.vmem [shape: f32[256,16], index: 1, kind: input, shape index: {}]
  %s2 = inlined_call_operand.vmem [shape: f32[16,32], index: 2, kind: input, shape index: {}]
  %s3 = inlined_call_operand.vmem [shape: f32[512,32], index: 3, kind: output, shape index: {}]
  %s4 = sld [smem:[#allocation0]]
  $region45: #{complex_upsample.1} parent=0
    _
  %s6 = ssub.s32 1, %s4
  %s7 = scalar_select 0, %s6, %s4
  loop: start=0, step=1, limit=4
  $region2: #{complex_upsample.1} parent=0 // loop_pre_header
    _
  $region3: #{complex_upsample.1} parent=0 // loop_header
    %s9 = sphi 0, %s13
    %p10 = scmp.ge.s32.totalorder %s9, 4
    %s17 = sphi 0, %s17
    %s19 = sphi 0, %s17
    %s20 = sphi 0, %s19
    %s34 = sphi 0, %s20
    %s40 = sphi 0, %s42
    %s43 = sphi 0, %s40
    %s44 = sphi 0, %s43
    %s60 = sphi 0, %s44
    %s64 = sphi 0, %s64
    %s66 = sphi 0, %s64
    %s67 = sphi 0, %s66
    %s81 = sphi 0, %s67
    %s87 = sphi 0, %s89
    %s90 = sphi 0, %s87
    %s91 = sphi 0, %s90
    %s107 = sphi 0, %s91
  $region4: #{complex_upsample.1} parent=0 // loop_header_branch
    %12 = sbr.rel (%p10) target = $region8
  $region5: #{complex_upsample.1} parent=0 // loop_body
    %s14 = ssub.s32 %s9, 1
    %s15 = ssub.s32 %s9, 2
    %s16 = sadd.s32 %s9, 1
    %s18 = sadd.s32 %s17, 1
    %p21 = scmp.eq.s32.totalorder %s9, 1
    %p22 = scmp.ne.s32.totalorder %s17, %s19
    %p23 = scmp.eq.s32.totalorder %s9, 0
    %p24 = por %p22, %p23
    %p25 = scmp.ne.s32.totalorder %s17, %s19
    %p26 = scmp.eq.s32.totalorder %s14, 1
    %p27 = por %p25, %p26
    %p28 = scmp.ne.s32.totalorder %s19, %s20
    %p29 = scmp.eq.s32.totalorder %s14, 0
    %p30 = por %p28, %p29
    %p31 = scmp.ne.s32.totalorder %s19, %s20
    %p32 = scmp.eq.s32.totalorder %s15, 1
    %p33 = por %p31, %p32
    %p35 = scmp.ne.s32.totalorder %s20, %s34
    %p36 = scmp.eq.s32.totalorder %s15, 0
    %p37 = por %p35, %p36
    %s38 = ssub.s32 %s9, %s16
    %p39 = scmp.eq.s32.totalorder %s38, 0
    %s41 = sadd.s32 %s40, 1
    %s42 = scalar_select %p39, %s40, %s41
    %p45 = pneg %p39
    %p46 = scmp.eq.s32.totalorder %s9, 1
    %p47 = por %p45, %p46
    %p48 = scmp.ne.s32.totalorder %s40, %s43
    %p49 = scmp.eq.s32.totalorder %s9, 0
    %p50 = por %p48, %p49
    %p51 = scmp.ne.s32.totalorder %s40, %s43
    %p52 = scmp.eq.s32.totalorder %s14, 1
    %p53 = por %p51, %p52
    %p54 = scmp.ne.s32.totalorder %s43, %s44
    %p55 = scmp.eq.s32.totalorder %s14, 0
    %p56 = por %p54, %p55
    %p57 = scmp.ne.s32.totalorder %s43, %s44
    %p58 = scmp.eq.s32.totalorder %s15, 1
    %p59 = por %p57, %p58
    %p61 = scmp.ne.s32.totalorder %s44, %s60
    %p62 = scmp.eq.s32.totalorder %s15, 0
    %p63 = por %p61, %p62
    %s65 = sadd.s32 %s64, 1
    %p68 = scmp.eq.s32.totalorder %s9, 1
    %p69 = scmp.ne.s32.totalorder %s64, %s66
    %p70 = scmp.eq.s32.totalorder %s9, 0
    %p71 = por %p69, %p70
    %p72 = scmp.ne.s32.totalorder %s64, %s66
    %p73 = scmp.eq.s32.totalorder %s14, 1
    %p74 = por %p72, %p73
    %p75 = scmp.ne.s32.totalorder %s66, %s67
    %p76 = scmp.eq.s32.totalorder %s14, 0
    %p77 = por %p75, %p76
    %p78 = scmp.ne.s32.totalorder %s66, %s67
    %p79 = scmp.eq.s32.totalorder %s15, 1
    %p80 = por %p78, %p79
    %p82 = scmp.ne.s32.totalorder %s67, %s81
    %p83 = scmp.eq.s32.totalorder %s15, 0
    %p84 = por %p82, %p83
    %s85 = ssub.s32 %s9, %s16
    %p86 = scmp.eq.s32.totalorder %s85, 0
    %s88 = sadd.s32 %s87, 1
    %s89 = scalar_select %p86, %s87, %s88
    %p92 = pneg %p86
    %p93 = scmp.eq.s32.totalorder %s9, 1
    %p94 = por %p92, %p93
    %p95 = scmp.ne.s32.totalorder %s87, %s90
    %p96 = scmp.eq.s32.totalorder %s9, 0
    %p97 = por %p95, %p96
    %p98 = scmp.ne.s32.totalorder %s87, %s90
    %p99 = scmp.eq.s32.totalorder %s14, 1
    %p100 = por %p98, %p99
    %p101 = scmp.ne.s32.totalorder %s90, %s91
    %p102 = scmp.eq.s32.totalorder %s14, 0
    %p103 = por %p101, %p102
    %p104 = scmp.ne.s32.totalorder %s90, %s91
    %p105 = scmp.eq.s32.totalorder %s15, 1
    %p106 = por %p104, %p105
    %p108 = scmp.ne.s32.totalorder %s91, %s107
    %p109 = scmp.eq.s32.totalorder %s15, 0
    %p110 = por %p108, %p109
    %p111 = scmp.le.s32.totalorder 1, %s9
    %p112 = scmp.lt.s32.totalorder %s9, 3
    %p113 = pnand %p111, %p112
    %p114 = pneg %p113
    // Predicated region
    $region9: #{complex_upsample.1} parent=5 // pred_check
      _
    $region10: #{complex_upsample.1} parent=5 // pred_check_branch
      %116 = sbr.rel (%p113) target = $region12
    $region11: #{complex_upsample.1} parent=5 // pred_region
      %s117 = ssub.s32 %s9, 1
      // Predicated region
      $region13: #{complex_upsample.1} parent=11 // pred_check
        %p118 = pneg %p30
      $region14: #{complex_upsample.1} parent=11 // pred_check_branch
        %120 = sbr.rel (%p118) target = $region16
      $region15: #{complex_upsample.1} parent=11 // pred_region
        _
      $region16: #{complex_upsample.1} parent=11 // pred_fallthru
        _
      // Predicated region
      $region17: #{complex_upsample.1} parent=11 // pred_check
        %p121 = pneg %p77
      $region18: #{complex_upsample.1} parent=11 // pred_check_branch
        %123 = sbr.rel (%p121) target = $region20
      $region19: #{complex_upsample.1} parent=11 // pred_region
        _
      $region20: #{complex_upsample.1} parent=11 // pred_fallthru
        _
    $region12: #{complex_upsample.1} parent=5 // pred_fallthru
      _
    %p124 = scmp.lt.s32.totalorder %s9, 2
    // Predicated region
    $region21: #{complex_upsample.1} parent=5 // pred_check
      %p125 = pneg %p124
    $region22: #{complex_upsample.1} parent=5 // pred_check_branch
      %127 = sbr.rel (%p125) target = $region24
    $region23: #{complex_upsample.1} parent=5 // pred_region
      // Predicated region
      $region25: #{complex_upsample.1} parent=23 // pred_check
        %p128 = pneg %p50
      $region26: #{complex_upsample.1} parent=23 // pred_check_branch
        %130 = sbr.rel (%p128) target = $region28
      $region27: #{complex_upsample.1} parent=23 // pred_region
        %s131 = smul.u32 16, %s9
        %p132 = scmp.lt.s32.totalorder %s131, 31
        %s133 = scalar_select %p132, %s131, 31
        %s134 = smul.addr %s133, 8
        %s135 = scalar_lea.vmem %s1, %s134
        %s136 = smul.u32 16, %s9
      $region28: #{complex_upsample.1} parent=23 // pred_fallthru
        _
    $region24: #{complex_upsample.1} parent=5 // pred_fallthru
      _
    %p137 = scmp.le.s32.totalorder 1, %s9
    %p138 = scmp.lt.s32.totalorder %s9, 3
    %p139 = pnand %p137, %p138
    %p140 = pneg %p139
    // Predicated region
    $region29: #{complex_upsample.1} parent=5 // pred_check
      _
    $region30: #{complex_upsample.1} parent=5 // pred_check_branch
      %142 = sbr.rel (%p139) target = $region32
    $region31: #{complex_upsample.1} parent=5 // pred_region
      %s143 = ssub.s32 %s9, 1
      %p144 = pneg %p30
      %p145 = pneg %p27
      %s146 = smul.u32 16, %s14
      %p147 = scmp.lt.s32.totalorder %s146, 31
      %s148 = scalar_select %p147, %s146, 31
      %s149 = smul.addr %s148, 8
      %s150 = scalar_lea.vmem %s1, %s149
      %p151 = pneg %p56
      %p152 = pneg %p53
      %p153 = pneg %p77
      %p154 = pneg %p74
      %p155 = pneg %p103
      %p156 = pneg %p100
      %s157 = smul.u32 32, %s14
      %p158 = scmp.lt.s32.totalorder %s157, 63
      %s159 = scalar_select %p158, %s157, 63
      %s160 = smul.addr %s159, 8
      %s161 = scalar_lea.vmem %s3, %s160
      %s162 = smul.u32 16, %s14
      %p163 = scmp.lt.s32.totalorder %s162, 31
      %s164 = scalar_select %p163, %s162, 31
      %s165 = smul.addr %s164, 8
      %s166 = scalar_lea.vmem %s1, %s165
      %s167 = smul.u32 16, %s14
      %s168 = smul.u32 32, %s14
      %p169 = scmp.lt.s32.totalorder %s168, 63
      %s170 = scalar_select %p169, %s168, 63
      %s171 = smul.addr %s170, 8
      %s172 = scalar_lea.vmem %s3, %s171
      %s173 = smul.u32 32, %s14
      %v174 = vld [vmem:[%s166] sm:$0xff]
      %v175 = vld [vmem:[%s166 + $0x8] sm:$0xff]
      %v176 = vld [vmem:[%s166 + $0x10] sm:$0xff]
      %v177 = vld [vmem:[%s166 + $0x18] sm:$0xff]
      %v178 = vld [vmem:[%s166 + $0x20] sm:$0xff]
      %v179 = vld [vmem:[%s166 + $0x28] sm:$0xff]
      %v180 = vld [vmem:[%s166 + $0x30] sm:$0xff]
      %v181 = vld [vmem:[%s166 + $0x38] sm:$0xff]
      %v182 = vld [vmem:[%s166 + $0x40] sm:$0xff]
      %v183 = vld [vmem:[%s166 + $0x48] sm:$0xff]
      %v184 = vld [vmem:[%s166 + $0x50] sm:$0xff]
      %v185 = vld [vmem:[%s166 + $0x58] sm:$0xff]
      %v186 = vld [vmem:[%s166 + $0x60] sm:$0xff]
      %v187 = vld [vmem:[%s166 + $0x68] sm:$0xff]
      %v188 = vld [vmem:[%s166 + $0x70] sm:$0xff]
      %v189 = vld [vmem:[%s166 + $0x78] sm:$0xff]
      %v190 = vld [vmem:[%s2] sm:$0xff]
      %v191 = vld [vmem:[%s2 + $0x8] sm:$0xff]
      %vm192 = vcmask 130048
      %v194 = vsel %vm192, %v174, 0
      %v197 = vsel %vm192, %v175, 0
      %v200 = vsel %vm192, %v176, 0
      %v203 = vsel %vm192, %v177, 0
      %v206 = vsel %vm192, %v178, 0
      %v209 = vsel %vm192, %v179, 0
      %v212 = vsel %vm192, %v180, 0
      %v215 = vsel %vm192, %v181, 0
      %v218 = vsel %vm192, %v182, 0
      %v221 = vsel %vm192, %v183, 0
      %v224 = vsel %vm192, %v184, 0
      %v227 = vsel %vm192, %v185, 0
      %v230 = vsel %vm192, %v186, 0
      %v233 = vsel %vm192, %v187, 0
      %v236 = vsel %vm192, %v188, 0
      %v239 = vsel %vm192, %v189, 0
      %241 = vmatprep.subr.mxu0 0.0
      %242 = vmatpush1.msra.mxu0 0.0
      %243 = vmatprep.subr.mxu0 0.0
      %244 = vmatpush1.msra.mxu0 0.0
      %245 = vmatprep.subr.mxu0 0.0
      %246 = vmatpush1.msra.mxu0 0.0
      %247 = vmatprep.subr.mxu0 0.0
      %248 = vmatpush1.msra.mxu0 0.0
      %249 = vmatprep.subr.mxu0 0.0
      %250 = vmatpush1.msra.mxu0 0.0
      %251 = vmatprep.subr.mxu0 0.0
      %252 = vmatpush1.msra.mxu0 0.0
      %253 = vmatprep.subr.mxu0 0.0
      %254 = vmatpush1.msra.mxu0 0.0
      %255 = vmatprep.subr.mxu0 0.0
      %256 = vmatpush1.msra.mxu0 0.0
      %257 = vmatprep.subr.mxu0 0.0
      %258 = vmatpush1.msra.mxu0 0.0
      %259 = vmatprep.subr.mxu0 0.0
      %260 = vmatpush1.msra.mxu0 0.0
      %261 = vmatprep.subr.mxu0 0.0
      %262 = vmatpush1.msra.mxu0 0.0
      %263 = vmatprep.subr.mxu0 0.0
      %264 = vmatpush1.msra.mxu0 0.0
      %265 = vmatprep.subr.mxu0 0.0
      %266 = vmatpush1.msra.mxu0 0.0
      %267 = vmatprep.subr.mxu0 0.0
      %268 = vmatpush1.msra.mxu0 0.0
      %269 = vmatprep.subr.mxu0 0.0
      %v270 = vand.u32 %v191, 4294901760
      %271 = vmatpush1.msra.mxu0 %v270
      %272 = vmatprep.subr.mxu0 0.0
      %v273 = vand.u32 %v190, 4294901760
      %274 = vmatpush1.msra.mxu0 %v273
      %275 = vmatprep.subr.mxu0 0.0
      %276 = vmatpush2.msra.mxu0 0.0
      %277 = vmatprep.subr.mxu0 0.0
      %278 = vmatpush2.msra.mxu0 0.0
      %279 = vmatprep.subr.mxu0 0.0
      %280 = vmatpush2.msra.mxu0 0.0
      %281 = vmatprep.subr.mxu0 0.0
      %282 = vmatpush2.msra.mxu0 0.0
      %283 = vmatprep.subr.mxu0 0.0
      %284 = vmatpush2.msra.mxu0 0.0
      %285 = vmatprep.subr.mxu0 0.0
      %286 = vmatpush2.msra.mxu0 0.0
      %287 = vmatprep.subr.mxu0 0.0
      %288 = vmatpush2.msra.mxu0 0.0
      %289 = vmatprep.subr.mxu0 0.0
      %290 = vmatpush2.msra.mxu0 0.0
      %291 = vmatprep.subr.mxu0 0.0
      %292 = vmatpush2.msra.mxu0 0.0
      %293 = vmatprep.subr.mxu0 0.0
      %294 = vmatpush2.msra.mxu0 0.0
      %295 = vmatprep.subr.mxu0 0.0
      %296 = vmatpush2.msra.mxu0 0.0
      %297 = vmatprep.subr.mxu0 0.0
      %298 = vmatpush2.msra.mxu0 0.0
      %299 = vmatprep.subr.mxu0 0.0
      %300 = vmatpush2.msra.mxu0 0.0
      %301 = vmatprep.subr.mxu0 0.0
      %302 = vmatpush2.msra.mxu0 0.0
      %303 = vmatprep.subr.mxu0 0.0
      %304 = vmatpush2.msra.mxu0 0.0
      %305 = vmatprep.subr.mxu0 0.0
      %306 = vmatpush2.msra.mxu0 0.0
      %307 = vmatprep.mubr.f32.mxu0 0.0
      %v308 = vand.u32 %v194, 4294901760
      %v309 = vsub.f32 %v194, %v308
      %v310 = vand.u32 %v309, 4294901760
      %v311 = vsub.f32 %v309, %v310
      %v312 = vand.u32 %v311, 4294901760
      %313 = vmatmul.mubr.f32.gmra.mxu0 %v312
      %v314 = vpop.f32.mrf.mxu0
      %v315 = vadd.f32 0.0, %v314
      %v316 = vpop.f32.mrf.mxu0
      %317 = vmatprep.mubr.f32.mxu0 0.0
      %v318 = vand.u32 %v197, 4294901760
      %v319 = vsub.f32 %v197, %v318
      %v320 = vand.u32 %v319, 4294901760
      %v321 = vsub.f32 %v319, %v320
      %v322 = vand.u32 %v321, 4294901760
      %323 = vmatmul.mubr.f32.gmra.mxu0 %v322
      %v324 = vpop.f32.mrf.mxu0
      %v325 = vadd.f32 0.0, %v324
      %v326 = vpop.f32.mrf.mxu0
      %327 = vmatprep.mubr.f32.mxu0 0.0
      %v328 = vand.u32 %v200, 4294901760
      %v329 = vsub.f32 %v200, %v328
      %v330 = vand.u32 %v329, 4294901760
      %v331 = vsub.f32 %v329, %v330
      %v332 = vand.u32 %v331, 4294901760
      %333 = vmatmul.mubr.f32.gmra.mxu0 %v332
      %v334 = vpop.f32.mrf.mxu0
      %v335 = vadd.f32 0.0, %v334
      %v336 = vpop.f32.mrf.mxu0
      %337 = vmatprep.mubr.f32.mxu0 0.0
      %v338 = vand.u32 %v203, 4294901760
      %v339 = vsub.f32 %v203, %v338
      %v340 = vand.u32 %v339, 4294901760
      %v341 = vsub.f32 %v339, %v340
      %v342 = vand.u32 %v341, 4294901760
      %343 = vmatmul.mubr.f32.gmra.mxu0 %v342
      %v344 = vpop.f32.mrf.mxu0
      %v345 = vadd.f32 0.0, %v344
      %v346 = vpop.f32.mrf.mxu0
      %347 = vmatprep.mubr.f32.mxu0 0.0
      %v348 = vand.u32 %v206, 4294901760
      %v349 = vsub.f32 %v206, %v348
      %v350 = vand.u32 %v349, 4294901760
      %v351 = vsub.f32 %v349, %v350
      %v352 = vand.u32 %v351, 4294901760
      %353 = vmatmul.mubr.f32.gmra.mxu0 %v352
      %v354 = vpop.f32.mrf.mxu0
      %v355 = vadd.f32 0.0, %v354
      %v356 = vpop.f32.mrf.mxu0
      %357 = vmatprep.mubr.f32.mxu0 0.0
      %v358 = vand.u32 %v209, 4294901760
      %v359 = vsub.f32 %v209, %v358
      %v360 = vand.u32 %v359, 4294901760
      %v361 = vsub.f32 %v359, %v360
      %v362 = vand.u32 %v361, 4294901760
      %363 = vmatmul.mubr.f32.gmra.mxu0 %v362
      %v364 = vpop.f32.mrf.mxu0
      %v365 = vadd.f32 0.0, %v364
      %v366 = vpop.f32.mrf.mxu0
      %367 = vmatprep.mubr.f32.mxu0 0.0
      %v368 = vand.u32 %v212, 4294901760
      %v369 = vsub.f32 %v212, %v368
      %v370 = vand.u32 %v369, 4294901760
      %v371 = vsub.f32 %v369, %v370
      %v372 = vand.u32 %v371, 4294901760
      %373 = vmatmul.mubr.f32.gmra.mxu0 %v372
      %v374 = vpop.f32.mrf.mxu0
      %v375 = vadd.f32 0.0, %v374
      %v376 = vpop.f32.mrf.mxu0
      %377 = vmatprep.mubr.f32.mxu0 0.0
      %v378 = vand.u32 %v215, 4294901760
      %v379 = vsub.f32 %v215, %v378
      %v380 = vand.u32 %v379, 4294901760
      %v381 = vsub.f32 %v379, %v380
      %v382 = vand.u32 %v381, 4294901760
      %383 = vmatmul.mubr.f32.gmra.mxu0 %v382
      %v384 = vpop.f32.mrf.mxu0
      %v385 = vadd.f32 0.0, %v384
      %v386 = vpop.f32.mrf.mxu0
      %387 = vmatprep.mubr.f32.mxu0 0.0
      %v388 = vand.u32 %v218, 4294901760
      %v389 = vsub.f32 %v218, %v388
      %v390 = vand.u32 %v389, 4294901760
      %v391 = vsub.f32 %v389, %v390
      %v392 = vand.u32 %v391, 4294901760
      %393 = vmatmul.mubr.f32.gmra.mxu0 %v392
      %v394 = vpop.f32.mrf.mxu0
      %v395 = vadd.f32 0.0, %v394
      %v396 = vpop.f32.mrf.mxu0
      %397 = vmatprep.mubr.f32.mxu0 0.0
      %v398 = vand.u32 %v221, 4294901760
      %v399 = vsub.f32 %v221, %v398
      %v400 = vand.u32 %v399, 4294901760
      %v401 = vsub.f32 %v399, %v400
      %v402 = vand.u32 %v401, 4294901760
      %403 = vmatmul.mubr.f32.gmra.mxu0 %v402
      %v404 = vpop.f32.mrf.mxu0
      %v405 = vadd.f32 0.0, %v404
      %v406 = vpop.f32.mrf.mxu0
      %407 = vmatprep.mubr.f32.mxu0 0.0
      %v408 = vand.u32 %v224, 4294901760
      %v409 = vsub.f32 %v224, %v408
      %v410 = vand.u32 %v409, 4294901760
      %v411 = vsub.f32 %v409, %v410
      %v412 = vand.u32 %v411, 4294901760
      %413 = vmatmul.mubr.f32.gmra.mxu0 %v412
      %v414 = vpop.f32.mrf.mxu0
      %v415 = vadd.f32 0.0, %v414
      %v416 = vpop.f32.mrf.mxu0
      %417 = vmatprep.mubr.f32.mxu0 0.0
      %v418 = vand.u32 %v227, 4294901760
      %v419 = vsub.f32 %v227, %v418
      %v420 = vand.u32 %v419, 4294901760
      %v421 = vsub.f32 %v419, %v420
      %v422 = vand.u32 %v421, 4294901760
      %423 = vmatmul.mubr.f32.gmra.mxu0 %v422
      %v424 = vpop.f32.mrf.mxu0
      %v425 = vadd.f32 0.0, %v424
      %v426 = vpop.f32.mrf.mxu0
      %427 = vmatprep.mubr.f32.mxu0 0.0
      %v428 = vand.u32 %v230, 4294901760
      %v429 = vsub.f32 %v230, %v428
      %v430 = vand.u32 %v429, 4294901760
      %v431 = vsub.f32 %v429, %v430
      %v432 = vand.u32 %v431, 4294901760
      %433 = vmatmul.mubr.f32.gmra.mxu0 %v432
      %v434 = vpop.f32.mrf.mxu0
      %v435 = vadd.f32 0.0, %v434
      %v436 = vpop.f32.mrf.mxu0
      %437 = vmatprep.mubr.f32.mxu0 0.0
      %v438 = vand.u32 %v233, 4294901760
      %v439 = vsub.f32 %v233, %v438
      %v440 = vand.u32 %v439, 4294901760
      %v441 = vsub.f32 %v439, %v440
      %v442 = vand.u32 %v441, 4294901760
      %443 = vmatmul.mubr.f32.gmra.mxu0 %v442
      %v444 = vpop.f32.mrf.mxu0
      %v445 = vadd.f32 0.0, %v444
      %v446 = vpop.f32.mrf.mxu0
      %447 = vmatprep.mubr.f32.mxu0 0.0
      %v448 = vand.u32 %v236, 4294901760
      %v449 = vsub.f32 %v236, %v448
      %v450 = vand.u32 %v449, 4294901760
      %v451 = vsub.f32 %v449, %v450
      %v452 = vand.u32 %v451, 4294901760
      %453 = vmatmul.mubr.f32.gmra.mxu0 %v452
      %v454 = vpop.f32.mrf.mxu0
      %v455 = vadd.f32 0.0, %v454
      %v456 = vpop.f32.mrf.mxu0
      %457 = vmatprep.mubr.f32.mxu0 0.0
      %v458 = vand.u32 %v239, 4294901760
      %v459 = vsub.f32 %v239, %v458
      %v460 = vand.u32 %v459, 4294901760
      %v461 = vsub.f32 %v459, %v460
      %v462 = vand.u32 %v461, 4294901760
      %463 = vmatmul.mubr.f32.gmra.mxu0 %v462
      %v464 = vpop.f32.mrf.mxu0
      %v465 = vadd.f32 0.0, %v464
      %v466 = vpop.f32.mrf.mxu0
      %467 = vdwg.mxu0
      %468 = vmatprep.subr.mxu0 0.0
      %469 = vmatpush1.msra.mxu0 0.0
      %470 = vmatprep.subr.mxu0 0.0
      %471 = vmatpush1.msra.mxu0 0.0
      %472 = vmatprep.subr.mxu0 0.0
      %473 = vmatpush1.msra.mxu0 0.0
      %474 = vmatprep.subr.mxu0 0.0
      %475 = vmatpush1.msra.mxu0 0.0
      %476 = vmatprep.subr.mxu0 0.0
      %477 = vmatpush1.msra.mxu0 0.0
      %478 = vmatprep.subr.mxu0 0.0
      %479 = vmatpush1.msra.mxu0 0.0
      %480 = vmatprep.subr.mxu0 0.0
      %481 = vmatpush1.msra.mxu0 0.0
      %482 = vmatprep.subr.mxu0 0.0
      %483 = vmatpush1.msra.mxu0 0.0
      %484 = vmatprep.subr.mxu0 0.0
      %485 = vmatpush1.msra.mxu0 0.0
      %486 = vmatprep.subr.mxu0 0.0
      %487 = vmatpush1.msra.mxu0 0.0
      %488 = vmatprep.subr.mxu0 0.0
      %489 = vmatpush1.msra.mxu0 0.0
      %490 = vmatprep.subr.mxu0 0.0
      %491 = vmatpush1.msra.mxu0 0.0
      %492 = vmatprep.subr.mxu0 0.0
      %493 = vmatpush1.msra.mxu0 0.0
      %494 = vmatprep.subr.mxu0 0.0
      %495 = vmatpush1.msra.mxu0 0.0
      %496 = vmatprep.subr.mxu0 0.0
      %v497 = vand.u32 %v191, 4294901760
      %v498 = vsub.f32 %v191, %v497
      %v499 = vand.u32 %v498, 4294901760
      %v500 = vsub.f32 %v498, %v499
      %v501 = vand.u32 %v500, 4294901760
      %502 = vmatpush1.msra.mxu0 %v501
      %503 = vmatprep.subr.mxu0 0.0
      %v504 = vand.u32 %v190, 4294901760
      %v505 = vsub.f32 %v190, %v504
      %v506 = vand.u32 %v505, 4294901760
      %v507 = vsub.f32 %v505, %v506
      %v508 = vand.u32 %v507, 4294901760
      %509 = vmatpush1.msra.mxu0 %v508
      %510 = vmatprep.subr.mxu0 0.0
      %511 = vmatpush2.msra.mxu0 0.0
      %512 = vmatprep.subr.mxu0 0.0
      %513 = vmatpush2.msra.mxu0 0.0
      %514 = vmatprep.subr.mxu0 0.0
      %515 = vmatpush2.msra.mxu0 0.0
      %516 = vmatprep.subr.mxu0 0.0
      %517 = vmatpush2.msra.mxu0 0.0
      %518 = vmatprep.subr.mxu0 0.0
      %519 = vmatpush2.msra.mxu0 0.0
      %520 = vmatprep.subr.mxu0 0.0
      %521 = vmatpush2.msra.mxu0 0.0
      %522 = vmatprep.subr.mxu0 0.0
      %523 = vmatpush2.msra.mxu0 0.0
      %524 = vmatprep.subr.mxu0 0.0
      %525 = vmatpush2.msra.mxu0 0.0
      %526 = vmatprep.subr.mxu0 0.0
      %527 = vmatpush2.msra.mxu0 0.0
      %528 = vmatprep.subr.mxu0 0.0
      %529 = vmatpush2.msra.mxu0 0.0
      %530 = vmatprep.subr.mxu0 0.0
      %531 = vmatpush2.msra.mxu0 0.0
      %532 = vmatprep.subr.mxu0 0.0
      %533 = vmatpush2.msra.mxu0 0.0
      %534 = vmatprep.subr.mxu0 0.0
      %535 = vmatpush2.msra.mxu0 0.0
      %536 = vmatprep.subr.mxu0 0.0
      %537 = vmatpush2.msra.mxu0 0.0
      %538 = vmatprep.subr.mxu0 0.0
      %539 = vmatpush2.msra.mxu0 0.0
      %540 = vmatprep.subr.mxu0 0.0
      %541 = vmatpush2.msra.mxu0 0.0
      %542 = vmatprep.mubr.f32.mxu0 0.0
      %v543 = vand.u32 %v194, 4294901760
      %544 = vmatmul.mubr.f32.gmra.mxu0 %v543
      %v545 = vpop.f32.mrf.mxu0
      %v546 = vadd.f32 %v315, %v545
      %v547 = vpop.f32.mrf.mxu0
      %548 = vmatprep.mubr.f32.mxu0 0.0
      %v549 = vand.u32 %v197, 4294901760
      %550 = vmatmul.mubr.f32.gmra.mxu0 %v549
      %v551 = vpop.f32.mrf.mxu0
      %v552 = vadd.f32 %v325, %v551
      %v553 = vpop.f32.mrf.mxu0
      %554 = vmatprep.mubr.f32.mxu0 0.0
      %v555 = vand.u32 %v200, 4294901760
      %556 = vmatmul.mubr.f32.gmra.mxu0 %v555
      %v557 = vpop.f32.mrf.mxu0
      %v558 = vadd.f32 %v335, %v557
      %v559 = vpop.f32.mrf.mxu0
      %560 = vmatprep.mubr.f32.mxu0 0.0
      %v561 = vand.u32 %v203, 4294901760
      %562 = vmatmul.mubr.f32.gmra.mxu0 %v561
      %v563 = vpop.f32.mrf.mxu0
      %v564 = vadd.f32 %v345, %v563
      %v565 = vpop.f32.mrf.mxu0
      %566 = vmatprep.mubr.f32.mxu0 0.0
      %v567 = vand.u32 %v206, 4294901760
      %568 = vmatmul.mubr.f32.gmra.mxu0 %v567
      %v569 = vpop.f32.mrf.mxu0
      %v570 = vadd.f32 %v355, %v569
      %v571 = vpop.f32.mrf.mxu0
      %572 = vmatprep.mubr.f32.mxu0 0.0
      %v573 = vand.u32 %v209, 4294901760
      %574 = vmatmul.mubr.f32.gmra.mxu0 %v573
      %v575 = vpop.f32.mrf.mxu0
      %v576 = vadd.f32 %v365, %v575
      %v577 = vpop.f32.mrf.mxu0
      %578 = vmatprep.mubr.f32.mxu0 0.0
      %v579 = vand.u32 %v212, 4294901760
      %580 = vmatmul.mubr.f32.gmra.mxu0 %v579
      %v581 = vpop.f32.mrf.mxu0
      %v582 = vadd.f32 %v375, %v581
      %v583 = vpop.f32.mrf.mxu0
      %584 = vmatprep.mubr.f32.mxu0 0.0
      %v585 = vand.u32 %v215, 4294901760
      %586 = vmatmul.mubr.f32.gmra.mxu0 %v585
      %v587 = vpop.f32.mrf.mxu0
      %v588 = vadd.f32 %v385, %v587
      %v589 = vpop.f32.mrf.mxu0
      %590 = vmatprep.mubr.f32.mxu0 0.0
      %v591 = vand.u32 %v218, 4294901760
      %592 = vmatmul.mubr.f32.gmra.mxu0 %v591
      %v593 = vpop.f32.mrf.mxu0
      %v594 = vadd.f32 %v395, %v593
      %v595 = vpop.f32.mrf.mxu0
      %596 = vmatprep.mubr.f32.mxu0 0.0
      %v597 = vand.u32 %v221, 4294901760
      %598 = vmatmul.mubr.f32.gmra.mxu0 %v597
      %v599 = vpop.f32.mrf.mxu0
      %v600 = vadd.f32 %v405, %v599
      %v601 = vpop.f32.mrf.mxu0
      %602 = vmatprep.mubr.f32.mxu0 0.0
      %v603 = vand.u32 %v224, 4294901760
      %604 = vmatmul.mubr.f32.gmra.mxu0 %v603
      %v605 = vpop.f32.mrf.mxu0
      %v606 = vadd.f32 %v415, %v605
      %v607 = vpop.f32.mrf.mxu0
      %608 = vmatprep.mubr.f32.mxu0 0.0
      %v609 = vand.u32 %v227, 4294901760
      %610 = vmatmul.mubr.f32.gmra.mxu0 %v609
      %v611 = vpop.f32.mrf.mxu0
      %v612 = vadd.f32 %v425, %v611
      %v613 = vpop.f32.mrf.mxu0
      %614 = vmatprep.mubr.f32.mxu0 0.0
      %v615 = vand.u32 %v230, 4294901760
      %616 = vmatmul.mubr.f32.gmra.mxu0 %v615
      %v617 = vpop.f32.mrf.mxu0
      %v618 = vadd.f32 %v435, %v617
      %v619 = vpop.f32.mrf.mxu0
      %620 = vmatprep.mubr.f32.mxu0 0.0
      %v621 = vand.u32 %v233, 4294901760
      %622 = vmatmul.mubr.f32.gmra.mxu0 %v621
      %v623 = vpop.f32.mrf.mxu0
      %v624 = vadd.f32 %v445, %v623
      %v625 = vpop.f32.mrf.mxu0
      %626 = vmatprep.mubr.f32.mxu0 0.0
      %v627 = vand.u32 %v236, 4294901760
      %628 = vmatmul.mubr.f32.gmra.mxu0 %v627
      %v629 = vpop.f32.mrf.mxu0
      %v630 = vadd.f32 %v455, %v629
      %v631 = vpop.f32.mrf.mxu0
      %632 = vmatprep.mubr.f32.mxu0 0.0
      %v633 = vand.u32 %v239, 4294901760
      %634 = vmatmul.mubr.f32.gmra.mxu0 %v633
      %v635 = vpop.f32.mrf.mxu0
      %v636 = vadd.f32 %v465, %v635
      %v637 = vpop.f32.mrf.mxu0
      %638 = vdwg.mxu0
      %639 = vmatprep.subr.mxu0 0.0
      %640 = vmatpush1.msra.mxu0 0.0
      %641 = vmatprep.subr.mxu0 0.0
      %642 = vmatpush1.msra.mxu0 0.0
      %643 = vmatprep.subr.mxu0 0.0
      %644 = vmatpush1.msra.mxu0 0.0
      %645 = vmatprep.subr.mxu0 0.0
      %646 = vmatpush1.msra.mxu0 0.0
      %647 = vmatprep.subr.mxu0 0.0
      %648 = vmatpush1.msra.mxu0 0.0
      %649 = vmatprep.subr.mxu0 0.0
      %650 = vmatpush1.msra.mxu0 0.0
      %651 = vmatprep.subr.mxu0 0.0
      %652 = vmatpush1.msra.mxu0 0.0
      %653 = vmatprep.subr.mxu0 0.0
      %654 = vmatpush1.msra.mxu0 0.0
      %655 = vmatprep.subr.mxu0 0.0
      %656 = vmatpush1.msra.mxu0 0.0
      %657 = vmatprep.subr.mxu0 0.0
      %658 = vmatpush1.msra.mxu0 0.0
      %659 = vmatprep.subr.mxu0 0.0
      %660 = vmatpush1.msra.mxu0 0.0
      %661 = vmatprep.subr.mxu0 0.0
      %662 = vmatpush1.msra.mxu0 0.0
      %663 = vmatprep.subr.mxu0 0.0
      %664 = vmatpush1.msra.mxu0 0.0
      %665 = vmatprep.subr.mxu0 0.0
      %666 = vmatpush1.msra.mxu0 0.0
      %667 = vmatprep.subr.mxu0 0.0
      %v668 = vand.u32 %v191, 4294901760
      %v669 = vsub.f32 %v191, %v668
      %670 = vmatpush1.msra.mxu0 %v669
      %671 = vmatprep.subr.mxu0 0.0
      %v672 = vand.u32 %v190, 4294901760
      %v673 = vsub.f32 %v190, %v672
      %674 = vmatpush1.msra.mxu0 %v673
      %675 = vmatprep.subr.mxu0 0.0
      %676 = vmatpush2.msra.mxu0 0.0
      %677 = vmatprep.subr.mxu0 0.0
      %678 = vmatpush2.msra.mxu0 0.0
      %679 = vmatprep.subr.mxu0 0.0
      %680 = vmatpush2.msra.mxu0 0.0
      %681 = vmatprep.subr.mxu0 0.0
      %682 = vmatpush2.msra.mxu0 0.0
      %683 = vmatprep.subr.mxu0 0.0
      %684 = vmatpush2.msra.mxu0 0.0
      %685 = vmatprep.subr.mxu0 0.0
      %686 = vmatpush2.msra.mxu0 0.0
      %687 = vmatprep.subr.mxu0 0.0
      %688 = vmatpush2.msra.mxu0 0.0
      %689 = vmatprep.subr.mxu0 0.0
      %690 = vmatpush2.msra.mxu0 0.0
      %691 = vmatprep.subr.mxu0 0.0
      %692 = vmatpush2.msra.mxu0 0.0
      %693 = vmatprep.subr.mxu0 0.0
      %694 = vmatpush2.msra.mxu0 0.0
      %695 = vmatprep.subr.mxu0 0.0
      %696 = vmatpush2.msra.mxu0 0.0
      %697 = vmatprep.subr.mxu0 0.0
      %698 = vmatpush2.msra.mxu0 0.0
      %699 = vmatprep.subr.mxu0 0.0
      %700 = vmatpush2.msra.mxu0 0.0
      %701 = vmatprep.subr.mxu0 0.0
      %702 = vmatpush2.msra.mxu0 0.0
      %703 = vmatprep.subr.mxu0 0.0
      %704 = vmatpush2.msra.mxu0 0.0
      %705 = vmatprep.subr.mxu0 0.0
      %706 = vmatpush2.msra.mxu0 0.0
      %707 = vmatprep.mubr.f32.mxu0 0.0
      %v708 = vand.u32 %v194, 4294901760
      %v709 = vsub.f32 %v194, %v708
      %710 = vmatmul.mubr.f32.gmra.mxu0 %v709
      %v711 = vpop.f32.mrf.mxu0
      %v712 = vadd.f32 %v546, %v711
      %v713 = vpop.f32.mrf.mxu0
      %714 = vmatprep.mubr.f32.mxu0 0.0
      %v715 = vand.u32 %v197, 4294901760
      %v716 = vsub.f32 %v197, %v715
      %717 = vmatmul.mubr.f32.gmra.mxu0 %v716
      %v718 = vpop.f32.mrf.mxu0
      %v719 = vadd.f32 %v552, %v718
      %v720 = vpop.f32.mrf.mxu0
      %721 = vmatprep.mubr.f32.mxu0 0.0
      %v722 = vand.u32 %v200, 4294901760
      %v723 = vsub.f32 %v200, %v722
      %724 = vmatmul.mubr.f32.gmra.mxu0 %v723
      %v725 = vpop.f32.mrf.mxu0
      %v726 = vadd.f32 %v558, %v725
      %v727 = vpop.f32.mrf.mxu0
      %728 = vmatprep.mubr.f32.mxu0 0.0
      %v729 = vand.u32 %v203, 4294901760
      %v730 = vsub.f32 %v203, %v729
      %731 = vmatmul.mubr.f32.gmra.mxu0 %v730
      %v732 = vpop.f32.mrf.mxu0
      %v733 = vadd.f32 %v564, %v732
      %v734 = vpop.f32.mrf.mxu0
      %735 = vmatprep.mubr.f32.mxu0 0.0
      %v736 = vand.u32 %v206, 4294901760
      %v737 = vsub.f32 %v206, %v736
      %738 = vmatmul.mubr.f32.gmra.mxu0 %v737
      %v739 = vpop.f32.mrf.mxu0
      %v740 = vadd.f32 %v570, %v739
      %v741 = vpop.f32.mrf.mxu0
      %742 = vmatprep.mubr.f32.mxu0 0.0
      %v743 = vand.u32 %v209, 4294901760
      %v744 = vsub.f32 %v209, %v743
      %745 = vmatmul.mubr.f32.gmra.mxu0 %v744
      %v746 = vpop.f32.mrf.mxu0
      %v747 = vadd.f32 %v576, %v746
      %v748 = vpop.f32.mrf.mxu0
      %749 = vmatprep.mubr.f32.mxu0 0.0
      %v750 = vand.u32 %v212, 4294901760
      %v751 = vsub.f32 %v212, %v750
      %752 = vmatmul.mubr.f32.gmra.mxu0 %v751
      %v753 = vpop.f32.mrf.mxu0
      %v754 = vadd.f32 %v582, %v753
      %v755 = vpop.f32.mrf.mxu0
      %756 = vmatprep.mubr.f32.mxu0 0.0
      %v757 = vand.u32 %v215, 4294901760
      %v758 = vsub.f32 %v215, %v757
      %759 = vmatmul.mubr.f32.gmra.mxu0 %v758
      %v760 = vpop.f32.mrf.mxu0
      %v761 = vadd.f32 %v588, %v760
      %v762 = vpop.f32.mrf.mxu0
      %763 = vmatprep.mubr.f32.mxu0 0.0
      %v764 = vand.u32 %v218, 4294901760
      %v765 = vsub.f32 %v218, %v764
      %766 = vmatmul.mubr.f32.gmra.mxu0 %v765
      %v767 = vpop.f32.mrf.mxu0
      %v768 = vadd.f32 %v594, %v767
      %v769 = vpop.f32.mrf.mxu0
      %770 = vmatprep.mubr.f32.mxu0 0.0
      %v771 = vand.u32 %v221, 4294901760
      %v772 = vsub.f32 %v221, %v771
      %773 = vmatmul.mubr.f32.gmra.mxu0 %v772
      %v774 = vpop.f32.mrf.mxu0
      %v775 = vadd.f32 %v600, %v774
      %v776 = vpop.f32.mrf.mxu0
      %777 = vmatprep.mubr.f32.mxu0 0.0
      %v778 = vand.u32 %v224, 4294901760
      %v779 = vsub.f32 %v224, %v778
      %780 = vmatmul.mubr.f32.gmra.mxu0 %v779
      %v781 = vpop.f32.mrf.mxu0
      %v782 = vadd.f32 %v606, %v781
      %v783 = vpop.f32.mrf.mxu0
      %784 = vmatprep.mubr.f32.mxu0 0.0
      %v785 = vand.u32 %v227, 4294901760
      %v786 = vsub.f32 %v227, %v785
      %787 = vmatmul.mubr.f32.gmra.mxu0 %v786
      %v788 = vpop.f32.mrf.mxu0
      %v789 = vadd.f32 %v612, %v788
      %v790 = vpop.f32.mrf.mxu0
      %791 = vmatprep.mubr.f32.mxu0 0.0
      %v792 = vand.u32 %v230, 4294901760
      %v793 = vsub.f32 %v230, %v792
      %794 = vmatmul.mubr.f32.gmra.mxu0 %v793
      %v795 = vpop.f32.mrf.mxu0
      %v796 = vadd.f32 %v618, %v795
      %v797 = vpop.f32.mrf.mxu0
      %798 = vmatprep.mubr.f32.mxu0 0.0
      %v799 = vand.u32 %v233, 4294901760
      %v800 = vsub.f32 %v233, %v799
      %801 = vmatmul.mubr.f32.gmra.mxu0 %v800
      %v802 = vpop.f32.mrf.mxu0
      %v803 = vadd.f32 %v624, %v802
      %v804 = vpop.f32.mrf.mxu0
      %805 = vmatprep.mubr.f32.mxu0 0.0
      %v806 = vand.u32 %v236, 4294901760
      %v807 = vsub.f32 %v236, %v806
      %808 = vmatmul.mubr.f32.gmra.mxu0 %v807
      %v809 = vpop.f32.mrf.mxu0
      %v810 = vadd.f32 %v630, %v809
      %v811 = vpop.f32.mrf.mxu0
      %812 = vmatprep.mubr.f32.mxu0 0.0
      %v813 = vand.u32 %v239, 4294901760
      %v814 = vsub.f32 %v239, %v813
      %815 = vmatmul.mubr.f32.gmra.mxu0 %v814
      %v816 = vpop.f32.mrf.mxu0
      %v817 = vadd.f32 %v636, %v816
      %v818 = vpop.f32.mrf.mxu0
      %819 = vdwg.mxu0
      %820 = vmatprep.subr.mxu0 0.0
      %821 = vmatpush1.msra.mxu0 0.0
      %822 = vmatprep.subr.mxu0 0.0
      %823 = vmatpush1.msra.mxu0 0.0
      %824 = vmatprep.subr.mxu0 0.0
      %825 = vmatpush1.msra.mxu0 0.0
      %826 = vmatprep.subr.mxu0 0.0
      %827 = vmatpush1.msra.mxu0 0.0
      %828 = vmatprep.subr.mxu0 0.0
      %829 = vmatpush1.msra.mxu0 0.0
      %830 = vmatprep.subr.mxu0 0.0
      %831 = vmatpush1.msra.mxu0 0.0
      %832 = vmatprep.subr.mxu0 0.0
      %833 = vmatpush1.msra.mxu0 0.0
      %834 = vmatprep.subr.mxu0 0.0
      %835 = vmatpush1.msra.mxu0 0.0
      %836 = vmatprep.subr.mxu0 0.0
      %837 = vmatpush1.msra.mxu0 0.0
      %838 = vmatprep.subr.mxu0 0.0
      %839 = vmatpush1.msra.mxu0 0.0
      %840 = vmatprep.subr.mxu0 0.0
      %841 = vmatpush1.msra.mxu0 0.0
      %842 = vmatprep.subr.mxu0 0.0
      %843 = vmatpush1.msra.mxu0 0.0
      %844 = vmatprep.subr.mxu0 0.0
      %845 = vmatpush1.msra.mxu0 0.0
      %846 = vmatprep.subr.mxu0 0.0
      %847 = vmatpush1.msra.mxu0 0.0
      %848 = vmatprep.subr.mxu0 0.0
      %v849 = vand.u32 %v191, 4294901760
      %850 = vmatpush1.msra.mxu0 %v849
      %851 = vmatprep.subr.mxu0 0.0
      %v852 = vand.u32 %v190, 4294901760
      %853 = vmatpush1.msra.mxu0 %v852
      %854 = vmatprep.subr.mxu0 0.0
      %855 = vmatpush2.msra.mxu0 0.0
      %856 = vmatprep.subr.mxu0 0.0
      %857 = vmatpush2.msra.mxu0 0.0
      %858 = vmatprep.subr.mxu0 0.0
      %859 = vmatpush2.msra.mxu0 0.0
      %860 = vmatprep.subr.mxu0 0.0
      %861 = vmatpush2.msra.mxu0 0.0
      %862 = vmatprep.subr.mxu0 0.0
      %863 = vmatpush2.msra.mxu0 0.0
      %864 = vmatprep.subr.mxu0 0.0
      %865 = vmatpush2.msra.mxu0 0.0
      %866 = vmatprep.subr.mxu0 0.0
      %867 = vmatpush2.msra.mxu0 0.0
      %868 = vmatprep.subr.mxu0 0.0
      %869 = vmatpush2.msra.mxu0 0.0
      %870 = vmatprep.subr.mxu0 0.0
      %871 = vmatpush2.msra.mxu0 0.0
      %872 = vmatprep.subr.mxu0 0.0
      %873 = vmatpush2.msra.mxu0 0.0
      %874 = vmatprep.subr.mxu0 0.0
      %875 = vmatpush2.msra.mxu0 0.0
      %876 = vmatprep.subr.mxu0 0.0
      %877 = vmatpush2.msra.mxu0 0.0
      %878 = vmatprep.subr.mxu0 0.0
      %879 = vmatpush2.msra.mxu0 0.0
      %880 = vmatprep.subr.mxu0 0.0
      %881 = vmatpush2.msra.mxu0 0.0
      %882 = vmatprep.subr.mxu0 0.0
      %883 = vmatpush2.msra.mxu0 0.0
      %884 = vmatprep.subr.mxu0 0.0
      %885 = vmatpush2.msra.mxu0 0.0
      %886 = vmatprep.mubr.f32.mxu0 0.0
      %v887 = vand.u32 %v194, 4294901760
      %v888 = vsub.f32 %v194, %v887
      %v889 = vand.u32 %v888, 4294901760
      %890 = vmatmul.mubr.f32.gmra.mxu0 %v889
      %v891 = vpop.f32.mrf.mxu0
      %v892 = vadd.f32 %v712, %v891
      %v893 = vpop.f32.mrf.mxu0
      %894 = vmatprep.mubr.f32.mxu0 0.0
      %v895 = vand.u32 %v197, 4294901760
      %v896 = vsub.f32 %v197, %v895
      %v897 = vand.u32 %v896, 4294901760
      %898 = vmatmul.mubr.f32.gmra.mxu0 %v897
      %v899 = vpop.f32.mrf.mxu0
      %v900 = vadd.f32 %v719, %v899
      %v901 = vpop.f32.mrf.mxu0
      %902 = vmatprep.mubr.f32.mxu0 0.0
      %v903 = vand.u32 %v200, 4294901760
      %v904 = vsub.f32 %v200, %v903
      %v905 = vand.u32 %v904, 4294901760
      %906 = vmatmul.mubr.f32.gmra.mxu0 %v905
      %v907 = vpop.f32.mrf.mxu0
      %v908 = vadd.f32 %v726, %v907
      %v909 = vpop.f32.mrf.mxu0
      %910 = vmatprep.mubr.f32.mxu0 0.0
      %v911 = vand.u32 %v203, 4294901760
      %v912 = vsub.f32 %v203, %v911
      %v913 = vand.u32 %v912, 4294901760
      %914 = vmatmul.mubr.f32.gmra.mxu0 %v913
      %v915 = vpop.f32.mrf.mxu0
      %v916 = vadd.f32 %v733, %v915
      %v917 = vpop.f32.mrf.mxu0
      %918 = vmatprep.mubr.f32.mxu0 0.0
      %v919 = vand.u32 %v206, 4294901760
      %v920 = vsub.f32 %v206, %v919
      %v921 = vand.u32 %v920, 4294901760
      %922 = vmatmul.mubr.f32.gmra.mxu0 %v921
      %v923 = vpop.f32.mrf.mxu0
      %v924 = vadd.f32 %v740, %v923
      %v925 = vpop.f32.mrf.mxu0
      %926 = vmatprep.mubr.f32.mxu0 0.0
      %v927 = vand.u32 %v209, 4294901760
      %v928 = vsub.f32 %v209, %v927
      %v929 = vand.u32 %v928, 4294901760
      %930 = vmatmul.mubr.f32.gmra.mxu0 %v929
      %v931 = vpop.f32.mrf.mxu0
      %v932 = vadd.f32 %v747, %v931
      %v933 = vpop.f32.mrf.mxu0
      %934 = vmatprep.mubr.f32.mxu0 0.0
      %v935 = vand.u32 %v212, 4294901760
      %v936 = vsub.f32 %v212, %v935
      %v937 = vand.u32 %v936, 4294901760
      %938 = vmatmul.mubr.f32.gmra.mxu0 %v937
      %v939 = vpop.f32.mrf.mxu0
      %v940 = vadd.f32 %v754, %v939
      %v941 = vpop.f32.mrf.mxu0
      %942 = vmatprep.mubr.f32.mxu0 0.0
      %v943 = vand.u32 %v215, 4294901760
      %v944 = vsub.f32 %v215, %v943
      %v945 = vand.u32 %v944, 4294901760
      %946 = vmatmul.mubr.f32.gmra.mxu0 %v945
      %v947 = vpop.f32.mrf.mxu0
      %v948 = vadd.f32 %v761, %v947
      %v949 = vpop.f32.mrf.mxu0
      %950 = vmatprep.mubr.f32.mxu0 0.0
      %v951 = vand.u32 %v218, 4294901760
      %v952 = vsub.f32 %v218, %v951
      %v953 = vand.u32 %v952, 4294901760
      %954 = vmatmul.mubr.f32.gmra.mxu0 %v953
      %v955 = vpop.f32.mrf.mxu0
      %v956 = vadd.f32 %v768, %v955
      %v957 = vpop.f32.mrf.mxu0
      %958 = vmatprep.mubr.f32.mxu0 0.0
      %v959 = vand.u32 %v221, 4294901760
      %v960 = vsub.f32 %v221, %v959
      %v961 = vand.u32 %v960, 4294901760
      %962 = vmatmul.mubr.f32.gmra.mxu0 %v961
      %v963 = vpop.f32.mrf.mxu0
      %v964 = vadd.f32 %v775, %v963
      %v965 = vpop.f32.mrf.mxu0
      %966 = vmatprep.mubr.f32.mxu0 0.0
      %v967 = vand.u32 %v224, 4294901760
      %v968 = vsub.f32 %v224, %v967
      %v969 = vand.u32 %v968, 4294901760
      %970 = vmatmul.mubr.f32.gmra.mxu0 %v969
      %v971 = vpop.f32.mrf.mxu0
      %v972 = vadd.f32 %v782, %v971
      %v973 = vpop.f32.mrf.mxu0
      %974 = vmatprep.mubr.f32.mxu0 0.0
      %v975 = vand.u32 %v227, 4294901760
      %v976 = vsub.f32 %v227, %v975
      %v977 = vand.u32 %v976, 4294901760
      %978 = vmatmul.mubr.f32.gmra.mxu0 %v977
      %v979 = vpop.f32.mrf.mxu0
      %v980 = vadd.f32 %v789, %v979
      %v981 = vpop.f32.mrf.mxu0
      %982 = vmatprep.mubr.f32.mxu0 0.0
      %v983 = vand.u32 %v230, 4294901760
      %v984 = vsub.f32 %v230, %v983
      %v985 = vand.u32 %v984, 4294901760
      %986 = vmatmul.mubr.f32.gmra.mxu0 %v985
      %v987 = vpop.f32.mrf.mxu0
      %v988 = vadd.f32 %v796, %v987
      %v989 = vpop.f32.mrf.mxu0
      %990 = vmatprep.mubr.f32.mxu0 0.0
      %v991 = vand.u32 %v233, 4294901760
      %v992 = vsub.f32 %v233, %v991
      %v993 = vand.u32 %v992, 4294901760
      %994 = vmatmul.mubr.f32.gmra.mxu0 %v993
      %v995 = vpop.f32.mrf.mxu0
      %v996 = vadd.f32 %v803, %v995
      %v997 = vpop.f32.mrf.mxu0
      %998 = vmatprep.mubr.f32.mxu0 0.0
      %v999 = vand.u32 %v236, 4294901760
      %v1000 = vsub.f32 %v236, %v999
      %v1001 = vand.u32 %v1000, 4294901760
      %1002 = vmatmul.mubr.f32.gmra.mxu0 %v1001
      %v1003 = vpop.f32.mrf.mxu0
      %v1004 = vadd.f32 %v810, %v1003
      %v1005 = vpop.f32.mrf.mxu0
      %1006 = vmatprep.mubr.f32.mxu0 0.0
      %v1007 = vand.u32 %v239, 4294901760
      %v1008 = vsub.f32 %v239, %v1007
      %v1009 = vand.u32 %v1008, 4294901760
      %1010 = vmatmul.mubr.f32.gmra.mxu0 %v1009
      %v1011 = vpop.f32.mrf.mxu0
      %v1012 = vadd.f32 %v817, %v1011
      %v1013 = vpop.f32.mrf.mxu0
      %1014 = vdwg.mxu0
      %1015 = vmatprep.subr.mxu0 0.0
      %1016 = vmatpush1.msra.mxu0 0.0
      %1017 = vmatprep.subr.mxu0 0.0
      %1018 = vmatpush1.msra.mxu0 0.0
      %1019 = vmatprep.subr.mxu0 0.0
      %1020 = vmatpush1.msra.mxu0 0.0
      %1021 = vmatprep.subr.mxu0 0.0
      %1022 = vmatpush1.msra.mxu0 0.0
      %1023 = vmatprep.subr.mxu0 0.0
      %1024 = vmatpush1.msra.mxu0 0.0
      %1025 = vmatprep.subr.mxu0 0.0
      %1026 = vmatpush1.msra.mxu0 0.0
      %1027 = vmatprep.subr.mxu0 0.0
      %1028 = vmatpush1.msra.mxu0 0.0
      %1029 = vmatprep.subr.mxu0 0.0
      %1030 = vmatpush1.msra.mxu0 0.0
      %1031 = vmatprep.subr.mxu0 0.0
      %1032 = vmatpush1.msra.mxu0 0.0
      %1033 = vmatprep.subr.mxu0 0.0
      %1034 = vmatpush1.msra.mxu0 0.0
      %1035 = vmatprep.subr.mxu0 0.0
      %1036 = vmatpush1.msra.mxu0 0.0
      %1037 = vmatprep.subr.mxu0 0.0
      %1038 = vmatpush1.msra.mxu0 0.0
      %1039 = vmatprep.subr.mxu0 0.0
      %1040 = vmatpush1.msra.mxu0 0.0
      %1041 = vmatprep.subr.mxu0 0.0
      %1042 = vmatpush1.msra.mxu0 0.0
      %1043 = vmatprep.subr.mxu0 0.0
      %v1044 = vand.u32 %v191, 4294901760
      %v1045 = vsub.f32 %v191, %v1044
      %v1046 = vand.u32 %v1045, 4294901760
      %1047 = vmatpush1.msra.mxu0 %v1046
      %1048 = vmatprep.subr.mxu0 0.0
      %v1049 = vand.u32 %v190, 4294901760
      %v1050 = vsub.f32 %v190, %v1049
      %v1051 = vand.u32 %v1050, 4294901760
      %1052 = vmatpush1.msra.mxu0 %v1051
      %1053 = vmatprep.subr.mxu0 0.0
      %1054 = vmatpush2.msra.mxu0 0.0
      %1055 = vmatprep.subr.mxu0 0.0
      %1056 = vmatpush2.msra.mxu0 0.0
      %1057 = vmatprep.subr.mxu0 0.0
      %1058 = vmatpush2.msra.mxu0 0.0
      %1059 = vmatprep.subr.mxu0 0.0
      %1060 = vmatpush2.msra.mxu0 0.0
      %1061 = vmatprep.subr.mxu0 0.0
      %1062 = vmatpush2.msra.mxu0 0.0
      %1063 = vmatprep.subr.mxu0 0.0
      %1064 = vmatpush2.msra.mxu0 0.0
      %1065 = vmatprep.subr.mxu0 0.0
      %1066 = vmatpush2.msra.mxu0 0.0
      %1067 = vmatprep.subr.mxu0 0.0
      %1068 = vmatpush2.msra.mxu0 0.0
      %1069 = vmatprep.subr.mxu0 0.0
      %1070 = vmatpush2.msra.mxu0 0.0
      %1071 = vmatprep.subr.mxu0 0.0
      %1072 = vmatpush2.msra.mxu0 0.0
      %1073 = vmatprep.subr.mxu0 0.0
      %1074 = vmatpush2.msra.mxu0 0.0
      %1075 = vmatprep.subr.mxu0 0.0
      %1076 = vmatpush2.msra.mxu0 0.0
      %1077 = vmatprep.subr.mxu0 0.0
      %1078 = vmatpush2.msra.mxu0 0.0
      %1079 = vmatprep.subr.mxu0 0.0
      %1080 = vmatpush2.msra.mxu0 0.0
      %1081 = vmatprep.subr.mxu0 0.0
      %1082 = vmatpush2.msra.mxu0 0.0
      %1083 = vmatprep.subr.mxu0 0.0
      %1084 = vmatpush2.msra.mxu0 0.0
      %1085 = vmatprep.mubr.f32.mxu0 0.0
      %v1086 = vand.u32 %v194, 4294901760
      %1087 = vmatmul.mubr.f32.gmra.mxu0 %v1086
      %v1088 = vpop.f32.mrf.mxu0
      %v1089 = vadd.f32 %v892, %v1088
      %v1090 = vpop.f32.mrf.mxu0
      %1091 = vmatprep.mubr.f32.mxu0 0.0
      %v1092 = vand.u32 %v197, 4294901760
      %1093 = vmatmul.mubr.f32.gmra.mxu0 %v1092
      %v1094 = vpop.f32.mrf.mxu0
      %v1095 = vadd.f32 %v900, %v1094
      %v1096 = vpop.f32.mrf.mxu0
      %1097 = vmatprep.mubr.f32.mxu0 0.0
      %v1098 = vand.u32 %v200, 4294901760
      %1099 = vmatmul.mubr.f32.gmra.mxu0 %v1098
      %v1100 = vpop.f32.mrf.mxu0
      %v1101 = vadd.f32 %v908, %v1100
      %v1102 = vpop.f32.mrf.mxu0
      %1103 = vmatprep.mubr.f32.mxu0 0.0
      %v1104 = vand.u32 %v203, 4294901760
      %1105 = vmatmul.mubr.f32.gmra.mxu0 %v1104
      %v1106 = vpop.f32.mrf.mxu0
      %v1107 = vadd.f32 %v916, %v1106
      %v1108 = vpop.f32.mrf.mxu0
      %1109 = vmatprep.mubr.f32.mxu0 0.0
      %v1110 = vand.u32 %v206, 4294901760
      %1111 = vmatmul.mubr.f32.gmra.mxu0 %v1110
      %v1112 = vpop.f32.mrf.mxu0
      %v1113 = vadd.f32 %v924, %v1112
      %v1114 = vpop.f32.mrf.mxu0
      %1115 = vmatprep.mubr.f32.mxu0 0.0
      %v1116 = vand.u32 %v209, 4294901760
      %1117 = vmatmul.mubr.f32.gmra.mxu0 %v1116
      %v1118 = vpop.f32.mrf.mxu0
      %v1119 = vadd.f32 %v932, %v1118
      %v1120 = vpop.f32.mrf.mxu0
      %1121 = vmatprep.mubr.f32.mxu0 0.0
      %v1122 = vand.u32 %v212, 4294901760
      %1123 = vmatmul.mubr.f32.gmra.mxu0 %v1122
      %v1124 = vpop.f32.mrf.mxu0
      %v1125 = vadd.f32 %v940, %v1124
      %v1126 = vpop.f32.mrf.mxu0
      %1127 = vmatprep.mubr.f32.mxu0 0.0
      %v1128 = vand.u32 %v215, 4294901760
      %1129 = vmatmul.mubr.f32.gmra.mxu0 %v1128
      %v1130 = vpop.f32.mrf.mxu0
      %v1131 = vadd.f32 %v948, %v1130
      %v1132 = vpop.f32.mrf.mxu0
      %1133 = vmatprep.mubr.f32.mxu0 0.0
      %v1134 = vand.u32 %v218, 4294901760
      %1135 = vmatmul.mubr.f32.gmra.mxu0 %v1134
      %v1136 = vpop.f32.mrf.mxu0
      %v1137 = vadd.f32 %v956, %v1136
      %v1138 = vpop.f32.mrf.mxu0
      %1139 = vmatprep.mubr.f32.mxu0 0.0
      %v1140 = vand.u32 %v221, 4294901760
      %1141 = vmatmul.mubr.f32.gmra.mxu0 %v1140
      %v1142 = vpop.f32.mrf.mxu0
      %v1143 = vadd.f32 %v964, %v1142
      %v1144 = vpop.f32.mrf.mxu0
      %1145 = vmatprep.mubr.f32.mxu0 0.0
      %v1146 = vand.u32 %v224, 4294901760
      %1147 = vmatmul.mubr.f32.gmra.mxu0 %v1146
      %v1148 = vpop.f32.mrf.mxu0
      %v1149 = vadd.f32 %v972, %v1148
      %v1150 = vpop.f32.mrf.mxu0
      %1151 = vmatprep.mubr.f32.mxu0 0.0
      %v1152 = vand.u32 %v227, 4294901760
      %1153 = vmatmul.mubr.f32.gmra.mxu0 %v1152
      %v1154 = vpop.f32.mrf.mxu0
      %v1155 = vadd.f32 %v980, %v1154
      %v1156 = vpop.f32.mrf.mxu0
      %1157 = vmatprep.mubr.f32.mxu0 0.0
      %v1158 = vand.u32 %v230, 4294901760
      %1159 = vmatmul.mubr.f32.gmra.mxu0 %v1158
      %v1160 = vpop.f32.mrf.mxu0
      %v1161 = vadd.f32 %v988, %v1160
      %v1162 = vpop.f32.mrf.mxu0
      %1163 = vmatprep.mubr.f32.mxu0 0.0
      %v1164 = vand.u32 %v233, 4294901760
      %1165 = vmatmul.mubr.f32.gmra.mxu0 %v1164
      %v1166 = vpop.f32.mrf.mxu0
      %v1167 = vadd.f32 %v996, %v1166
      %v1168 = vpop.f32.mrf.mxu0
      %1169 = vmatprep.mubr.f32.mxu0 0.0
      %v1170 = vand.u32 %v236, 4294901760
      %1171 = vmatmul.mubr.f32.gmra.mxu0 %v1170
      %v1172 = vpop.f32.mrf.mxu0
      %v1173 = vadd.f32 %v1004, %v1172
      %v1174 = vpop.f32.mrf.mxu0
      %1175 = vmatprep.mubr.f32.mxu0 0.0
      %v1176 = vand.u32 %v239, 4294901760
      %1177 = vmatmul.mubr.f32.gmra.mxu0 %v1176
      %v1178 = vpop.f32.mrf.mxu0
      %v1179 = vadd.f32 %v1012, %v1178
      %v1180 = vpop.f32.mrf.mxu0
      %1181 = vdwg.mxu0
      %1182 = vmatprep.subr.mxu0 0.0
      %1183 = vmatpush1.msra.mxu0 0.0
      %1184 = vmatprep.subr.mxu0 0.0
      %1185 = vmatpush1.msra.mxu0 0.0
      %1186 = vmatprep.subr.mxu0 0.0
      %1187 = vmatpush1.msra.mxu0 0.0
      %1188 = vmatprep.subr.mxu0 0.0
      %1189 = vmatpush1.msra.mxu0 0.0
      %1190 = vmatprep.subr.mxu0 0.0
      %1191 = vmatpush1.msra.mxu0 0.0
      %1192 = vmatprep.subr.mxu0 0.0
      %1193 = vmatpush1.msra.mxu0 0.0
      %1194 = vmatprep.subr.mxu0 0.0
      %1195 = vmatpush1.msra.mxu0 0.0
      %1196 = vmatprep.subr.mxu0 0.0
      %1197 = vmatpush1.msra.mxu0 0.0
      %1198 = vmatprep.subr.mxu0 0.0
      %1199 = vmatpush1.msra.mxu0 0.0
      %1200 = vmatprep.subr.mxu0 0.0
      %1201 = vmatpush1.msra.mxu0 0.0
      %1202 = vmatprep.subr.mxu0 0.0
      %1203 = vmatpush1.msra.mxu0 0.0
      %1204 = vmatprep.subr.mxu0 0.0
      %1205 = vmatpush1.msra.mxu0 0.0
      %1206 = vmatprep.subr.mxu0 0.0
      %1207 = vmatpush1.msra.mxu0 0.0
      %1208 = vmatprep.subr.mxu0 0.0
      %1209 = vmatpush1.msra.mxu0 0.0
      %1210 = vmatprep.subr.mxu0 0.0
      %v1211 = vand.u32 %v191, 4294901760
      %1212 = vmatpush1.msra.mxu0 %v1211
      %1213 = vmatprep.subr.mxu0 0.0
      %v1214 = vand.u32 %v190, 4294901760
      %1215 = vmatpush1.msra.mxu0 %v1214
      %1216 = vmatprep.subr.mxu0 0.0
      %1217 = vmatpush2.msra.mxu0 0.0
      %1218 = vmatprep.subr.mxu0 0.0
      %1219 = vmatpush2.msra.mxu0 0.0
      %1220 = vmatprep.subr.mxu0 0.0
      %1221 = vmatpush2.msra.mxu0 0.0
      %1222 = vmatprep.subr.mxu0 0.0
      %1223 = vmatpush2.msra.mxu0 0.0
      %1224 = vmatprep.subr.mxu0 0.0
      %1225 = vmatpush2.msra.mxu0 0.0
      %1226 = vmatprep.subr.mxu0 0.0
      %1227 = vmatpush2.msra.mxu0 0.0
      %1228 = vmatprep.subr.mxu0 0.0
      %1229 = vmatpush2.msra.mxu0 0.0
      %1230 = vmatprep.subr.mxu0 0.0
      %1231 = vmatpush2.msra.mxu0 0.0
      %1232 = vmatprep.subr.mxu0 0.0
      %1233 = vmatpush2.msra.mxu0 0.0
      %1234 = vmatprep.subr.mxu0 0.0
      %1235 = vmatpush2.msra.mxu0 0.0
      %1236 = vmatprep.subr.mxu0 0.0
      %1237 = vmatpush2.msra.mxu0 0.0
      %1238 = vmatprep.subr.mxu0 0.0
      %1239 = vmatpush2.msra.mxu0 0.0
      %1240 = vmatprep.subr.mxu0 0.0
      %1241 = vmatpush2.msra.mxu0 0.0
      %1242 = vmatprep.subr.mxu0 0.0
      %1243 = vmatpush2.msra.mxu0 0.0
      %1244 = vmatprep.subr.mxu0 0.0
      %1245 = vmatpush2.msra.mxu0 0.0
      %1246 = vmatprep.subr.mxu0 0.0
      %1247 = vmatpush2.msra.mxu0 0.0
      %1248 = vmatprep.mubr.f32.mxu0 0.0
      %v1249 = vand.u32 %v194, 4294901760
      %1250 = vmatmul.mubr.f32.gmra.mxu0 %v1249
      %v1251 = vpop.f32.mrf.mxu0
      %v1252 = vadd.f32 %v1089, %v1251
      %v1253 = vpop.f32.mrf.mxu0
      %1254 = vmatprep.mubr.f32.mxu0 0.0
      %v1255 = vand.u32 %v197, 4294901760
      %1256 = vmatmul.mubr.f32.gmra.mxu0 %v1255
      %v1257 = vpop.f32.mrf.mxu0
      %v1258 = vadd.f32 %v1095, %v1257
      %v1259 = vpop.f32.mrf.mxu0
      %1260 = vmatprep.mubr.f32.mxu0 0.0
      %v1261 = vand.u32 %v200, 4294901760
      %1262 = vmatmul.mubr.f32.gmra.mxu0 %v1261
      %v1263 = vpop.f32.mrf.mxu0
      %v1264 = vadd.f32 %v1101, %v1263
      %v1265 = vpop.f32.mrf.mxu0
      %1266 = vmatprep.mubr.f32.mxu0 0.0
      %v1267 = vand.u32 %v203, 4294901760
      %1268 = vmatmul.mubr.f32.gmra.mxu0 %v1267
      %v1269 = vpop.f32.mrf.mxu0
      %v1270 = vadd.f32 %v1107, %v1269
      %v1271 = vpop.f32.mrf.mxu0
      %1272 = vmatprep.mubr.f32.mxu0 0.0
      %v1273 = vand.u32 %v206, 4294901760
      %1274 = vmatmul.mubr.f32.gmra.mxu0 %v1273
      %v1275 = vpop.f32.mrf.mxu0
      %v1276 = vadd.f32 %v1113, %v1275
      %v1277 = vpop.f32.mrf.mxu0
      %1278 = vmatprep.mubr.f32.mxu0 0.0
      %v1279 = vand.u32 %v209, 4294901760
      %1280 = vmatmul.mubr.f32.gmra.mxu0 %v1279
      %v1281 = vpop.f32.mrf.mxu0
      %v1282 = vadd.f32 %v1119, %v1281
      %v1283 = vpop.f32.mrf.mxu0
      %1284 = vmatprep.mubr.f32.mxu0 0.0
      %v1285 = vand.u32 %v212, 4294901760
      %1286 = vmatmul.mubr.f32.gmra.mxu0 %v1285
      %v1287 = vpop.f32.mrf.mxu0
      %v1288 = vadd.f32 %v1125, %v1287
      %v1289 = vpop.f32.mrf.mxu0
      %1290 = vmatprep.mubr.f32.mxu0 0.0
      %v1291 = vand.u32 %v215, 4294901760
      %1292 = vmatmul.mubr.f32.gmra.mxu0 %v1291
      %v1293 = vpop.f32.mrf.mxu0
      %v1294 = vadd.f32 %v1131, %v1293
      %v1295 = vpop.f32.mrf.mxu0
      %1296 = vmatprep.mubr.f32.mxu0 0.0
      %v1297 = vand.u32 %v218, 4294901760
      %1298 = vmatmul.mubr.f32.gmra.mxu0 %v1297
      %v1299 = vpop.f32.mrf.mxu0
      %v1300 = vadd.f32 %v1137, %v1299
      %v1301 = vpop.f32.mrf.mxu0
      %1302 = vmatprep.mubr.f32.mxu0 0.0
      %v1303 = vand.u32 %v221, 4294901760
      %1304 = vmatmul.mubr.f32.gmra.mxu0 %v1303
      %v1305 = vpop.f32.mrf.mxu0
      %v1306 = vadd.f32 %v1143, %v1305
      %v1307 = vpop.f32.mrf.mxu0
      %1308 = vmatprep.mubr.f32.mxu0 0.0
      %v1309 = vand.u32 %v224, 4294901760
      %1310 = vmatmul.mubr.f32.gmra.mxu0 %v1309
      %v1311 = vpop.f32.mrf.mxu0
      %v1312 = vadd.f32 %v1149, %v1311
      %v1313 = vpop.f32.mrf.mxu0
      %1314 = vmatprep.mubr.f32.mxu0 0.0
      %v1315 = vand.u32 %v227, 4294901760
      %1316 = vmatmul.mubr.f32.gmra.mxu0 %v1315
      %v1317 = vpop.f32.mrf.mxu0
      %v1318 = vadd.f32 %v1155, %v1317
      %v1319 = vpop.f32.mrf.mxu0
      %1320 = vmatprep.mubr.f32.mxu0 0.0
      %v1321 = vand.u32 %v230, 4294901760
      %1322 = vmatmul.mubr.f32.gmra.mxu0 %v1321
      %v1323 = vpop.f32.mrf.mxu0
      %v1324 = vadd.f32 %v1161, %v1323
      %v1325 = vpop.f32.mrf.mxu0
      %1326 = vmatprep.mubr.f32.mxu0 0.0
      %v1327 = vand.u32 %v233, 4294901760
      %1328 = vmatmul.mubr.f32.gmra.mxu0 %v1327
      %v1329 = vpop.f32.mrf.mxu0
      %v1330 = vadd.f32 %v1167, %v1329
      %v1331 = vpop.f32.mrf.mxu0
      %1332 = vmatprep.mubr.f32.mxu0 0.0
      %v1333 = vand.u32 %v236, 4294901760
      %1334 = vmatmul.mubr.f32.gmra.mxu0 %v1333
      %v1335 = vpop.f32.mrf.mxu0
      %v1336 = vadd.f32 %v1173, %v1335
      %v1337 = vpop.f32.mrf.mxu0
      %1338 = vmatprep.mubr.f32.mxu0 0.0
      %v1339 = vand.u32 %v239, 4294901760
      %1340 = vmatmul.mubr.f32.gmra.mxu0 %v1339
      %v1341 = vpop.f32.mrf.mxu0
      %v1342 = vadd.f32 %v1179, %v1341
      %v1343 = vpop.f32.mrf.mxu0
      %1344 = vdwg.mxu0
      %v1345 = vld [vmem:[%s0] sm:$0xff]
      %v1346 = vld [vmem:[%s0 + $0x8] sm:$0xff]
      %v1347 = vld [vmem:[%s0 + $0x10] sm:$0xff]
      %v1348 = vld [vmem:[%s0 + $0x18] sm:$0xff]
      %v1349 = vld [vmem:[%s0 + $0x20] sm:$0xff]
      %v1350 = vld [vmem:[%s0 + $0x28] sm:$0xff]
      %v1351 = vld [vmem:[%s0 + $0x30] sm:$0xff]
      %v1352 = vld [vmem:[%s0 + $0x38] sm:$0xff]
      %v1353 = vld [vmem:[%s0 + $0x40] sm:$0xff]
      %v1354 = vld [vmem:[%s0 + $0x48] sm:$0xff]
      %v1355 = vld [vmem:[%s0 + $0x50] sm:$0xff]
      %v1356 = vld [vmem:[%s0 + $0x58] sm:$0xff]
      %v1357 = vld [vmem:[%s0 + $0x60] sm:$0xff]
      %v1358 = vld [vmem:[%s0 + $0x68] sm:$0xff]
      %v1359 = vld [vmem:[%s0 + $0x70] sm:$0xff]
      %v1360 = vld [vmem:[%s0 + $0x78] sm:$0xff]
      %v1361 = vld [vmem:[%s0 + $0x80] sm:$0xff]
      %v1362 = vld [vmem:[%s0 + $0x88] sm:$0xff]
      %v1363 = vld [vmem:[%s0 + $0x90] sm:$0xff]
      %v1364 = vld [vmem:[%s0 + $0x98] sm:$0xff]
      %v1365 = vld [vmem:[%s0 + $0xa0] sm:$0xff]
      %v1366 = vld [vmem:[%s0 + $0xa8] sm:$0xff]
      %v1367 = vld [vmem:[%s0 + $0xb0] sm:$0xff]
      %v1368 = vld [vmem:[%s0 + $0xb8] sm:$0xff]
      %v1369 = vld [vmem:[%s0 + $0xc0] sm:$0xff]
      %v1370 = vld [vmem:[%s0 + $0xc8] sm:$0xff]
      %v1371 = vld [vmem:[%s0 + $0xd0] sm:$0xff]
      %v1372 = vld [vmem:[%s0 + $0xd8] sm:$0xff]
      %v1373 = vld [vmem:[%s0 + $0xe0] sm:$0xff]
      %v1374 = vld [vmem:[%s0 + $0xe8] sm:$0xff]
      %v1375 = vld [vmem:[%s0 + $0xf0] sm:$0xff]
      %v1376 = vld [vmem:[%s0 + $0xf8] sm:$0xff]
      %1377 = vmatprep.subr.mxu0 0.0
      %v1378 = vand.u32 %v1342, 4294901760
      %1379 = vmatpush1.msra.mxu0 %v1378
      %1380 = vmatprep.subr.mxu0 0.0
      %v1381 = vand.u32 %v1336, 4294901760
      %1382 = vmatpush1.msra.mxu0 %v1381
      %1383 = vmatprep.subr.mxu0 0.0
      %v1384 = vand.u32 %v1330, 4294901760
      %1385 = vmatpush1.msra.mxu0 %v1384
      %1386 = vmatprep.subr.mxu0 0.0
      %v1387 = vand.u32 %v1324, 4294901760
      %1388 = vmatpush1.msra.mxu0 %v1387
      %1389 = vmatprep.subr.mxu0 0.0
      %v1390 = vand.u32 %v1318, 4294901760
      %1391 = vmatpush1.msra.mxu0 %v1390
      %1392 = vmatprep.subr.mxu0 0.0
      %v1393 = vand.u32 %v1312, 4294901760
      %1394 = vmatpush1.msra.mxu0 %v1393
      %1395 = vmatprep.subr.mxu0 0.0
      %v1396 = vand.u32 %v1306, 4294901760
      %1397 = vmatpush1.msra.mxu0 %v1396
      %1398 = vmatprep.subr.mxu0 0.0
      %v1399 = vand.u32 %v1300, 4294901760
      %1400 = vmatpush1.msra.mxu0 %v1399
      %1401 = vmatprep.subr.mxu0 0.0
      %v1402 = vand.u32 %v1294, 4294901760
      %1403 = vmatpush1.msra.mxu0 %v1402
      %1404 = vmatprep.subr.mxu0 0.0
      %v1405 = vand.u32 %v1288, 4294901760
      %1406 = vmatpush1.msra.mxu0 %v1405
      %1407 = vmatprep.subr.mxu0 0.0
      %v1408 = vand.u32 %v1282, 4294901760
      %1409 = vmatpush1.msra.mxu0 %v1408
      %1410 = vmatprep.subr.mxu0 0.0
      %v1411 = vand.u32 %v1276, 4294901760
      %1412 = vmatpush1.msra.mxu0 %v1411
      %1413 = vmatprep.subr.mxu0 0.0
      %v1414 = vand.u32 %v1270, 4294901760
      %1415 = vmatpush1.msra.mxu0 %v1414
      %1416 = vmatprep.subr.mxu0 0.0
      %v1417 = vand.u32 %v1264, 4294901760
      %1418 = vmatpush1.msra.mxu0 %v1417
      %1419 = vmatprep.subr.mxu0 0.0
      %v1420 = vand.u32 %v1258, 4294901760
      %1421 = vmatpush1.msra.mxu0 %v1420
      %1422 = vmatprep.subr.mxu0 0.0
      %v1423 = vand.u32 %v1252, 4294901760
      %1424 = vmatpush1.msra.mxu0 %v1423
      %1425 = vmatprep.subr.mxu0 0.0
      %1426 = vmatpush2.msra.mxu0 0.0
      %1427 = vmatprep.subr.mxu0 0.0
      %1428 = vmatpush2.msra.mxu0 0.0
      %1429 = vmatprep.subr.mxu0 0.0
      %1430 = vmatpush2.msra.mxu0 0.0
      %1431 = vmatprep.subr.mxu0 0.0
      %1432 = vmatpush2.msra.mxu0 0.0
      %1433 = vmatprep.subr.mxu0 0.0
      %1434 = vmatpush2.msra.mxu0 0.0
      %1435 = vmatprep.subr.mxu0 0.0
      %1436 = vmatpush2.msra.mxu0 0.0
      %1437 = vmatprep.subr.mxu0 0.0
      %1438 = vmatpush2.msra.mxu0 0.0
      %1439 = vmatprep.subr.mxu0 0.0
      %1440 = vmatpush2.msra.mxu0 0.0
      %1441 = vmatprep.subr.mxu0 0.0
      %1442 = vmatpush2.msra.mxu0 0.0
      %1443 = vmatprep.subr.mxu0 0.0
      %1444 = vmatpush2.msra.mxu0 0.0
      %1445 = vmatprep.subr.mxu0 0.0
      %1446 = vmatpush2.msra.mxu0 0.0
      %1447 = vmatprep.subr.mxu0 0.0
      %1448 = vmatpush2.msra.mxu0 0.0
      %1449 = vmatprep.subr.mxu0 0.0
      %1450 = vmatpush2.msra.mxu0 0.0
      %1451 = vmatprep.subr.mxu0 0.0
      %1452 = vmatpush2.msra.mxu0 0.0
      %1453 = vmatprep.subr.mxu0 0.0
      %1454 = vmatpush2.msra.mxu0 0.0
      %1455 = vmatprep.subr.mxu0 0.0
      %1456 = vmatpush2.msra.mxu0 0.0
      %1457 = vmatprep.mubr.f32.mxu0 0.0
      %v1458 = vand.u32 %v1345, 4294901760
      %v1459 = vsub.f32 %v1345, %v1458
      %v1460 = vand.u32 %v1459, 4294901760
      %v1461 = vsub.f32 %v1459, %v1460
      %v1462 = vand.u32 %v1461, 4294901760
      %1463 = vmatmul.mubr.f32.gmra.mxu0 %v1462
      %v1464 = vpop.f32.mrf.mxu0
      %v1465 = vadd.f32 0.0, %v1464
      %v1466 = vpop.f32.mrf.mxu0
      %1467 = vmatprep.mubr.f32.mxu0 0.0
      %v1468 = vand.u32 %v1346, 4294901760
      %v1469 = vsub.f32 %v1346, %v1468
      %v1470 = vand.u32 %v1469, 4294901760
      %v1471 = vsub.f32 %v1469, %v1470
      %v1472 = vand.u32 %v1471, 4294901760
      %1473 = vmatmul.mubr.f32.gmra.mxu0 %v1472
      %v1474 = vpop.f32.mrf.mxu0
      %v1475 = vadd.f32 0.0, %v1474
      %v1476 = vpop.f32.mrf.mxu0
      %1477 = vmatprep.mubr.f32.mxu0 0.0
      %v1478 = vand.u32 %v1347, 4294901760
      %v1479 = vsub.f32 %v1347, %v1478
      %v1480 = vand.u32 %v1479, 4294901760
      %v1481 = vsub.f32 %v1479, %v1480
      %v1482 = vand.u32 %v1481, 4294901760
      %1483 = vmatmul.mubr.f32.gmra.mxu0 %v1482
      %v1484 = vpop.f32.mrf.mxu0
      %v1485 = vadd.f32 0.0, %v1484
      %v1486 = vpop.f32.mrf.mxu0
      %1487 = vmatprep.mubr.f32.mxu0 0.0
      %v1488 = vand.u32 %v1348, 4294901760
      %v1489 = vsub.f32 %v1348, %v1488
      %v1490 = vand.u32 %v1489, 4294901760
      %v1491 = vsub.f32 %v1489, %v1490
      %v1492 = vand.u32 %v1491, 4294901760
      %1493 = vmatmul.mubr.f32.gmra.mxu0 %v1492
      %v1494 = vpop.f32.mrf.mxu0
      %v1495 = vadd.f32 0.0, %v1494
      %v1496 = vpop.f32.mrf.mxu0
      %1497 = vmatprep.mubr.f32.mxu0 0.0
      %v1498 = vand.u32 %v1349, 4294901760
      %v1499 = vsub.f32 %v1349, %v1498
      %v1500 = vand.u32 %v1499, 4294901760
      %v1501 = vsub.f32 %v1499, %v1500
      %v1502 = vand.u32 %v1501, 4294901760
      %1503 = vmatmul.mubr.f32.gmra.mxu0 %v1502
      %v1504 = vpop.f32.mrf.mxu0
      %v1505 = vadd.f32 0.0, %v1504
      %v1506 = vpop.f32.mrf.mxu0
      %1507 = vmatprep.mubr.f32.mxu0 0.0
      %v1508 = vand.u32 %v1350, 4294901760
      %v1509 = vsub.f32 %v1350, %v1508
      %v1510 = vand.u32 %v1509, 4294901760
      %v1511 = vsub.f32 %v1509, %v1510
      %v1512 = vand.u32 %v1511, 4294901760
      %1513 = vmatmul.mubr.f32.gmra.mxu0 %v1512
      %v1514 = vpop.f32.mrf.mxu0
      %v1515 = vadd.f32 0.0, %v1514
      %v1516 = vpop.f32.mrf.mxu0
      %1517 = vmatprep.mubr.f32.mxu0 0.0
      %v1518 = vand.u32 %v1351, 4294901760
      %v1519 = vsub.f32 %v1351, %v1518
      %v1520 = vand.u32 %v1519, 4294901760
      %v1521 = vsub.f32 %v1519, %v1520
      %v1522 = vand.u32 %v1521, 4294901760
      %1523 = vmatmul.mubr.f32.gmra.mxu0 %v1522
      %v1524 = vpop.f32.mrf.mxu0
      %v1525 = vadd.f32 0.0, %v1524
      %v1526 = vpop.f32.mrf.mxu0
      %1527 = vmatprep.mubr.f32.mxu0 0.0
      %v1528 = vand.u32 %v1352, 4294901760
      %v1529 = vsub.f32 %v1352, %v1528
      %v1530 = vand.u32 %v1529, 4294901760
      %v1531 = vsub.f32 %v1529, %v1530
      %v1532 = vand.u32 %v1531, 4294901760
      %1533 = vmatmul.mubr.f32.gmra.mxu0 %v1532
      %v1534 = vpop.f32.mrf.mxu0
      %v1535 = vadd.f32 0.0, %v1534
      %v1536 = vpop.f32.mrf.mxu0
      %1537 = vmatprep.mubr.f32.mxu0 0.0
      %v1538 = vand.u32 %v1353, 4294901760
      %v1539 = vsub.f32 %v1353, %v1538
      %v1540 = vand.u32 %v1539, 4294901760
      %v1541 = vsub.f32 %v1539, %v1540
      %v1542 = vand.u32 %v1541, 4294901760
      %1543 = vmatmul.mubr.f32.gmra.mxu0 %v1542
      %v1544 = vpop.f32.mrf.mxu0
      %v1545 = vadd.f32 0.0, %v1544
      %v1546 = vpop.f32.mrf.mxu0
      %1547 = vmatprep.mubr.f32.mxu0 0.0
      %v1548 = vand.u32 %v1354, 4294901760
      %v1549 = vsub.f32 %v1354, %v1548
      %v1550 = vand.u32 %v1549, 4294901760
      %v1551 = vsub.f32 %v1549, %v1550
      %v1552 = vand.u32 %v1551, 4294901760
      %1553 = vmatmul.mubr.f32.gmra.mxu0 %v1552
      %v1554 = vpop.f32.mrf.mxu0
      %v1555 = vadd.f32 0.0, %v1554
      %v1556 = vpop.f32.mrf.mxu0
      %1557 = vmatprep.mubr.f32.mxu0 0.0
      %v1558 = vand.u32 %v1355, 4294901760
      %v1559 = vsub.f32 %v1355, %v1558
      %v1560 = vand.u32 %v1559, 4294901760
      %v1561 = vsub.f32 %v1559, %v1560
      %v1562 = vand.u32 %v1561, 4294901760
      %1563 = vmatmul.mubr.f32.gmra.mxu0 %v1562
      %v1564 = vpop.f32.mrf.mxu0
      %v1565 = vadd.f32 0.0, %v1564
      %v1566 = vpop.f32.mrf.mxu0
      %1567 = vmatprep.mubr.f32.mxu0 0.0
      %v1568 = vand.u32 %v1356, 4294901760
      %v1569 = vsub.f32 %v1356, %v1568
      %v1570 = vand.u32 %v1569, 4294901760
      %v1571 = vsub.f32 %v1569, %v1570
      %v1572 = vand.u32 %v1571, 4294901760
      %1573 = vmatmul.mubr.f32.gmra.mxu0 %v1572
      %v1574 = vpop.f32.mrf.mxu0
      %v1575 = vadd.f32 0.0, %v1574
      %v1576 = vpop.f32.mrf.mxu0
      %1577 = vmatprep.mubr.f32.mxu0 0.0
      %v1578 = vand.u32 %v1357, 4294901760
      %v1579 = vsub.f32 %v1357, %v1578
      %v1580 = vand.u32 %v1579, 4294901760
      %v1581 = vsub.f32 %v1579, %v1580
      %v1582 = vand.u32 %v1581, 4294901760
      %1583 = vmatmul.mubr.f32.gmra.mxu0 %v1582
      %v1584 = vpop.f32.mrf.mxu0
      %v1585 = vadd.f32 0.0, %v1584
      %v1586 = vpop.f32.mrf.mxu0
      %1587 = vmatprep.mubr.f32.mxu0 0.0
      %v1588 = vand.u32 %v1358, 4294901760
      %v1589 = vsub.f32 %v1358, %v1588
      %v1590 = vand.u32 %v1589, 4294901760
      %v1591 = vsub.f32 %v1589, %v1590
      %v1592 = vand.u32 %v1591, 4294901760
      %1593 = vmatmul.mubr.f32.gmra.mxu0 %v1592
      %v1594 = vpop.f32.mrf.mxu0
      %v1595 = vadd.f32 0.0, %v1594
      %v1596 = vpop.f32.mrf.mxu0
      %1597 = vmatprep.mubr.f32.mxu0 0.0
      %v1598 = vand.u32 %v1359, 4294901760
      %v1599 = vsub.f32 %v1359, %v1598
      %v1600 = vand.u32 %v1599, 4294901760
      %v1601 = vsub.f32 %v1599, %v1600
      %v1602 = vand.u32 %v1601, 4294901760
      %1603 = vmatmul.mubr.f32.gmra.mxu0 %v1602
      %v1604 = vpop.f32.mrf.mxu0
      %v1605 = vadd.f32 0.0, %v1604
      %v1606 = vpop.f32.mrf.mxu0
      %1607 = vmatprep.mubr.f32.mxu0 0.0
      %v1608 = vand.u32 %v1360, 4294901760
      %v1609 = vsub.f32 %v1360, %v1608
      %v1610 = vand.u32 %v1609, 4294901760
      %v1611 = vsub.f32 %v1609, %v1610
      %v1612 = vand.u32 %v1611, 4294901760
      %1613 = vmatmul.mubr.f32.gmra.mxu0 %v1612
      %v1614 = vpop.f32.mrf.mxu0
      %v1615 = vadd.f32 0.0, %v1614
      %v1616 = vpop.f32.mrf.mxu0
      %1617 = vmatprep.mubr.f32.mxu0 0.0
      %v1618 = vand.u32 %v1361, 4294901760
      %v1619 = vsub.f32 %v1361, %v1618
      %v1620 = vand.u32 %v1619, 4294901760
      %v1621 = vsub.f32 %v1619, %v1620
      %v1622 = vand.u32 %v1621, 4294901760
      %1623 = vmatmul.mubr.f32.gmra.mxu0 %v1622
      %v1624 = vpop.f32.mrf.mxu0
      %v1625 = vadd.f32 0.0, %v1624
      %v1626 = vpop.f32.mrf.mxu0
      %1627 = vmatprep.mubr.f32.mxu0 0.0
      %v1628 = vand.u32 %v1362, 4294901760
      %v1629 = vsub.f32 %v1362, %v1628
      %v1630 = vand.u32 %v1629, 4294901760
      %v1631 = vsub.f32 %v1629, %v1630
      %v1632 = vand.u32 %v1631, 4294901760
      %1633 = vmatmul.mubr.f32.gmra.mxu0 %v1632
      %v1634 = vpop.f32.mrf.mxu0
      %v1635 = vadd.f32 0.0, %v1634
      %v1636 = vpop.f32.mrf.mxu0
      %1637 = vmatprep.mubr.f32.mxu0 0.0
      %v1638 = vand.u32 %v1363, 4294901760
      %v1639 = vsub.f32 %v1363, %v1638
      %v1640 = vand.u32 %v1639, 4294901760
      %v1641 = vsub.f32 %v1639, %v1640
      %v1642 = vand.u32 %v1641, 4294901760
      %1643 = vmatmul.mubr.f32.gmra.mxu0 %v1642
      %v1644 = vpop.f32.mrf.mxu0
      %v1645 = vadd.f32 0.0, %v1644
      %v1646 = vpop.f32.mrf.mxu0
      %1647 = vmatprep.mubr.f32.mxu0 0.0
      %v1648 = vand.u32 %v1364, 4294901760
      %v1649 = vsub.f32 %v1364, %v1648
      %v1650 = vand.u32 %v1649, 4294901760
      %v1651 = vsub.f32 %v1649, %v1650
      %v1652 = vand.u32 %v1651, 4294901760
      %1653 = vmatmul.mubr.f32.gmra.mxu0 %v1652
      %v1654 = vpop.f32.mrf.mxu0
      %v1655 = vadd.f32 0.0, %v1654
      %v1656 = vpop.f32.mrf.mxu0
      %1657 = vmatprep.mubr.f32.mxu0 0.0
      %v1658 = vand.u32 %v1365, 4294901760
      %v1659 = vsub.f32 %v1365, %v1658
      %v1660 = vand.u32 %v1659, 4294901760
      %v1661 = vsub.f32 %v1659, %v1660
      %v1662 = vand.u32 %v1661, 4294901760
      %1663 = vmatmul.mubr.f32.gmra.mxu0 %v1662
      %v1664 = vpop.f32.mrf.mxu0
      %v1665 = vadd.f32 0.0, %v1664
      %v1666 = vpop.f32.mrf.mxu0
      %1667 = vmatprep.mubr.f32.mxu0 0.0
      %v1668 = vand.u32 %v1366, 4294901760
      %v1669 = vsub.f32 %v1366, %v1668
      %v1670 = vand.u32 %v1669, 4294901760
      %v1671 = vsub.f32 %v1669, %v1670
      %v1672 = vand.u32 %v1671, 4294901760
      %1673 = vmatmul.mubr.f32.gmra.mxu0 %v1672
      %v1674 = vpop.f32.mrf.mxu0
      %v1675 = vadd.f32 0.0, %v1674
      %v1676 = vpop.f32.mrf.mxu0
      %1677 = vmatprep.mubr.f32.mxu0 0.0
      %v1678 = vand.u32 %v1367, 4294901760
      %v1679 = vsub.f32 %v1367, %v1678
      %v1680 = vand.u32 %v1679, 4294901760
      %v1681 = vsub.f32 %v1679, %v1680
      %v1682 = vand.u32 %v1681, 4294901760
      %1683 = vmatmul.mubr.f32.gmra.mxu0 %v1682
      %v1684 = vpop.f32.mrf.mxu0
      %v1685 = vadd.f32 0.0, %v1684
      %v1686 = vpop.f32.mrf.mxu0
      %1687 = vmatprep.mubr.f32.mxu0 0.0
      %v1688 = vand.u32 %v1368, 4294901760
      %v1689 = vsub.f32 %v1368, %v1688
      %v1690 = vand.u32 %v1689, 4294901760
      %v1691 = vsub.f32 %v1689, %v1690
      %v1692 = vand.u32 %v1691, 4294901760
      %1693 = vmatmul.mubr.f32.gmra.mxu0 %v1692
      %v1694 = vpop.f32.mrf.mxu0
      %v1695 = vadd.f32 0.0, %v1694
      %v1696 = vpop.f32.mrf.mxu0
      %1697 = vmatprep.mubr.f32.mxu0 0.0
      %v1698 = vand.u32 %v1369, 4294901760
      %v1699 = vsub.f32 %v1369, %v1698
      %v1700 = vand.u32 %v1699, 4294901760
      %v1701 = vsub.f32 %v1699, %v1700
      %v1702 = vand.u32 %v1701, 4294901760
      %1703 = vmatmul.mubr.f32.gmra.mxu0 %v1702
      %v1704 = vpop.f32.mrf.mxu0
      %v1705 = vadd.f32 0.0, %v1704
      %v1706 = vpop.f32.mrf.mxu0
      %1707 = vmatprep.mubr.f32.mxu0 0.0
      %v1708 = vand.u32 %v1370, 4294901760
      %v1709 = vsub.f32 %v1370, %v1708
      %v1710 = vand.u32 %v1709, 4294901760
      %v1711 = vsub.f32 %v1709, %v1710
      %v1712 = vand.u32 %v1711, 4294901760
      %1713 = vmatmul.mubr.f32.gmra.mxu0 %v1712
      %v1714 = vpop.f32.mrf.mxu0
      %v1715 = vadd.f32 0.0, %v1714
      %v1716 = vpop.f32.mrf.mxu0
      %1717 = vmatprep.mubr.f32.mxu0 0.0
      %v1718 = vand.u32 %v1371, 4294901760
      %v1719 = vsub.f32 %v1371, %v1718
      %v1720 = vand.u32 %v1719, 4294901760
      %v1721 = vsub.f32 %v1719, %v1720
      %v1722 = vand.u32 %v1721, 4294901760
      %1723 = vmatmul.mubr.f32.gmra.mxu0 %v1722
      %v1724 = vpop.f32.mrf.mxu0
      %v1725 = vadd.f32 0.0, %v1724
      %v1726 = vpop.f32.mrf.mxu0
      %1727 = vmatprep.mubr.f32.mxu0 0.0
      %v1728 = vand.u32 %v1372, 4294901760
      %v1729 = vsub.f32 %v1372, %v1728
      %v1730 = vand.u32 %v1729, 4294901760
      %v1731 = vsub.f32 %v1729, %v1730
      %v1732 = vand.u32 %v1731, 4294901760
      %1733 = vmatmul.mubr.f32.gmra.mxu0 %v1732
      %v1734 = vpop.f32.mrf.mxu0
      %v1735 = vadd.f32 0.0, %v1734
      %v1736 = vpop.f32.mrf.mxu0
      %1737 = vmatprep.mubr.f32.mxu0 0.0
      %v1738 = vand.u32 %v1373, 4294901760
      %v1739 = vsub.f32 %v1373, %v1738
      %v1740 = vand.u32 %v1739, 4294901760
      %v1741 = vsub.f32 %v1739, %v1740
      %v1742 = vand.u32 %v1741, 4294901760
      %1743 = vmatmul.mubr.f32.gmra.mxu0 %v1742
      %v1744 = vpop.f32.mrf.mxu0
      %v1745 = vadd.f32 0.0, %v1744
      %v1746 = vpop.f32.mrf.mxu0
      %1747 = vmatprep.mubr.f32.mxu0 0.0
      %v1748 = vand.u32 %v1374, 4294901760
      %v1749 = vsub.f32 %v1374, %v1748
      %v1750 = vand.u32 %v1749, 4294901760
      %v1751 = vsub.f32 %v1749, %v1750
      %v1752 = vand.u32 %v1751, 4294901760
      %1753 = vmatmul.mubr.f32.gmra.mxu0 %v1752
      %v1754 = vpop.f32.mrf.mxu0
      %v1755 = vadd.f32 0.0, %v1754
      %v1756 = vpop.f32.mrf.mxu0
      %1757 = vmatprep.mubr.f32.mxu0 0.0
      %v1758 = vand.u32 %v1375, 4294901760
      %v1759 = vsub.f32 %v1375, %v1758
      %v1760 = vand.u32 %v1759, 4294901760
      %v1761 = vsub.f32 %v1759, %v1760
      %v1762 = vand.u32 %v1761, 4294901760
      %1763 = vmatmul.mubr.f32.gmra.mxu0 %v1762
      %v1764 = vpop.f32.mrf.mxu0
      %v1765 = vadd.f32 0.0, %v1764
      %v1766 = vpop.f32.mrf.mxu0
      %1767 = vmatprep.mubr.f32.mxu0 0.0
      %v1768 = vand.u32 %v1376, 4294901760
      %v1769 = vsub.f32 %v1376, %v1768
      %v1770 = vand.u32 %v1769, 4294901760
      %v1771 = vsub.f32 %v1769, %v1770
      %v1772 = vand.u32 %v1771, 4294901760
      %1773 = vmatmul.mubr.f32.gmra.mxu0 %v1772
      %v1774 = vpop.f32.mrf.mxu0
      %v1775 = vadd.f32 0.0, %v1774
      %v1776 = vpop.f32.mrf.mxu0
      %1777 = vdwg.mxu0
      %1778 = vmatprep.subr.mxu0 0.0
      %v1779 = vand.u32 %v1342, 4294901760
      %v1780 = vsub.f32 %v1342, %v1779
      %v1781 = vand.u32 %v1780, 4294901760
      %v1782 = vsub.f32 %v1780, %v1781
      %v1783 = vand.u32 %v1782, 4294901760
      %1784 = vmatpush1.msra.mxu0 %v1783
      %1785 = vmatprep.subr.mxu0 0.0
      %v1786 = vand.u32 %v1336, 4294901760
      %v1787 = vsub.f32 %v1336, %v1786
      %v1788 = vand.u32 %v1787, 4294901760
      %v1789 = vsub.f32 %v1787, %v1788
      %v1790 = vand.u32 %v1789, 4294901760
      %1791 = vmatpush1.msra.mxu0 %v1790
      %1792 = vmatprep.subr.mxu0 0.0
      %v1793 = vand.u32 %v1330, 4294901760
      %v1794 = vsub.f32 %v1330, %v1793
      %v1795 = vand.u32 %v1794, 4294901760
      %v1796 = vsub.f32 %v1794, %v1795
      %v1797 = vand.u32 %v1796, 4294901760
      %1798 = vmatpush1.msra.mxu0 %v1797
      %1799 = vmatprep.subr.mxu0 0.0
      %v1800 = vand.u32 %v1324, 4294901760
      %v1801 = vsub.f32 %v1324, %v1800
      %v1802 = vand.u32 %v1801, 4294901760
      %v1803 = vsub.f32 %v1801, %v1802
      %v1804 = vand.u32 %v1803, 4294901760
      %1805 = vmatpush1.msra.mxu0 %v1804
      %1806 = vmatprep.subr.mxu0 0.0
      %v1807 = vand.u32 %v1318, 4294901760
      %v1808 = vsub.f32 %v1318, %v1807
      %v1809 = vand.u32 %v1808, 4294901760
      %v1810 = vsub.f32 %v1808, %v1809
      %v1811 = vand.u32 %v1810, 4294901760
      %1812 = vmatpush1.msra.mxu0 %v1811
      %1813 = vmatprep.subr.mxu0 0.0
      %v1814 = vand.u32 %v1312, 4294901760
      %v1815 = vsub.f32 %v1312, %v1814
      %v1816 = vand.u32 %v1815, 4294901760
      %v1817 = vsub.f32 %v1815, %v1816
      %v1818 = vand.u32 %v1817, 4294901760
      %1819 = vmatpush1.msra.mxu0 %v1818
      %1820 = vmatprep.subr.mxu0 0.0
      %v1821 = vand.u32 %v1306, 4294901760
      %v1822 = vsub.f32 %v1306, %v1821
      %v1823 = vand.u32 %v1822, 4294901760
      %v1824 = vsub.f32 %v1822, %v1823
      %v1825 = vand.u32 %v1824, 4294901760
      %1826 = vmatpush1.msra.mxu0 %v1825
      %1827 = vmatprep.subr.mxu0 0.0
      %v1828 = vand.u32 %v1300, 4294901760
      %v1829 = vsub.f32 %v1300, %v1828
      %v1830 = vand.u32 %v1829, 4294901760
      %v1831 = vsub.f32 %v1829, %v1830
      %v1832 = vand.u32 %v1831, 4294901760
      %1833 = vmatpush1.msra.mxu0 %v1832
      %1834 = vmatprep.subr.mxu0 0.0
      %v1835 = vand.u32 %v1294, 4294901760
      %v1836 = vsub.f32 %v1294, %v1835
      %v1837 = vand.u32 %v1836, 4294901760
      %v1838 = vsub.f32 %v1836, %v1837
      %v1839 = vand.u32 %v1838, 4294901760
      %1840 = vmatpush1.msra.mxu0 %v1839
      %1841 = vmatprep.subr.mxu0 0.0
      %v1842 = vand.u32 %v1288, 4294901760
      %v1843 = vsub.f32 %v1288, %v1842
      %v1844 = vand.u32 %v1843, 4294901760
      %v1845 = vsub.f32 %v1843, %v1844
      %v1846 = vand.u32 %v1845, 4294901760
      %1847 = vmatpush1.msra.mxu0 %v1846
      %1848 = vmatprep.subr.mxu0 0.0
      %v1849 = vand.u32 %v1282, 4294901760
      %v1850 = vsub.f32 %v1282, %v1849
      %v1851 = vand.u32 %v1850, 4294901760
      %v1852 = vsub.f32 %v1850, %v1851
      %v1853 = vand.u32 %v1852, 4294901760
      %1854 = vmatpush1.msra.mxu0 %v1853
      %1855 = vmatprep.subr.mxu0 0.0
      %v1856 = vand.u32 %v1276, 4294901760
      %v1857 = vsub.f32 %v1276, %v1856
      %v1858 = vand.u32 %v1857, 4294901760
      %v1859 = vsub.f32 %v1857, %v1858
      %v1860 = vand.u32 %v1859, 4294901760
      %1861 = vmatpush1.msra.mxu0 %v1860
      %1862 = vmatprep.subr.mxu0 0.0
      %v1863 = vand.u32 %v1270, 4294901760
      %v1864 = vsub.f32 %v1270, %v1863
      %v1865 = vand.u32 %v1864, 4294901760
      %v1866 = vsub.f32 %v1864, %v1865
      %v1867 = vand.u32 %v1866, 4294901760
      %1868 = vmatpush1.msra.mxu0 %v1867
      %1869 = vmatprep.subr.mxu0 0.0
      %v1870 = vand.u32 %v1264, 4294901760
      %v1871 = vsub.f32 %v1264, %v1870
      %v1872 = vand.u32 %v1871, 4294901760
      %v1873 = vsub.f32 %v1871, %v1872
      %v1874 = vand.u32 %v1873, 4294901760
      %1875 = vmatpush1.msra.mxu0 %v1874
      %1876 = vmatprep.subr.mxu0 0.0
      %v1877 = vand.u32 %v1258, 4294901760
      %v1878 = vsub.f32 %v1258, %v1877
      %v1879 = vand.u32 %v1878, 4294901760
      %v1880 = vsub.f32 %v1878, %v1879
      %v1881 = vand.u32 %v1880, 4294901760
      %1882 = vmatpush1.msra.mxu0 %v1881
      %1883 = vmatprep.subr.mxu0 0.0
      %v1884 = vand.u32 %v1252, 4294901760
      %v1885 = vsub.f32 %v1252, %v1884
      %v1886 = vand.u32 %v1885, 4294901760
      %v1887 = vsub.f32 %v1885, %v1886
      %v1888 = vand.u32 %v1887, 4294901760
      %1889 = vmatpush1.msra.mxu0 %v1888
      %1890 = vmatprep.subr.mxu0 0.0
      %1891 = vmatpush2.msra.mxu0 0.0
      %1892 = vmatprep.subr.mxu0 0.0
      %1893 = vmatpush2.msra.mxu0 0.0
      %1894 = vmatprep.subr.mxu0 0.0
      %1895 = vmatpush2.msra.mxu0 0.0
      %1896 = vmatprep.subr.mxu0 0.0
      %1897 = vmatpush2.msra.mxu0 0.0
      %1898 = vmatprep.subr.mxu0 0.0
      %1899 = vmatpush2.msra.mxu0 0.0
      %1900 = vmatprep.subr.mxu0 0.0
      %1901 = vmatpush2.msra.mxu0 0.0
      %1902 = vmatprep.subr.mxu0 0.0
      %1903 = vmatpush2.msra.mxu0 0.0
      %1904 = vmatprep.subr.mxu0 0.0
      %1905 = vmatpush2.msra.mxu0 0.0
      %1906 = vmatprep.subr.mxu0 0.0
      %1907 = vmatpush2.msra.mxu0 0.0
      %1908 = vmatprep.subr.mxu0 0.0
      %1909 = vmatpush2.msra.mxu0 0.0
      %1910 = vmatprep.subr.mxu0 0.0
      %1911 = vmatpush2.msra.mxu0 0.0
      %1912 = vmatprep.subr.mxu0 0.0
      %1913 = vmatpush2.msra.mxu0 0.0
      %1914 = vmatprep.subr.mxu0 0.0
      %1915 = vmatpush2.msra.mxu0 0.0
      %1916 = vmatprep.subr.mxu0 0.0
      %1917 = vmatpush2.msra.mxu0 0.0
      %1918 = vmatprep.subr.mxu0 0.0
      %1919 = vmatpush2.msra.mxu0 0.0
      %1920 = vmatprep.subr.mxu0 0.0
      %1921 = vmatpush2.msra.mxu0 0.0
      %1922 = vmatprep.mubr.f32.mxu0 0.0
      %v1923 = vand.u32 %v1345, 4294901760
      %1924 = vmatmul.mubr.f32.gmra.mxu0 %v1923
      %v1925 = vpop.f32.mrf.mxu0
      %v1926 = vadd.f32 %v1465, %v1925
      %v1927 = vpop.f32.mrf.mxu0
      %1928 = vmatprep.mubr.f32.mxu0 0.0
      %v1929 = vand.u32 %v1346, 4294901760
      %1930 = vmatmul.mubr.f32.gmra.mxu0 %v1929
      %v1931 = vpop.f32.mrf.mxu0
      %v1932 = vadd.f32 %v1475, %v1931
      %v1933 = vpop.f32.mrf.mxu0
      %1934 = vmatprep.mubr.f32.mxu0 0.0
      %v1935 = vand.u32 %v1347, 4294901760
      %1936 = vmatmul.mubr.f32.gmra.mxu0 %v1935
      %v1937 = vpop.f32.mrf.mxu0
      %v1938 = vadd.f32 %v1485, %v1937
      %v1939 = vpop.f32.mrf.mxu0
      %1940 = vmatprep.mubr.f32.mxu0 0.0
      %v1941 = vand.u32 %v1348, 4294901760
      %1942 = vmatmul.mubr.f32.gmra.mxu0 %v1941
      %v1943 = vpop.f32.mrf.mxu0
      %v1944 = vadd.f32 %v1495, %v1943
      %v1945 = vpop.f32.mrf.mxu0
      %1946 = vmatprep.mubr.f32.mxu0 0.0
      %v1947 = vand.u32 %v1349, 4294901760
      %1948 = vmatmul.mubr.f32.gmra.mxu0 %v1947
      %v1949 = vpop.f32.mrf.mxu0
      %v1950 = vadd.f32 %v1505, %v1949
      %v1951 = vpop.f32.mrf.mxu0
      %1952 = vmatprep.mubr.f32.mxu0 0.0
      %v1953 = vand.u32 %v1350, 4294901760
      %1954 = vmatmul.mubr.f32.gmra.mxu0 %v1953
      %v1955 = vpop.f32.mrf.mxu0
      %v1956 = vadd.f32 %v1515, %v1955
      %v1957 = vpop.f32.mrf.mxu0
      %1958 = vmatprep.mubr.f32.mxu0 0.0
      %v1959 = vand.u32 %v1351, 4294901760
      %1960 = vmatmul.mubr.f32.gmra.mxu0 %v1959
      %v1961 = vpop.f32.mrf.mxu0
      %v1962 = vadd.f32 %v1525, %v1961
      %v1963 = vpop.f32.mrf.mxu0
      %1964 = vmatprep.mubr.f32.mxu0 0.0
      %v1965 = vand.u32 %v1352, 4294901760
      %1966 = vmatmul.mubr.f32.gmra.mxu0 %v1965
      %v1967 = vpop.f32.mrf.mxu0
      %v1968 = vadd.f32 %v1535, %v1967
      %v1969 = vpop.f32.mrf.mxu0
      %1970 = vmatprep.mubr.f32.mxu0 0.0
      %v1971 = vand.u32 %v1353, 4294901760
      %1972 = vmatmul.mubr.f32.gmra.mxu0 %v1971
      %v1973 = vpop.f32.mrf.mxu0
      %v1974 = vadd.f32 %v1545, %v1973
      %v1975 = vpop.f32.mrf.mxu0
      %1976 = vmatprep.mubr.f32.mxu0 0.0
      %v1977 = vand.u32 %v1354, 4294901760
      %1978 = vmatmul.mubr.f32.gmra.mxu0 %v1977
      %v1979 = vpop.f32.mrf.mxu0
      %v1980 = vadd.f32 %v1555, %v1979
      %v1981 = vpop.f32.mrf.mxu0
      %1982 = vmatprep.mubr.f32.mxu0 0.0
      %v1983 = vand.u32 %v1355, 4294901760
      %1984 = vmatmul.mubr.f32.gmra.mxu0 %v1983
      %v1985 = vpop.f32.mrf.mxu0
      %v1986 = vadd.f32 %v1565, %v1985
      %v1987 = vpop.f32.mrf.mxu0
      %1988 = vmatprep.mubr.f32.mxu0 0.0
      %v1989 = vand.u32 %v1356, 4294901760
      %1990 = vmatmul.mubr.f32.gmra.mxu0 %v1989
      %v1991 = vpop.f32.mrf.mxu0
      %v1992 = vadd.f32 %v1575, %v1991
      %v1993 = vpop.f32.mrf.mxu0
      %1994 = vmatprep.mubr.f32.mxu0 0.0
      %v1995 = vand.u32 %v1357, 4294901760
      %1996 = vmatmul.mubr.f32.gmra.mxu0 %v1995
      %v1997 = vpop.f32.mrf.mxu0
      %v1998 = vadd.f32 %v1585, %v1997
      %v1999 = vpop.f32.mrf.mxu0
      %2000 = vmatprep.mubr.f32.mxu0 0.0
      %v2001 = vand.u32 %v1358, 4294901760
      %2002 = vmatmul.mubr.f32.gmra.mxu0 %v2001
      %v2003 = vpop.f32.mrf.mxu0
      %v2004 = vadd.f32 %v1595, %v2003
      %v2005 = vpop.f32.mrf.mxu0
      %2006 = vmatprep.mubr.f32.mxu0 0.0
      %v2007 = vand.u32 %v1359, 4294901760
      %2008 = vmatmul.mubr.f32.gmra.mxu0 %v2007
      %v2009 = vpop.f32.mrf.mxu0
      %v2010 = vadd.f32 %v1605, %v2009
      %v2011 = vpop.f32.mrf.mxu0
      %2012 = vmatprep.mubr.f32.mxu0 0.0
      %v2013 = vand.u32 %v1360, 4294901760
      %2014 = vmatmul.mubr.f32.gmra.mxu0 %v2013
      %v2015 = vpop.f32.mrf.mxu0
      %v2016 = vadd.f32 %v1615, %v2015
      %v2017 = vpop.f32.mrf.mxu0
      %2018 = vmatprep.mubr.f32.mxu0 0.0
      %v2019 = vand.u32 %v1361, 4294901760
      %2020 = vmatmul.mubr.f32.gmra.mxu0 %v2019
      %v2021 = vpop.f32.mrf.mxu0
      %v2022 = vadd.f32 %v1625, %v2021
      %v2023 = vpop.f32.mrf.mxu0
      %2024 = vmatprep.mubr.f32.mxu0 0.0
      %v2025 = vand.u32 %v1362, 4294901760
      %2026 = vmatmul.mubr.f32.gmra.mxu0 %v2025
      %v2027 = vpop.f32.mrf.mxu0
      %v2028 = vadd.f32 %v1635, %v2027
      %v2029 = vpop.f32.mrf.mxu0
      %2030 = vmatprep.mubr.f32.mxu0 0.0
      %v2031 = vand.u32 %v1363, 4294901760
      %2032 = vmatmul.mubr.f32.gmra.mxu0 %v2031
      %v2033 = vpop.f32.mrf.mxu0
      %v2034 = vadd.f32 %v1645, %v2033
      %v2035 = vpop.f32.mrf.mxu0
      %2036 = vmatprep.mubr.f32.mxu0 0.0
      %v2037 = vand.u32 %v1364, 4294901760
      %2038 = vmatmul.mubr.f32.gmra.mxu0 %v2037
      %v2039 = vpop.f32.mrf.mxu0
      %v2040 = vadd.f32 %v1655, %v2039
      %v2041 = vpop.f32.mrf.mxu0
      %2042 = vmatprep.mubr.f32.mxu0 0.0
      %v2043 = vand.u32 %v1365, 4294901760
      %2044 = vmatmul.mubr.f32.gmra.mxu0 %v2043
      %v2045 = vpop.f32.mrf.mxu0
      %v2046 = vadd.f32 %v1665, %v2045
      %v2047 = vpop.f32.mrf.mxu0
      %2048 = vmatprep.mubr.f32.mxu0 0.0
      %v2049 = vand.u32 %v1366, 4294901760
      %2050 = vmatmul.mubr.f32.gmra.mxu0 %v2049
      %v2051 = vpop.f32.mrf.mxu0
      %v2052 = vadd.f32 %v1675, %v2051
      %v2053 = vpop.f32.mrf.mxu0
      %2054 = vmatprep.mubr.f32.mxu0 0.0
      %v2055 = vand.u32 %v1367, 4294901760
      %2056 = vmatmul.mubr.f32.gmra.mxu0 %v2055
      %v2057 = vpop.f32.mrf.mxu0
      %v2058 = vadd.f32 %v1685, %v2057
      %v2059 = vpop.f32.mrf.mxu0
      %2060 = vmatprep.mubr.f32.mxu0 0.0
      %v2061 = vand.u32 %v1368, 4294901760
      %2062 = vmatmul.mubr.f32.gmra.mxu0 %v2061
      %v2063 = vpop.f32.mrf.mxu0
      %v2064 = vadd.f32 %v1695, %v2063
      %v2065 = vpop.f32.mrf.mxu0
      %2066 = vmatprep.mubr.f32.mxu0 0.0
      %v2067 = vand.u32 %v1369, 4294901760
      %2068 = vmatmul.mubr.f32.gmra.mxu0 %v2067
      %v2069 = vpop.f32.mrf.mxu0
      %v2070 = vadd.f32 %v1705, %v2069
      %v2071 = vpop.f32.mrf.mxu0
      %2072 = vmatprep.mubr.f32.mxu0 0.0
      %v2073 = vand.u32 %v1370, 4294901760
      %2074 = vmatmul.mubr.f32.gmra.mxu0 %v2073
      %v2075 = vpop.f32.mrf.mxu0
      %v2076 = vadd.f32 %v1715, %v2075
      %v2077 = vpop.f32.mrf.mxu0
      %2078 = vmatprep.mubr.f32.mxu0 0.0
      %v2079 = vand.u32 %v1371, 4294901760
      %2080 = vmatmul.mubr.f32.gmra.mxu0 %v2079
      %v2081 = vpop.f32.mrf.mxu0
      %v2082 = vadd.f32 %v1725, %v2081
      %v2083 = vpop.f32.mrf.mxu0
      %2084 = vmatprep.mubr.f32.mxu0 0.0
      %v2085 = vand.u32 %v1372, 4294901760
      %2086 = vmatmul.mubr.f32.gmra.mxu0 %v2085
      %v2087 = vpop.f32.mrf.mxu0
      %v2088 = vadd.f32 %v1735, %v2087
      %v2089 = vpop.f32.mrf.mxu0
      %2090 = vmatprep.mubr.f32.mxu0 0.0
      %v2091 = vand.u32 %v1373, 4294901760
      %2092 = vmatmul.mubr.f32.gmra.mxu0 %v2091
      %v2093 = vpop.f32.mrf.mxu0
      %v2094 = vadd.f32 %v1745, %v2093
      %v2095 = vpop.f32.mrf.mxu0
      %2096 = vmatprep.mubr.f32.mxu0 0.0
      %v2097 = vand.u32 %v1374, 4294901760
      %2098 = vmatmul.mubr.f32.gmra.mxu0 %v2097
      %v2099 = vpop.f32.mrf.mxu0
      %v2100 = vadd.f32 %v1755, %v2099
      %v2101 = vpop.f32.mrf.mxu0
      %2102 = vmatprep.mubr.f32.mxu0 0.0
      %v2103 = vand.u32 %v1375, 4294901760
      %2104 = vmatmul.mubr.f32.gmra.mxu0 %v2103
      %v2105 = vpop.f32.mrf.mxu0
      %v2106 = vadd.f32 %v1765, %v2105
      %v2107 = vpop.f32.mrf.mxu0
      %2108 = vmatprep.mubr.f32.mxu0 0.0
      %v2109 = vand.u32 %v1376, 4294901760
      %2110 = vmatmul.mubr.f32.gmra.mxu0 %v2109
      %v2111 = vpop.f32.mrf.mxu0
      %v2112 = vadd.f32 %v1775, %v2111
      %v2113 = vpop.f32.mrf.mxu0
      %2114 = vdwg.mxu0
      %2115 = vmatprep.subr.mxu0 0.0
      %v2116 = vand.u32 %v1342, 4294901760
      %v2117 = vsub.f32 %v1342, %v2116
      %2118 = vmatpush1.msra.mxu0 %v2117
      %2119 = vmatprep.subr.mxu0 0.0
      %v2120 = vand.u32 %v1336, 4294901760
      %v2121 = vsub.f32 %v1336, %v2120
      %2122 = vmatpush1.msra.mxu0 %v2121
      %2123 = vmatprep.subr.mxu0 0.0
      %v2124 = vand.u32 %v1330, 4294901760
      %v2125 = vsub.f32 %v1330, %v2124
      %2126 = vmatpush1.msra.mxu0 %v2125
      %2127 = vmatprep.subr.mxu0 0.0
      %v2128 = vand.u32 %v1324, 4294901760
      %v2129 = vsub.f32 %v1324, %v2128
      %2130 = vmatpush1.msra.mxu0 %v2129
      %2131 = vmatprep.subr.mxu0 0.0
      %v2132 = vand.u32 %v1318, 4294901760
      %v2133 = vsub.f32 %v1318, %v2132
      %2134 = vmatpush1.msra.mxu0 %v2133
      %2135 = vmatprep.subr.mxu0 0.0
      %v2136 = vand.u32 %v1312, 4294901760
      %v2137 = vsub.f32 %v1312, %v2136
      %2138 = vmatpush1.msra.mxu0 %v2137
      %2139 = vmatprep.subr.mxu0 0.0
      %v2140 = vand.u32 %v1306, 4294901760
      %v2141 = vsub.f32 %v1306, %v2140
      %2142 = vmatpush1.msra.mxu0 %v2141
      %2143 = vmatprep.subr.mxu0 0.0
      %v2144 = vand.u32 %v1300, 4294901760
      %v2145 = vsub.f32 %v1300, %v2144
      %2146 = vmatpush1.msra.mxu0 %v2145
      %2147 = vmatprep.subr.mxu0 0.0
      %v2148 = vand.u32 %v1294, 4294901760
      %v2149 = vsub.f32 %v1294, %v2148
      %2150 = vmatpush1.msra.mxu0 %v2149
      %2151 = vmatprep.subr.mxu0 0.0
      %v2152 = vand.u32 %v1288, 4294901760
      %v2153 = vsub.f32 %v1288, %v2152
      %2154 = vmatpush1.msra.mxu0 %v2153
      %2155 = vmatprep.subr.mxu0 0.0
      %v2156 = vand.u32 %v1282, 4294901760
      %v2157 = vsub.f32 %v1282, %v2156
      %2158 = vmatpush1.msra.mxu0 %v2157
      %2159 = vmatprep.subr.mxu0 0.0
      %v2160 = vand.u32 %v1276, 4294901760
      %v2161 = vsub.f32 %v1276, %v2160
      %2162 = vmatpush1.msra.mxu0 %v2161
      %2163 = vmatprep.subr.mxu0 0.0
      %v2164 = vand.u32 %v1270, 4294901760
      %v2165 = vsub.f32 %v1270, %v2164
      %2166 = vmatpush1.msra.mxu0 %v2165
      %2167 = vmatprep.subr.mxu0 0.0
      %v2168 = vand.u32 %v1264, 4294901760
      %v2169 = vsub.f32 %v1264, %v2168
      %2170 = vmatpush1.msra.mxu0 %v2169
      %2171 = vmatprep.subr.mxu0 0.0
      %v2172 = vand.u32 %v1258, 4294901760
      %v2173 = vsub.f32 %v1258, %v2172
      %2174 = vmatpush1.msra.mxu0 %v2173
      %2175 = vmatprep.subr.mxu0 0.0
      %v2176 = vand.u32 %v1252, 4294901760
      %v2177 = vsub.f32 %v1252, %v2176
      %2178 = vmatpush1.msra.mxu0 %v2177
      %2179 = vmatprep.subr.mxu0 0.0
      %2180 = vmatpush2.msra.mxu0 0.0
      %2181 = vmatprep.subr.mxu0 0.0
      %2182 = vmatpush2.msra.mxu0 0.0
      %2183 = vmatprep.subr.mxu0 0.0
      %2184 = vmatpush2.msra.mxu0 0.0
      %2185 = vmatprep.subr.mxu0 0.0
      %2186 = vmatpush2.msra.mxu0 0.0
      %2187 = vmatprep.subr.mxu0 0.0
      %2188 = vmatpush2.msra.mxu0 0.0
      %2189 = vmatprep.subr.mxu0 0.0
      %2190 = vmatpush2.msra.mxu0 0.0
      %2191 = vmatprep.subr.mxu0 0.0
      %2192 = vmatpush2.msra.mxu0 0.0
      %2193 = vmatprep.subr.mxu0 0.0
      %2194 = vmatpush2.msra.mxu0 0.0
      %2195 = vmatprep.subr.mxu0 0.0
      %2196 = vmatpush2.msra.mxu0 0.0
      %2197 = vmatprep.subr.mxu0 0.0
      %2198 = vmatpush2.msra.mxu0 0.0
      %2199 = vmatprep.subr.mxu0 0.0
      %2200 = vmatpush2.msra.mxu0 0.0
      %2201 = vmatprep.subr.mxu0 0.0
      %2202 = vmatpush2.msra.mxu0 0.0
      %2203 = vmatprep.subr.mxu0 0.0
      %2204 = vmatpush2.msra.mxu0 0.0
      %2205 = vmatprep.subr.mxu0 0.0
      %2206 = vmatpush2.msra.mxu0 0.0
      %2207 = vmatprep.subr.mxu0 0.0
      %2208 = vmatpush2.msra.mxu0 0.0
      %2209 = vmatprep.subr.mxu0 0.0
      %2210 = vmatpush2.msra.mxu0 0.0
      %2211 = vmatprep.mubr.f32.mxu0 0.0
      %v2212 = vand.u32 %v1345, 4294901760
      %v2213 = vsub.f32 %v1345, %v2212
      %2214 = vmatmul.mubr.f32.gmra.mxu0 %v2213
      %v2215 = vpop.f32.mrf.mxu0
      %v2216 = vadd.f32 %v1926, %v2215
      %v2217 = vpop.f32.mrf.mxu0
      %2218 = vmatprep.mubr.f32.mxu0 0.0
      %v2219 = vand.u32 %v1346, 4294901760
      %v2220 = vsub.f32 %v1346, %v2219
      %2221 = vmatmul.mubr.f32.gmra.mxu0 %v2220
      %v2222 = vpop.f32.mrf.mxu0
      %v2223 = vadd.f32 %v1932, %v2222
      %v2224 = vpop.f32.mrf.mxu0
      %2225 = vmatprep.mubr.f32.mxu0 0.0
      %v2226 = vand.u32 %v1347, 4294901760
      %v2227 = vsub.f32 %v1347, %v2226
      %2228 = vmatmul.mubr.f32.gmra.mxu0 %v2227
      %v2229 = vpop.f32.mrf.mxu0
      %v2230 = vadd.f32 %v1938, %v2229
      %v2231 = vpop.f32.mrf.mxu0
      %2232 = vmatprep.mubr.f32.mxu0 0.0
      %v2233 = vand.u32 %v1348, 4294901760
      %v2234 = vsub.f32 %v1348, %v2233
      %2235 = vmatmul.mubr.f32.gmra.mxu0 %v2234
      %v2236 = vpop.f32.mrf.mxu0
      %v2237 = vadd.f32 %v1944, %v2236
      %v2238 = vpop.f32.mrf.mxu0
      %2239 = vmatprep.mubr.f32.mxu0 0.0
      %v2240 = vand.u32 %v1349, 4294901760
      %v2241 = vsub.f32 %v1349, %v2240
      %2242 = vmatmul.mubr.f32.gmra.mxu0 %v2241
      %v2243 = vpop.f32.mrf.mxu0
      %v2244 = vadd.f32 %v1950, %v2243
      %v2245 = vpop.f32.mrf.mxu0
      %2246 = vmatprep.mubr.f32.mxu0 0.0
      %v2247 = vand.u32 %v1350, 4294901760
      %v2248 = vsub.f32 %v1350, %v2247
      %2249 = vmatmul.mubr.f32.gmra.mxu0 %v2248
      %v2250 = vpop.f32.mrf.mxu0
      %v2251 = vadd.f32 %v1956, %v2250
      %v2252 = vpop.f32.mrf.mxu0
      %2253 = vmatprep.mubr.f32.mxu0 0.0
      %v2254 = vand.u32 %v1351, 4294901760
      %v2255 = vsub.f32 %v1351, %v2254
      %2256 = vmatmul.mubr.f32.gmra.mxu0 %v2255
      %v2257 = vpop.f32.mrf.mxu0
      %v2258 = vadd.f32 %v1962, %v2257
      %v2259 = vpop.f32.mrf.mxu0
      %2260 = vmatprep.mubr.f32.mxu0 0.0
      %v2261 = vand.u32 %v1352, 4294901760
      %v2262 = vsub.f32 %v1352, %v2261
      %2263 = vmatmul.mubr.f32.gmra.mxu0 %v2262
      %v2264 = vpop.f32.mrf.mxu0
      %v2265 = vadd.f32 %v1968, %v2264
      %v2266 = vpop.f32.mrf.mxu0
      %2267 = vmatprep.mubr.f32.mxu0 0.0
      %v2268 = vand.u32 %v1353, 4294901760
      %v2269 = vsub.f32 %v1353, %v2268
      %2270 = vmatmul.mubr.f32.gmra.mxu0 %v2269
      %v2271 = vpop.f32.mrf.mxu0
      %v2272 = vadd.f32 %v1974, %v2271
      %v2273 = vpop.f32.mrf.mxu0
      %2274 = vmatprep.mubr.f32.mxu0 0.0
      %v2275 = vand.u32 %v1354, 4294901760
      %v2276 = vsub.f32 %v1354, %v2275
      %2277 = vmatmul.mubr.f32.gmra.mxu0 %v2276
      %v2278 = vpop.f32.mrf.mxu0
      %v2279 = vadd.f32 %v1980, %v2278
      %v2280 = vpop.f32.mrf.mxu0
      %2281 = vmatprep.mubr.f32.mxu0 0.0
      %v2282 = vand.u32 %v1355, 4294901760
      %v2283 = vsub.f32 %v1355, %v2282
      %2284 = vmatmul.mubr.f32.gmra.mxu0 %v2283
      %v2285 = vpop.f32.mrf.mxu0
      %v2286 = vadd.f32 %v1986, %v2285
      %v2287 = vpop.f32.mrf.mxu0
      %2288 = vmatprep.mubr.f32.mxu0 0.0
      %v2289 = vand.u32 %v1356, 4294901760
      %v2290 = vsub.f32 %v1356, %v2289
      %2291 = vmatmul.mubr.f32.gmra.mxu0 %v2290
      %v2292 = vpop.f32.mrf.mxu0
      %v2293 = vadd.f32 %v1992, %v2292
      %v2294 = vpop.f32.mrf.mxu0
      %2295 = vmatprep.mubr.f32.mxu0 0.0
      %v2296 = vand.u32 %v1357, 4294901760
      %v2297 = vsub.f32 %v1357, %v2296
      %2298 = vmatmul.mubr.f32.gmra.mxu0 %v2297
      %v2299 = vpop.f32.mrf.mxu0
      %v2300 = vadd.f32 %v1998, %v2299
      %v2301 = vpop.f32.mrf.mxu0
      %2302 = vmatprep.mubr.f32.mxu0 0.0
      %v2303 = vand.u32 %v1358, 4294901760
      %v2304 = vsub.f32 %v1358, %v2303
      %2305 = vmatmul.mubr.f32.gmra.mxu0 %v2304
      %v2306 = vpop.f32.mrf.mxu0
      %v2307 = vadd.f32 %v2004, %v2306
      %v2308 = vpop.f32.mrf.mxu0
      %2309 = vmatprep.mubr.f32.mxu0 0.0
      %v2310 = vand.u32 %v1359, 4294901760
      %v2311 = vsub.f32 %v1359, %v2310
      %2312 = vmatmul.mubr.f32.gmra.mxu0 %v2311
      %v2313 = vpop.f32.mrf.mxu0
      %v2314 = vadd.f32 %v2010, %v2313
      %v2315 = vpop.f32.mrf.mxu0
      %2316 = vmatprep.mubr.f32.mxu0 0.0
      %v2317 = vand.u32 %v1360, 4294901760
      %v2318 = vsub.f32 %v1360, %v2317
      %2319 = vmatmul.mubr.f32.gmra.mxu0 %v2318
      %v2320 = vpop.f32.mrf.mxu0
      %v2321 = vadd.f32 %v2016, %v2320
      %v2322 = vpop.f32.mrf.mxu0
      %2323 = vmatprep.mubr.f32.mxu0 0.0
      %v2324 = vand.u32 %v1361, 4294901760
      %v2325 = vsub.f32 %v1361, %v2324
      %2326 = vmatmul.mubr.f32.gmra.mxu0 %v2325
      %v2327 = vpop.f32.mrf.mxu0
      %v2328 = vadd.f32 %v2022, %v2327
      %v2329 = vpop.f32.mrf.mxu0
      %2330 = vmatprep.mubr.f32.mxu0 0.0
      %v2331 = vand.u32 %v1362, 4294901760
      %v2332 = vsub.f32 %v1362, %v2331
      %2333 = vmatmul.mubr.f32.gmra.mxu0 %v2332
      %v2334 = vpop.f32.mrf.mxu0
      %v2335 = vadd.f32 %v2028, %v2334
      %v2336 = vpop.f32.mrf.mxu0
      %2337 = vmatprep.mubr.f32.mxu0 0.0
      %v2338 = vand.u32 %v1363, 4294901760
      %v2339 = vsub.f32 %v1363, %v2338
      %2340 = vmatmul.mubr.f32.gmra.mxu0 %v2339
      %v2341 = vpop.f32.mrf.mxu0
      %v2342 = vadd.f32 %v2034, %v2341
      %v2343 = vpop.f32.mrf.mxu0
      %2344 = vmatprep.mubr.f32.mxu0 0.0
      %v2345 = vand.u32 %v1364, 4294901760
      %v2346 = vsub.f32 %v1364, %v2345
      %2347 = vmatmul.mubr.f32.gmra.mxu0 %v2346
      %v2348 = vpop.f32.mrf.mxu0
      %v2349 = vadd.f32 %v2040, %v2348
      %v2350 = vpop.f32.mrf.mxu0
      %2351 = vmatprep.mubr.f32.mxu0 0.0
      %v2352 = vand.u32 %v1365, 4294901760
      %v2353 = vsub.f32 %v1365, %v2352
      %2354 = vmatmul.mubr.f32.gmra.mxu0 %v2353
      %v2355 = vpop.f32.mrf.mxu0
      %v2356 = vadd.f32 %v2046, %v2355
      %v2357 = vpop.f32.mrf.mxu0
      %2358 = vmatprep.mubr.f32.mxu0 0.0
      %v2359 = vand.u32 %v1366, 4294901760
      %v2360 = vsub.f32 %v1366, %v2359
      %2361 = vmatmul.mubr.f32.gmra.mxu0 %v2360
      %v2362 = vpop.f32.mrf.mxu0
      %v2363 = vadd.f32 %v2052, %v2362
      %v2364 = vpop.f32.mrf.mxu0
      %2365 = vmatprep.mubr.f32.mxu0 0.0
      %v2366 = vand.u32 %v1367, 4294901760
      %v2367 = vsub.f32 %v1367, %v2366
      %2368 = vmatmul.mubr.f32.gmra.mxu0 %v2367
      %v2369 = vpop.f32.mrf.mxu0
      %v2370 = vadd.f32 %v2058, %v2369
      %v2371 = vpop.f32.mrf.mxu0
      %2372 = vmatprep.mubr.f32.mxu0 0.0
      %v2373 = vand.u32 %v1368, 4294901760
      %v2374 = vsub.f32 %v1368, %v2373
      %2375 = vmatmul.mubr.f32.gmra.mxu0 %v2374
      %v2376 = vpop.f32.mrf.mxu0
      %v2377 = vadd.f32 %v2064, %v2376
      %v2378 = vpop.f32.mrf.mxu0
      %2379 = vmatprep.mubr.f32.mxu0 0.0
      %v2380 = vand.u32 %v1369, 4294901760
      %v2381 = vsub.f32 %v1369, %v2380
      %2382 = vmatmul.mubr.f32.gmra.mxu0 %v2381
      %v2383 = vpop.f32.mrf.mxu0
      %v2384 = vadd.f32 %v2070, %v2383
      %v2385 = vpop.f32.mrf.mxu0
      %2386 = vmatprep.mubr.f32.mxu0 0.0
      %v2387 = vand.u32 %v1370, 4294901760
      %v2388 = vsub.f32 %v1370, %v2387
      %2389 = vmatmul.mubr.f32.gmra.mxu0 %v2388
      %v2390 = vpop.f32.mrf.mxu0
      %v2391 = vadd.f32 %v2076, %v2390
      %v2392 = vpop.f32.mrf.mxu0
      %2393 = vmatprep.mubr.f32.mxu0 0.0
      %v2394 = vand.u32 %v1371, 4294901760
      %v2395 = vsub.f32 %v1371, %v2394
      %2396 = vmatmul.mubr.f32.gmra.mxu0 %v2395
      %v2397 = vpop.f32.mrf.mxu0
      %v2398 = vadd.f32 %v2082, %v2397
      %v2399 = vpop.f32.mrf.mxu0
      %2400 = vmatprep.mubr.f32.mxu0 0.0
      %v2401 = vand.u32 %v1372, 4294901760
      %v2402 = vsub.f32 %v1372, %v2401
      %2403 = vmatmul.mubr.f32.gmra.mxu0 %v2402
      %v2404 = vpop.f32.mrf.mxu0
      %v2405 = vadd.f32 %v2088, %v2404
      %v2406 = vpop.f32.mrf.mxu0
      %2407 = vmatprep.mubr.f32.mxu0 0.0
      %v2408 = vand.u32 %v1373, 4294901760
      %v2409 = vsub.f32 %v1373, %v2408
      %2410 = vmatmul.mubr.f32.gmra.mxu0 %v2409
      %v2411 = vpop.f32.mrf.mxu0
      %v2412 = vadd.f32 %v2094, %v2411
      %v2413 = vpop.f32.mrf.mxu0
      %2414 = vmatprep.mubr.f32.mxu0 0.0
      %v2415 = vand.u32 %v1374, 4294901760
      %v2416 = vsub.f32 %v1374, %v2415
      %2417 = vmatmul.mubr.f32.gmra.mxu0 %v2416
      %v2418 = vpop.f32.mrf.mxu0
      %v2419 = vadd.f32 %v2100, %v2418
      %v2420 = vpop.f32.mrf.mxu0
      %2421 = vmatprep.mubr.f32.mxu0 0.0
      %v2422 = vand.u32 %v1375, 4294901760
      %v2423 = vsub.f32 %v1375, %v2422
      %2424 = vmatmul.mubr.f32.gmra.mxu0 %v2423
      %v2425 = vpop.f32.mrf.mxu0
      %v2426 = vadd.f32 %v2106, %v2425
      %v2427 = vpop.f32.mrf.mxu0
      %2428 = vmatprep.mubr.f32.mxu0 0.0
      %v2429 = vand.u32 %v1376, 4294901760
      %v2430 = vsub.f32 %v1376, %v2429
      %2431 = vmatmul.mubr.f32.gmra.mxu0 %v2430
      %v2432 = vpop.f32.mrf.mxu0
      %v2433 = vadd.f32 %v2112, %v2432
      %v2434 = vpop.f32.mrf.mxu0
      %2435 = vdwg.mxu0
      %2436 = vmatprep.subr.mxu0 0.0
      %v2437 = vand.u32 %v1342, 4294901760
      %2438 = vmatpush1.msra.mxu0 %v2437
      %2439 = vmatprep.subr.mxu0 0.0
      %v2440 = vand.u32 %v1336, 4294901760
      %2441 = vmatpush1.msra.mxu0 %v2440
      %2442 = vmatprep.subr.mxu0 0.0
      %v2443 = vand.u32 %v1330, 4294901760
      %2444 = vmatpush1.msra.mxu0 %v2443
      %2445 = vmatprep.subr.mxu0 0.0
      %v2446 = vand.u32 %v1324, 4294901760
      %2447 = vmatpush1.msra.mxu0 %v2446
      %2448 = vmatprep.subr.mxu0 0.0
      %v2449 = vand.u32 %v1318, 4294901760
      %2450 = vmatpush1.msra.mxu0 %v2449
      %2451 = vmatprep.subr.mxu0 0.0
      %v2452 = vand.u32 %v1312, 4294901760
      %2453 = vmatpush1.msra.mxu0 %v2452
      %2454 = vmatprep.subr.mxu0 0.0
      %v2455 = vand.u32 %v1306, 4294901760
      %2456 = vmatpush1.msra.mxu0 %v2455
      %2457 = vmatprep.subr.mxu0 0.0
      %v2458 = vand.u32 %v1300, 4294901760
      %2459 = vmatpush1.msra.mxu0 %v2458
      %2460 = vmatprep.subr.mxu0 0.0
      %v2461 = vand.u32 %v1294, 4294901760
      %2462 = vmatpush1.msra.mxu0 %v2461
      %2463 = vmatprep.subr.mxu0 0.0
      %v2464 = vand.u32 %v1288, 4294901760
      %2465 = vmatpush1.msra.mxu0 %v2464
      %2466 = vmatprep.subr.mxu0 0.0
      %v2467 = vand.u32 %v1282, 4294901760
      %2468 = vmatpush1.msra.mxu0 %v2467
      %2469 = vmatprep.subr.mxu0 0.0
      %v2470 = vand.u32 %v1276, 4294901760
      %2471 = vmatpush1.msra.mxu0 %v2470
      %2472 = vmatprep.subr.mxu0 0.0
      %v2473 = vand.u32 %v1270, 4294901760
      %2474 = vmatpush1.msra.mxu0 %v2473
      %2475 = vmatprep.subr.mxu0 0.0
      %v2476 = vand.u32 %v1264, 4294901760
      %2477 = vmatpush1.msra.mxu0 %v2476
      %2478 = vmatprep.subr.mxu0 0.0
      %v2479 = vand.u32 %v1258, 4294901760
      %2480 = vmatpush1.msra.mxu0 %v2479
      %2481 = vmatprep.subr.mxu0 0.0
      %v2482 = vand.u32 %v1252, 4294901760
      %2483 = vmatpush1.msra.mxu0 %v2482
      %2484 = vmatprep.subr.mxu0 0.0
      %2485 = vmatpush2.msra.mxu0 0.0
      %2486 = vmatprep.subr.mxu0 0.0
      %2487 = vmatpush2.msra.mxu0 0.0
      %2488 = vmatprep.subr.mxu0 0.0
      %2489 = vmatpush2.msra.mxu0 0.0
      %2490 = vmatprep.subr.mxu0 0.0
      %2491 = vmatpush2.msra.mxu0 0.0
      %2492 = vmatprep.subr.mxu0 0.0
      %2493 = vmatpush2.msra.mxu0 0.0
      %2494 = vmatprep.subr.mxu0 0.0
      %2495 = vmatpush2.msra.mxu0 0.0
      %2496 = vmatprep.subr.mxu0 0.0
      %2497 = vmatpush2.msra.mxu0 0.0
      %2498 = vmatprep.subr.mxu0 0.0
      %2499 = vmatpush2.msra.mxu0 0.0
      %2500 = vmatprep.subr.mxu0 0.0
      %2501 = vmatpush2.msra.mxu0 0.0
      %2502 = vmatprep.subr.mxu0 0.0
      %2503 = vmatpush2.msra.mxu0 0.0
      %2504 = vmatprep.subr.mxu0 0.0
      %2505 = vmatpush2.msra.mxu0 0.0
      %2506 = vmatprep.subr.mxu0 0.0
      %2507 = vmatpush2.msra.mxu0 0.0
      %2508 = vmatprep.subr.mxu0 0.0
      %2509 = vmatpush2.msra.mxu0 0.0
      %2510 = vmatprep.subr.mxu0 0.0
      %2511 = vmatpush2.msra.mxu0 0.0
      %2512 = vmatprep.subr.mxu0 0.0
      %2513 = vmatpush2.msra.mxu0 0.0
      %2514 = vmatprep.subr.mxu0 0.0
      %2515 = vmatpush2.msra.mxu0 0.0
      %2516 = vmatprep.mubr.f32.mxu0 0.0
      %v2517 = vand.u32 %v1345, 4294901760
      %v2518 = vsub.f32 %v1345, %v2517
      %v2519 = vand.u32 %v2518, 4294901760
      %2520 = vmatmul.mubr.f32.gmra.mxu0 %v2519
      %v2521 = vpop.f32.mrf.mxu0
      %v2522 = vadd.f32 %v2216, %v2521
      %v2523 = vpop.f32.mrf.mxu0
      %2524 = vmatprep.mubr.f32.mxu0 0.0
      %v2525 = vand.u32 %v1346, 4294901760
      %v2526 = vsub.f32 %v1346, %v2525
      %v2527 = vand.u32 %v2526, 4294901760
      %2528 = vmatmul.mubr.f32.gmra.mxu0 %v2527
      %v2529 = vpop.f32.mrf.mxu0
      %v2530 = vadd.f32 %v2223, %v2529
      %v2531 = vpop.f32.mrf.mxu0
      %2532 = vmatprep.mubr.f32.mxu0 0.0
      %v2533 = vand.u32 %v1347, 4294901760
      %v2534 = vsub.f32 %v1347, %v2533
      %v2535 = vand.u32 %v2534, 4294901760
      %2536 = vmatmul.mubr.f32.gmra.mxu0 %v2535
      %v2537 = vpop.f32.mrf.mxu0
      %v2538 = vadd.f32 %v2230, %v2537
      %v2539 = vpop.f32.mrf.mxu0
      %2540 = vmatprep.mubr.f32.mxu0 0.0
      %v2541 = vand.u32 %v1348, 4294901760
      %v2542 = vsub.f32 %v1348, %v2541
      %v2543 = vand.u32 %v2542, 4294901760
      %2544 = vmatmul.mubr.f32.gmra.mxu0 %v2543
      %v2545 = vpop.f32.mrf.mxu0
      %v2546 = vadd.f32 %v2237, %v2545
      %v2547 = vpop.f32.mrf.mxu0
      %2548 = vmatprep.mubr.f32.mxu0 0.0
      %v2549 = vand.u32 %v1349, 4294901760
      %v2550 = vsub.f32 %v1349, %v2549
      %v2551 = vand.u32 %v2550, 4294901760
      %2552 = vmatmul.mubr.f32.gmra.mxu0 %v2551
      %v2553 = vpop.f32.mrf.mxu0
      %v2554 = vadd.f32 %v2244, %v2553
      %v2555 = vpop.f32.mrf.mxu0
      %2556 = vmatprep.mubr.f32.mxu0 0.0
      %v2557 = vand.u32 %v1350, 4294901760
      %v2558 = vsub.f32 %v1350, %v2557
      %v2559 = vand.u32 %v2558, 4294901760
      %2560 = vmatmul.mubr.f32.gmra.mxu0 %v2559
      %v2561 = vpop.f32.mrf.mxu0
      %v2562 = vadd.f32 %v2251, %v2561
      %v2563 = vpop.f32.mrf.mxu0
      %2564 = vmatprep.mubr.f32.mxu0 0.0
      %v2565 = vand.u32 %v1351, 4294901760
      %v2566 = vsub.f32 %v1351, %v2565
      %v2567 = vand.u32 %v2566, 4294901760
      %2568 = vmatmul.mubr.f32.gmra.mxu0 %v2567
      %v2569 = vpop.f32.mrf.mxu0
      %v2570 = vadd.f32 %v2258, %v2569
      %v2571 = vpop.f32.mrf.mxu0
      %2572 = vmatprep.mubr.f32.mxu0 0.0
      %v2573 = vand.u32 %v1352, 4294901760
      %v2574 = vsub.f32 %v1352, %v2573
      %v2575 = vand.u32 %v2574, 4294901760
      %2576 = vmatmul.mubr.f32.gmra.mxu0 %v2575
      %v2577 = vpop.f32.mrf.mxu0
      %v2578 = vadd.f32 %v2265, %v2577
      %v2579 = vpop.f32.mrf.mxu0
      %2580 = vmatprep.mubr.f32.mxu0 0.0
      %v2581 = vand.u32 %v1353, 4294901760
      %v2582 = vsub.f32 %v1353, %v2581
      %v2583 = vand.u32 %v2582, 4294901760
      %2584 = vmatmul.mubr.f32.gmra.mxu0 %v2583
      %v2585 = vpop.f32.mrf.mxu0
      %v2586 = vadd.f32 %v2272, %v2585
      %v2587 = vpop.f32.mrf.mxu0
      %2588 = vmatprep.mubr.f32.mxu0 0.0
      %v2589 = vand.u32 %v1354, 4294901760
      %v2590 = vsub.f32 %v1354, %v2589
      %v2591 = vand.u32 %v2590, 4294901760
      %2592 = vmatmul.mubr.f32.gmra.mxu0 %v2591
      %v2593 = vpop.f32.mrf.mxu0
      %v2594 = vadd.f32 %v2279, %v2593
      %v2595 = vpop.f32.mrf.mxu0
      %2596 = vmatprep.mubr.f32.mxu0 0.0
      %v2597 = vand.u32 %v1355, 4294901760
      %v2598 = vsub.f32 %v1355, %v2597
      %v2599 = vand.u32 %v2598, 4294901760
      %2600 = vmatmul.mubr.f32.gmra.mxu0 %v2599
      %v2601 = vpop.f32.mrf.mxu0
      %v2602 = vadd.f32 %v2286, %v2601
      %v2603 = vpop.f32.mrf.mxu0
      %2604 = vmatprep.mubr.f32.mxu0 0.0
      %v2605 = vand.u32 %v1356, 4294901760
      %v2606 = vsub.f32 %v1356, %v2605
      %v2607 = vand.u32 %v2606, 4294901760
      %2608 = vmatmul.mubr.f32.gmra.mxu0 %v2607
      %v2609 = vpop.f32.mrf.mxu0
      %v2610 = vadd.f32 %v2293, %v2609
      %v2611 = vpop.f32.mrf.mxu0
      %2612 = vmatprep.mubr.f32.mxu0 0.0
      %v2613 = vand.u32 %v1357, 4294901760
      %v2614 = vsub.f32 %v1357, %v2613
      %v2615 = vand.u32 %v2614, 4294901760
      %2616 = vmatmul.mubr.f32.gmra.mxu0 %v2615
      %v2617 = vpop.f32.mrf.mxu0
      %v2618 = vadd.f32 %v2300, %v2617
      %v2619 = vpop.f32.mrf.mxu0
      %2620 = vmatprep.mubr.f32.mxu0 0.0
      %v2621 = vand.u32 %v1358, 4294901760
      %v2622 = vsub.f32 %v1358, %v2621
      %v2623 = vand.u32 %v2622, 4294901760
      %2624 = vmatmul.mubr.f32.gmra.mxu0 %v2623
      %v2625 = vpop.f32.mrf.mxu0
      %v2626 = vadd.f32 %v2307, %v2625
      %v2627 = vpop.f32.mrf.mxu0
      %2628 = vmatprep.mubr.f32.mxu0 0.0
      %v2629 = vand.u32 %v1359, 4294901760
      %v2630 = vsub.f32 %v1359, %v2629
      %v2631 = vand.u32 %v2630, 4294901760
      %2632 = vmatmul.mubr.f32.gmra.mxu0 %v2631
      %v2633 = vpop.f32.mrf.mxu0
      %v2634 = vadd.f32 %v2314, %v2633
      %v2635 = vpop.f32.mrf.mxu0
      %2636 = vmatprep.mubr.f32.mxu0 0.0
      %v2637 = vand.u32 %v1360, 4294901760
      %v2638 = vsub.f32 %v1360, %v2637
      %v2639 = vand.u32 %v2638, 4294901760
      %2640 = vmatmul.mubr.f32.gmra.mxu0 %v2639
      %v2641 = vpop.f32.mrf.mxu0
      %v2642 = vadd.f32 %v2321, %v2641
      %v2643 = vpop.f32.mrf.mxu0
      %2644 = vmatprep.mubr.f32.mxu0 0.0
      %v2645 = vand.u32 %v1361, 4294901760
      %v2646 = vsub.f32 %v1361, %v2645
      %v2647 = vand.u32 %v2646, 4294901760
      %2648 = vmatmul.mubr.f32.gmra.mxu0 %v2647
      %v2649 = vpop.f32.mrf.mxu0
      %v2650 = vadd.f32 %v2328, %v2649
      %v2651 = vpop.f32.mrf.mxu0
      %2652 = vmatprep.mubr.f32.mxu0 0.0
      %v2653 = vand.u32 %v1362, 4294901760
      %v2654 = vsub.f32 %v1362, %v2653
      %v2655 = vand.u32 %v2654, 4294901760
      %2656 = vmatmul.mubr.f32.gmra.mxu0 %v2655
      %v2657 = vpop.f32.mrf.mxu0
      %v2658 = vadd.f32 %v2335, %v2657
      %v2659 = vpop.f32.mrf.mxu0
      %2660 = vmatprep.mubr.f32.mxu0 0.0
      %v2661 = vand.u32 %v1363, 4294901760
      %v2662 = vsub.f32 %v1363, %v2661
      %v2663 = vand.u32 %v2662, 4294901760
      %2664 = vmatmul.mubr.f32.gmra.mxu0 %v2663
      %v2665 = vpop.f32.mrf.mxu0
      %v2666 = vadd.f32 %v2342, %v2665
      %v2667 = vpop.f32.mrf.mxu0
      %2668 = vmatprep.mubr.f32.mxu0 0.0
      %v2669 = vand.u32 %v1364, 4294901760
      %v2670 = vsub.f32 %v1364, %v2669
      %v2671 = vand.u32 %v2670, 4294901760
      %2672 = vmatmul.mubr.f32.gmra.mxu0 %v2671
      %v2673 = vpop.f32.mrf.mxu0
      %v2674 = vadd.f32 %v2349, %v2673
      %v2675 = vpop.f32.mrf.mxu0
      %2676 = vmatprep.mubr.f32.mxu0 0.0
      %v2677 = vand.u32 %v1365, 4294901760
      %v2678 = vsub.f32 %v1365, %v2677
      %v2679 = vand.u32 %v2678, 4294901760
      %2680 = vmatmul.mubr.f32.gmra.mxu0 %v2679
      %v2681 = vpop.f32.mrf.mxu0
      %v2682 = vadd.f32 %v2356, %v2681
      %v2683 = vpop.f32.mrf.mxu0
      %2684 = vmatprep.mubr.f32.mxu0 0.0
      %v2685 = vand.u32 %v1366, 4294901760
      %v2686 = vsub.f32 %v1366, %v2685
      %v2687 = vand.u32 %v2686, 4294901760
      %2688 = vmatmul.mubr.f32.gmra.mxu0 %v2687
      %v2689 = vpop.f32.mrf.mxu0
      %v2690 = vadd.f32 %v2363, %v2689
      %v2691 = vpop.f32.mrf.mxu0
      %2692 = vmatprep.mubr.f32.mxu0 0.0
      %v2693 = vand.u32 %v1367, 4294901760
      %v2694 = vsub.f32 %v1367, %v2693
      %v2695 = vand.u32 %v2694, 4294901760
      %2696 = vmatmul.mubr.f32.gmra.mxu0 %v2695
      %v2697 = vpop.f32.mrf.mxu0
      %v2698 = vadd.f32 %v2370, %v2697
      %v2699 = vpop.f32.mrf.mxu0
      %2700 = vmatprep.mubr.f32.mxu0 0.0
      %v2701 = vand.u32 %v1368, 4294901760
      %v2702 = vsub.f32 %v1368, %v2701
      %v2703 = vand.u32 %v2702, 4294901760
      %2704 = vmatmul.mubr.f32.gmra.mxu0 %v2703
      %v2705 = vpop.f32.mrf.mxu0
      %v2706 = vadd.f32 %v2377, %v2705
      %v2707 = vpop.f32.mrf.mxu0
      %2708 = vmatprep.mubr.f32.mxu0 0.0
      %v2709 = vand.u32 %v1369, 4294901760
      %v2710 = vsub.f32 %v1369, %v2709
      %v2711 = vand.u32 %v2710, 4294901760
      %2712 = vmatmul.mubr.f32.gmra.mxu0 %v2711
      %v2713 = vpop.f32.mrf.mxu0
      %v2714 = vadd.f32 %v2384, %v2713
      %v2715 = vpop.f32.mrf.mxu0
      %2716 = vmatprep.mubr.f32.mxu0 0.0
      %v2717 = vand.u32 %v1370, 4294901760
      %v2718 = vsub.f32 %v1370, %v2717
      %v2719 = vand.u32 %v2718, 4294901760
      %2720 = vmatmul.mubr.f32.gmra.mxu0 %v2719
      %v2721 = vpop.f32.mrf.mxu0
      %v2722 = vadd.f32 %v2391, %v2721
      %v2723 = vpop.f32.mrf.mxu0
      %2724 = vmatprep.mubr.f32.mxu0 0.0
      %v2725 = vand.u32 %v1371, 4294901760
      %v2726 = vsub.f32 %v1371, %v2725
      %v2727 = vand.u32 %v2726, 4294901760
      %2728 = vmatmul.mubr.f32.gmra.mxu0 %v2727
      %v2729 = vpop.f32.mrf.mxu0
      %v2730 = vadd.f32 %v2398, %v2729
      %v2731 = vpop.f32.mrf.mxu0
      %2732 = vmatprep.mubr.f32.mxu0 0.0
      %v2733 = vand.u32 %v1372, 4294901760
      %v2734 = vsub.f32 %v1372, %v2733
      %v2735 = vand.u32 %v2734, 4294901760
      %2736 = vmatmul.mubr.f32.gmra.mxu0 %v2735
      %v2737 = vpop.f32.mrf.mxu0
      %v2738 = vadd.f32 %v2405, %v2737
      %v2739 = vpop.f32.mrf.mxu0
      %2740 = vmatprep.mubr.f32.mxu0 0.0
      %v2741 = vand.u32 %v1373, 4294901760
      %v2742 = vsub.f32 %v1373, %v2741
      %v2743 = vand.u32 %v2742, 4294901760
      %2744 = vmatmul.mubr.f32.gmra.mxu0 %v2743
      %v2745 = vpop.f32.mrf.mxu0
      %v2746 = vadd.f32 %v2412, %v2745
      %v2747 = vpop.f32.mrf.mxu0
      %2748 = vmatprep.mubr.f32.mxu0 0.0
      %v2749 = vand.u32 %v1374, 4294901760
      %v2750 = vsub.f32 %v1374, %v2749
      %v2751 = vand.u32 %v2750, 4294901760
      %2752 = vmatmul.mubr.f32.gmra.mxu0 %v2751
      %v2753 = vpop.f32.mrf.mxu0
      %v2754 = vadd.f32 %v2419, %v2753
      %v2755 = vpop.f32.mrf.mxu0
      %2756 = vmatprep.mubr.f32.mxu0 0.0
      %v2757 = vand.u32 %v1375, 4294901760
      %v2758 = vsub.f32 %v1375, %v2757
      %v2759 = vand.u32 %v2758, 4294901760
      %2760 = vmatmul.mubr.f32.gmra.mxu0 %v2759
      %v2761 = vpop.f32.mrf.mxu0
      %v2762 = vadd.f32 %v2426, %v2761
      %v2763 = vpop.f32.mrf.mxu0
      %2764 = vmatprep.mubr.f32.mxu0 0.0
      %v2765 = vand.u32 %v1376, 4294901760
      %v2766 = vsub.f32 %v1376, %v2765
      %v2767 = vand.u32 %v2766, 4294901760
      %2768 = vmatmul.mubr.f32.gmra.mxu0 %v2767
      %v2769 = vpop.f32.mrf.mxu0
      %v2770 = vadd.f32 %v2433, %v2769
      %v2771 = vpop.f32.mrf.mxu0
      %2772 = vdwg.mxu0
      %2773 = vmatprep.subr.mxu0 0.0
      %v2774 = vand.u32 %v1342, 4294901760
      %v2775 = vsub.f32 %v1342, %v2774
      %v2776 = vand.u32 %v2775, 4294901760
      %2777 = vmatpush1.msra.mxu0 %v2776
      %2778 = vmatprep.subr.mxu0 0.0
      %v2779 = vand.u32 %v1336, 4294901760
      %v2780 = vsub.f32 %v1336, %v2779
      %v2781 = vand.u32 %v2780, 4294901760
      %2782 = vmatpush1.msra.mxu0 %v2781
      %2783 = vmatprep.subr.mxu0 0.0
      %v2784 = vand.u32 %v1330, 4294901760
      %v2785 = vsub.f32 %v1330, %v2784
      %v2786 = vand.u32 %v2785, 4294901760
      %2787 = vmatpush1.msra.mxu0 %v2786
      %2788 = vmatprep.subr.mxu0 0.0
      %v2789 = vand.u32 %v1324, 4294901760
      %v2790 = vsub.f32 %v1324, %v2789
      %v2791 = vand.u32 %v2790, 4294901760
      %2792 = vmatpush1.msra.mxu0 %v2791
      %2793 = vmatprep.subr.mxu0 0.0
      %v2794 = vand.u32 %v1318, 4294901760
      %v2795 = vsub.f32 %v1318, %v2794
      %v2796 = vand.u32 %v2795, 4294901760
      %2797 = vmatpush1.msra.mxu0 %v2796
      %2798 = vmatprep.subr.mxu0 0.0
      %v2799 = vand.u32 %v1312, 4294901760
      %v2800 = vsub.f32 %v1312, %v2799
      %v2801 = vand.u32 %v2800, 4294901760
      %2802 = vmatpush1.msra.mxu0 %v2801
      %2803 = vmatprep.subr.mxu0 0.0
      %v2804 = vand.u32 %v1306, 4294901760
      %v2805 = vsub.f32 %v1306, %v2804
      %v2806 = vand.u32 %v2805, 4294901760
      %2807 = vmatpush1.msra.mxu0 %v2806
      %2808 = vmatprep.subr.mxu0 0.0
      %v2809 = vand.u32 %v1300, 4294901760
      %v2810 = vsub.f32 %v1300, %v2809
      %v2811 = vand.u32 %v2810, 4294901760
      %2812 = vmatpush1.msra.mxu0 %v2811
      %2813 = vmatprep.subr.mxu0 0.0
      %v2814 = vand.u32 %v1294, 4294901760
      %v2815 = vsub.f32 %v1294, %v2814
      %v2816 = vand.u32 %v2815, 4294901760
      %2817 = vmatpush1.msra.mxu0 %v2816
      %2818 = vmatprep.subr.mxu0 0.0
      %v2819 = vand.u32 %v1288, 4294901760
      %v2820 = vsub.f32 %v1288, %v2819
      %v2821 = vand.u32 %v2820, 4294901760
      %2822 = vmatpush1.msra.mxu0 %v2821
      %2823 = vmatprep.subr.mxu0 0.0
      %v2824 = vand.u32 %v1282, 4294901760
      %v2825 = vsub.f32 %v1282, %v2824
      %v2826 = vand.u32 %v2825, 4294901760
      %2827 = vmatpush1.msra.mxu0 %v2826
      %2828 = vmatprep.subr.mxu0 0.0
      %v2829 = vand.u32 %v1276, 4294901760
      %v2830 = vsub.f32 %v1276, %v2829
      %v2831 = vand.u32 %v2830, 4294901760
      %2832 = vmatpush1.msra.mxu0 %v2831
      %2833 = vmatprep.subr.mxu0 0.0
      %v2834 = vand.u32 %v1270, 4294901760
      %v2835 = vsub.f32 %v1270, %v2834
      %v2836 = vand.u32 %v2835, 4294901760
      %2837 = vmatpush1.msra.mxu0 %v2836
      %2838 = vmatprep.subr.mxu0 0.0
      %v2839 = vand.u32 %v1264, 4294901760
      %v2840 = vsub.f32 %v1264, %v2839
      %v2841 = vand.u32 %v2840, 4294901760
      %2842 = vmatpush1.msra.mxu0 %v2841
      %2843 = vmatprep.subr.mxu0 0.0
      %v2844 = vand.u32 %v1258, 4294901760
      %v2845 = vsub.f32 %v1258, %v2844
      %v2846 = vand.u32 %v2845, 4294901760
      %2847 = vmatpush1.msra.mxu0 %v2846
      %2848 = vmatprep.subr.mxu0 0.0
      %v2849 = vand.u32 %v1252, 4294901760
      %v2850 = vsub.f32 %v1252, %v2849
      %v2851 = vand.u32 %v2850, 4294901760
      %2852 = vmatpush1.msra.mxu0 %v2851
      %2853 = vmatprep.subr.mxu0 0.0
      %2854 = vmatpush2.msra.mxu0 0.0
      %2855 = vmatprep.subr.mxu0 0.0
      %2856 = vmatpush2.msra.mxu0 0.0
      %2857 = vmatprep.subr.mxu0 0.0
      %2858 = vmatpush2.msra.mxu0 0.0
      %2859 = vmatprep.subr.mxu0 0.0
      %2860 = vmatpush2.msra.mxu0 0.0
      %2861 = vmatprep.subr.mxu0 0.0
      %2862 = vmatpush2.msra.mxu0 0.0
      %2863 = vmatprep.subr.mxu0 0.0
      %2864 = vmatpush2.msra.mxu0 0.0
      %2865 = vmatprep.subr.mxu0 0.0
      %2866 = vmatpush2.msra.mxu0 0.0
      %2867 = vmatprep.subr.mxu0 0.0
      %2868 = vmatpush2.msra.mxu0 0.0
      %2869 = vmatprep.subr.mxu0 0.0
      %2870 = vmatpush2.msra.mxu0 0.0
      %2871 = vmatprep.subr.mxu0 0.0
      %2872 = vmatpush2.msra.mxu0 0.0
      %2873 = vmatprep.subr.mxu0 0.0
      %2874 = vmatpush2.msra.mxu0 0.0
      %2875 = vmatprep.subr.mxu0 0.0
      %2876 = vmatpush2.msra.mxu0 0.0
      %2877 = vmatprep.subr.mxu0 0.0
      %2878 = vmatpush2.msra.mxu0 0.0
      %2879 = vmatprep.subr.mxu0 0.0
      %2880 = vmatpush2.msra.mxu0 0.0
      %2881 = vmatprep.subr.mxu0 0.0
      %2882 = vmatpush2.msra.mxu0 0.0
      %2883 = vmatprep.subr.mxu0 0.0
      %2884 = vmatpush2.msra.mxu0 0.0
      %2885 = vmatprep.mubr.f32.mxu0 0.0
      %v2886 = vand.u32 %v1345, 4294901760
      %2887 = vmatmul.mubr.f32.gmra.mxu0 %v2886
      %v2888 = vpop.f32.mrf.mxu0
      %v2889 = vadd.f32 %v2522, %v2888
      %v2890 = vpop.f32.mrf.mxu0
      %2891 = vmatprep.mubr.f32.mxu0 0.0
      %v2892 = vand.u32 %v1346, 4294901760
      %2893 = vmatmul.mubr.f32.gmra.mxu0 %v2892
      %v2894 = vpop.f32.mrf.mxu0
      %v2895 = vadd.f32 %v2530, %v2894
      %v2896 = vpop.f32.mrf.mxu0
      %2897 = vmatprep.mubr.f32.mxu0 0.0
      %v2898 = vand.u32 %v1347, 4294901760
      %2899 = vmatmul.mubr.f32.gmra.mxu0 %v2898
      %v2900 = vpop.f32.mrf.mxu0
      %v2901 = vadd.f32 %v2538, %v2900
      %v2902 = vpop.f32.mrf.mxu0
      %2903 = vmatprep.mubr.f32.mxu0 0.0
      %v2904 = vand.u32 %v1348, 4294901760
      %2905 = vmatmul.mubr.f32.gmra.mxu0 %v2904
      %v2906 = vpop.f32.mrf.mxu0
      %v2907 = vadd.f32 %v2546, %v2906
      %v2908 = vpop.f32.mrf.mxu0
      %2909 = vmatprep.mubr.f32.mxu0 0.0
      %v2910 = vand.u32 %v1349, 4294901760
      %2911 = vmatmul.mubr.f32.gmra.mxu0 %v2910
      %v2912 = vpop.f32.mrf.mxu0
      %v2913 = vadd.f32 %v2554, %v2912
      %v2914 = vpop.f32.mrf.mxu0
      %2915 = vmatprep.mubr.f32.mxu0 0.0
      %v2916 = vand.u32 %v1350, 4294901760
      %2917 = vmatmul.mubr.f32.gmra.mxu0 %v2916
      %v2918 = vpop.f32.mrf.mxu0
      %v2919 = vadd.f32 %v2562, %v2918
      %v2920 = vpop.f32.mrf.mxu0
      %2921 = vmatprep.mubr.f32.mxu0 0.0
      %v2922 = vand.u32 %v1351, 4294901760
      %2923 = vmatmul.mubr.f32.gmra.mxu0 %v2922
      %v2924 = vpop.f32.mrf.mxu0
      %v2925 = vadd.f32 %v2570, %v2924
      %v2926 = vpop.f32.mrf.mxu0
      %2927 = vmatprep.mubr.f32.mxu0 0.0
      %v2928 = vand.u32 %v1352, 4294901760
      %2929 = vmatmul.mubr.f32.gmra.mxu0 %v2928
      %v2930 = vpop.f32.mrf.mxu0
      %v2931 = vadd.f32 %v2578, %v2930
      %v2932 = vpop.f32.mrf.mxu0
      %2933 = vmatprep.mubr.f32.mxu0 0.0
      %v2934 = vand.u32 %v1353, 4294901760
      %2935 = vmatmul.mubr.f32.gmra.mxu0 %v2934
      %v2936 = vpop.f32.mrf.mxu0
      %v2937 = vadd.f32 %v2586, %v2936
      %v2938 = vpop.f32.mrf.mxu0
      %2939 = vmatprep.mubr.f32.mxu0 0.0
      %v2940 = vand.u32 %v1354, 4294901760
      %2941 = vmatmul.mubr.f32.gmra.mxu0 %v2940
      %v2942 = vpop.f32.mrf.mxu0
      %v2943 = vadd.f32 %v2594, %v2942
      %v2944 = vpop.f32.mrf.mxu0
      %2945 = vmatprep.mubr.f32.mxu0 0.0
      %v2946 = vand.u32 %v1355, 4294901760
      %2947 = vmatmul.mubr.f32.gmra.mxu0 %v2946
      %v2948 = vpop.f32.mrf.mxu0
      %v2949 = vadd.f32 %v2602, %v2948
      %v2950 = vpop.f32.mrf.mxu0
      %2951 = vmatprep.mubr.f32.mxu0 0.0
      %v2952 = vand.u32 %v1356, 4294901760
      %2953 = vmatmul.mubr.f32.gmra.mxu0 %v2952
      %v2954 = vpop.f32.mrf.mxu0
      %v2955 = vadd.f32 %v2610, %v2954
      %v2956 = vpop.f32.mrf.mxu0
      %2957 = vmatprep.mubr.f32.mxu0 0.0
      %v2958 = vand.u32 %v1357, 4294901760
      %2959 = vmatmul.mubr.f32.gmra.mxu0 %v2958
      %v2960 = vpop.f32.mrf.mxu0
      %v2961 = vadd.f32 %v2618, %v2960
      %v2962 = vpop.f32.mrf.mxu0
      %2963 = vmatprep.mubr.f32.mxu0 0.0
      %v2964 = vand.u32 %v1358, 4294901760
      %2965 = vmatmul.mubr.f32.gmra.mxu0 %v2964
      %v2966 = vpop.f32.mrf.mxu0
      %v2967 = vadd.f32 %v2626, %v2966
      %v2968 = vpop.f32.mrf.mxu0
      %2969 = vmatprep.mubr.f32.mxu0 0.0
      %v2970 = vand.u32 %v1359, 4294901760
      %2971 = vmatmul.mubr.f32.gmra.mxu0 %v2970
      %v2972 = vpop.f32.mrf.mxu0
      %v2973 = vadd.f32 %v2634, %v2972
      %v2974 = vpop.f32.mrf.mxu0
      %2975 = vmatprep.mubr.f32.mxu0 0.0
      %v2976 = vand.u32 %v1360, 4294901760
      %2977 = vmatmul.mubr.f32.gmra.mxu0 %v2976
      %v2978 = vpop.f32.mrf.mxu0
      %v2979 = vadd.f32 %v2642, %v2978
      %v2980 = vpop.f32.mrf.mxu0
      %2981 = vmatprep.mubr.f32.mxu0 0.0
      %v2982 = vand.u32 %v1361, 4294901760
      %2983 = vmatmul.mubr.f32.gmra.mxu0 %v2982
      %v2984 = vpop.f32.mrf.mxu0
      %v2985 = vadd.f32 %v2650, %v2984
      %v2986 = vpop.f32.mrf.mxu0
      %2987 = vmatprep.mubr.f32.mxu0 0.0
      %v2988 = vand.u32 %v1362, 4294901760
      %2989 = vmatmul.mubr.f32.gmra.mxu0 %v2988
      %v2990 = vpop.f32.mrf.mxu0
      %v2991 = vadd.f32 %v2658, %v2990
      %v2992 = vpop.f32.mrf.mxu0
      %2993 = vmatprep.mubr.f32.mxu0 0.0
      %v2994 = vand.u32 %v1363, 4294901760
      %2995 = vmatmul.mubr.f32.gmra.mxu0 %v2994
      %v2996 = vpop.f32.mrf.mxu0
      %v2997 = vadd.f32 %v2666, %v2996
      %v2998 = vpop.f32.mrf.mxu0
      %2999 = vmatprep.mubr.f32.mxu0 0.0
      %v3000 = vand.u32 %v1364, 4294901760
      %3001 = vmatmul.mubr.f32.gmra.mxu0 %v3000
      %v3002 = vpop.f32.mrf.mxu0
      %v3003 = vadd.f32 %v2674, %v3002
      %v3004 = vpop.f32.mrf.mxu0
      %3005 = vmatprep.mubr.f32.mxu0 0.0
      %v3006 = vand.u32 %v1365, 4294901760
      %3007 = vmatmul.mubr.f32.gmra.mxu0 %v3006
      %v3008 = vpop.f32.mrf.mxu0
      %v3009 = vadd.f32 %v2682, %v3008
      %v3010 = vpop.f32.mrf.mxu0
      %3011 = vmatprep.mubr.f32.mxu0 0.0
      %v3012 = vand.u32 %v1366, 4294901760
      %3013 = vmatmul.mubr.f32.gmra.mxu0 %v3012
      %v3014 = vpop.f32.mrf.mxu0
      %v3015 = vadd.f32 %v2690, %v3014
      %v3016 = vpop.f32.mrf.mxu0
      %3017 = vmatprep.mubr.f32.mxu0 0.0
      %v3018 = vand.u32 %v1367, 4294901760
      %3019 = vmatmul.mubr.f32.gmra.mxu0 %v3018
      %v3020 = vpop.f32.mrf.mxu0
      %v3021 = vadd.f32 %v2698, %v3020
      %v3022 = vpop.f32.mrf.mxu0
      %3023 = vmatprep.mubr.f32.mxu0 0.0
      %v3024 = vand.u32 %v1368, 4294901760
      %3025 = vmatmul.mubr.f32.gmra.mxu0 %v3024
      %v3026 = vpop.f32.mrf.mxu0
      %v3027 = vadd.f32 %v2706, %v3026
      %v3028 = vpop.f32.mrf.mxu0
      %3029 = vmatprep.mubr.f32.mxu0 0.0
      %v3030 = vand.u32 %v1369, 4294901760
      %3031 = vmatmul.mubr.f32.gmra.mxu0 %v3030
      %v3032 = vpop.f32.mrf.mxu0
      %v3033 = vadd.f32 %v2714, %v3032
      %v3034 = vpop.f32.mrf.mxu0
      %3035 = vmatprep.mubr.f32.mxu0 0.0
      %v3036 = vand.u32 %v1370, 4294901760
      %3037 = vmatmul.mubr.f32.gmra.mxu0 %v3036
      %v3038 = vpop.f32.mrf.mxu0
      %v3039 = vadd.f32 %v2722, %v3038
      %v3040 = vpop.f32.mrf.mxu0
      %3041 = vmatprep.mubr.f32.mxu0 0.0
      %v3042 = vand.u32 %v1371, 4294901760
      %3043 = vmatmul.mubr.f32.gmra.mxu0 %v3042
      %v3044 = vpop.f32.mrf.mxu0
      %v3045 = vadd.f32 %v2730, %v3044
      %v3046 = vpop.f32.mrf.mxu0
      %3047 = vmatprep.mubr.f32.mxu0 0.0
      %v3048 = vand.u32 %v1372, 4294901760
      %3049 = vmatmul.mubr.f32.gmra.mxu0 %v3048
      %v3050 = vpop.f32.mrf.mxu0
      %v3051 = vadd.f32 %v2738, %v3050
      %v3052 = vpop.f32.mrf.mxu0
      %3053 = vmatprep.mubr.f32.mxu0 0.0
      %v3054 = vand.u32 %v1373, 4294901760
      %3055 = vmatmul.mubr.f32.gmra.mxu0 %v3054
      %v3056 = vpop.f32.mrf.mxu0
      %v3057 = vadd.f32 %v2746, %v3056
      %v3058 = vpop.f32.mrf.mxu0
      %3059 = vmatprep.mubr.f32.mxu0 0.0
      %v3060 = vand.u32 %v1374, 4294901760
      %3061 = vmatmul.mubr.f32.gmra.mxu0 %v3060
      %v3062 = vpop.f32.mrf.mxu0
      %v3063 = vadd.f32 %v2754, %v3062
      %v3064 = vpop.f32.mrf.mxu0
      %3065 = vmatprep.mubr.f32.mxu0 0.0
      %v3066 = vand.u32 %v1375, 4294901760
      %3067 = vmatmul.mubr.f32.gmra.mxu0 %v3066
      %v3068 = vpop.f32.mrf.mxu0
      %v3069 = vadd.f32 %v2762, %v3068
      %v3070 = vpop.f32.mrf.mxu0
      %3071 = vmatprep.mubr.f32.mxu0 0.0
      %v3072 = vand.u32 %v1376, 4294901760
      %3073 = vmatmul.mubr.f32.gmra.mxu0 %v3072
      %v3074 = vpop.f32.mrf.mxu0
      %v3075 = vadd.f32 %v2770, %v3074
      %v3076 = vpop.f32.mrf.mxu0
      %3077 = vdwg.mxu0
      %3078 = vmatprep.subr.mxu0 0.0
      %v3079 = vand.u32 %v1342, 4294901760
      %3080 = vmatpush1.msra.mxu0 %v3079
      %3081 = vmatprep.subr.mxu0 0.0
      %v3082 = vand.u32 %v1336, 4294901760
      %3083 = vmatpush1.msra.mxu0 %v3082
      %3084 = vmatprep.subr.mxu0 0.0
      %v3085 = vand.u32 %v1330, 4294901760
      %3086 = vmatpush1.msra.mxu0 %v3085
      %3087 = vmatprep.subr.mxu0 0.0
      %v3088 = vand.u32 %v1324, 4294901760
      %3089 = vmatpush1.msra.mxu0 %v3088
      %3090 = vmatprep.subr.mxu0 0.0
      %v3091 = vand.u32 %v1318, 4294901760
      %3092 = vmatpush1.msra.mxu0 %v3091
      %3093 = vmatprep.subr.mxu0 0.0
      %v3094 = vand.u32 %v1312, 4294901760
      %3095 = vmatpush1.msra.mxu0 %v3094
      %3096 = vmatprep.subr.mxu0 0.0
      %v3097 = vand.u32 %v1306, 4294901760
      %3098 = vmatpush1.msra.mxu0 %v3097
      %3099 = vmatprep.subr.mxu0 0.0
      %v3100 = vand.u32 %v1300, 4294901760
      %3101 = vmatpush1.msra.mxu0 %v3100
      %3102 = vmatprep.subr.mxu0 0.0
      %v3103 = vand.u32 %v1294, 4294901760
      %3104 = vmatpush1.msra.mxu0 %v3103
      %3105 = vmatprep.subr.mxu0 0.0
      %v3106 = vand.u32 %v1288, 4294901760
      %3107 = vmatpush1.msra.mxu0 %v3106
      %3108 = vmatprep.subr.mxu0 0.0
      %v3109 = vand.u32 %v1282, 4294901760
      %3110 = vmatpush1.msra.mxu0 %v3109
      %3111 = vmatprep.subr.mxu0 0.0
      %v3112 = vand.u32 %v1276, 4294901760
      %3113 = vmatpush1.msra.mxu0 %v3112
      %3114 = vmatprep.subr.mxu0 0.0
      %v3115 = vand.u32 %v1270, 4294901760
      %3116 = vmatpush1.msra.mxu0 %v3115
      %3117 = vmatprep.subr.mxu0 0.0
      %v3118 = vand.u32 %v1264, 4294901760
      %3119 = vmatpush1.msra.mxu0 %v3118
      %3120 = vmatprep.subr.mxu0 0.0
      %v3121 = vand.u32 %v1258, 4294901760
      %3122 = vmatpush1.msra.mxu0 %v3121
      %3123 = vmatprep.subr.mxu0 0.0
      %v3124 = vand.u32 %v1252, 4294901760
      %3125 = vmatpush1.msra.mxu0 %v3124
      %3126 = vmatprep.subr.mxu0 0.0
      %3127 = vmatpush2.msra.mxu0 0.0
      %3128 = vmatprep.subr.mxu0 0.0
      %3129 = vmatpush2.msra.mxu0 0.0
      %3130 = vmatprep.subr.mxu0 0.0
      %3131 = vmatpush2.msra.mxu0 0.0
      %3132 = vmatprep.subr.mxu0 0.0
      %3133 = vmatpush2.msra.mxu0 0.0
      %3134 = vmatprep.subr.mxu0 0.0
      %3135 = vmatpush2.msra.mxu0 0.0
      %3136 = vmatprep.subr.mxu0 0.0
      %3137 = vmatpush2.msra.mxu0 0.0
      %3138 = vmatprep.subr.mxu0 0.0
      %3139 = vmatpush2.msra.mxu0 0.0
      %3140 = vmatprep.subr.mxu0 0.0
      %3141 = vmatpush2.msra.mxu0 0.0
      %3142 = vmatprep.subr.mxu0 0.0
      %3143 = vmatpush2.msra.mxu0 0.0
      %3144 = vmatprep.subr.mxu0 0.0
      %3145 = vmatpush2.msra.mxu0 0.0
      %3146 = vmatprep.subr.mxu0 0.0
      %3147 = vmatpush2.msra.mxu0 0.0
      %3148 = vmatprep.subr.mxu0 0.0
      %3149 = vmatpush2.msra.mxu0 0.0
      %3150 = vmatprep.subr.mxu0 0.0
      %3151 = vmatpush2.msra.mxu0 0.0
      %3152 = vmatprep.subr.mxu0 0.0
      %3153 = vmatpush2.msra.mxu0 0.0
      %3154 = vmatprep.subr.mxu0 0.0
      %3155 = vmatpush2.msra.mxu0 0.0
      %3156 = vmatprep.subr.mxu0 0.0
      %3157 = vmatpush2.msra.mxu0 0.0
      %3158 = vmatprep.mubr.f32.mxu0 0.0
      %v3159 = vand.u32 %v1345, 4294901760
      %3160 = vmatmul.mubr.f32.gmra.mxu0 %v3159
      %v3161 = vpop.f32.mrf.mxu0
      %v3162 = vadd.f32 %v2889, %v3161
      %v3163 = vpop.f32.mrf.mxu0
      %3164 = vmatprep.mubr.f32.mxu0 0.0
      %v3165 = vand.u32 %v1346, 4294901760
      %3166 = vmatmul.mubr.f32.gmra.mxu0 %v3165
      %v3167 = vpop.f32.mrf.mxu0
      %v3168 = vadd.f32 %v2895, %v3167
      %v3169 = vpop.f32.mrf.mxu0
      %3170 = vmatprep.mubr.f32.mxu0 0.0
      %v3171 = vand.u32 %v1347, 4294901760
      %3172 = vmatmul.mubr.f32.gmra.mxu0 %v3171
      %v3173 = vpop.f32.mrf.mxu0
      %v3174 = vadd.f32 %v2901, %v3173
      %v3175 = vpop.f32.mrf.mxu0
      %3176 = vmatprep.mubr.f32.mxu0 0.0
      %v3177 = vand.u32 %v1348, 4294901760
      %3178 = vmatmul.mubr.f32.gmra.mxu0 %v3177
      %v3179 = vpop.f32.mrf.mxu0
      %v3180 = vadd.f32 %v2907, %v3179
      %v3181 = vpop.f32.mrf.mxu0
      %3182 = vmatprep.mubr.f32.mxu0 0.0
      %v3183 = vand.u32 %v1349, 4294901760
      %3184 = vmatmul.mubr.f32.gmra.mxu0 %v3183
      %v3185 = vpop.f32.mrf.mxu0
      %v3186 = vadd.f32 %v2913, %v3185
      %v3187 = vpop.f32.mrf.mxu0
      %3188 = vmatprep.mubr.f32.mxu0 0.0
      %v3189 = vand.u32 %v1350, 4294901760
      %3190 = vmatmul.mubr.f32.gmra.mxu0 %v3189
      %v3191 = vpop.f32.mrf.mxu0
      %v3192 = vadd.f32 %v2919, %v3191
      %v3193 = vpop.f32.mrf.mxu0
      %3194 = vmatprep.mubr.f32.mxu0 0.0
      %v3195 = vand.u32 %v1351, 4294901760
      %3196 = vmatmul.mubr.f32.gmra.mxu0 %v3195
      %v3197 = vpop.f32.mrf.mxu0
      %v3198 = vadd.f32 %v2925, %v3197
      %v3199 = vpop.f32.mrf.mxu0
      %3200 = vmatprep.mubr.f32.mxu0 0.0
      %v3201 = vand.u32 %v1352, 4294901760
      %3202 = vmatmul.mubr.f32.gmra.mxu0 %v3201
      %v3203 = vpop.f32.mrf.mxu0
      %v3204 = vadd.f32 %v2931, %v3203
      %v3205 = vpop.f32.mrf.mxu0
      %3206 = vmatprep.mubr.f32.mxu0 0.0
      %v3207 = vand.u32 %v1353, 4294901760
      %3208 = vmatmul.mubr.f32.gmra.mxu0 %v3207
      %v3209 = vpop.f32.mrf.mxu0
      %v3210 = vadd.f32 %v2937, %v3209
      %v3211 = vpop.f32.mrf.mxu0
      %3212 = vmatprep.mubr.f32.mxu0 0.0
      %v3213 = vand.u32 %v1354, 4294901760
      %3214 = vmatmul.mubr.f32.gmra.mxu0 %v3213
      %v3215 = vpop.f32.mrf.mxu0
      %v3216 = vadd.f32 %v2943, %v3215
      %v3217 = vpop.f32.mrf.mxu0
      %3218 = vmatprep.mubr.f32.mxu0 0.0
      %v3219 = vand.u32 %v1355, 4294901760
      %3220 = vmatmul.mubr.f32.gmra.mxu0 %v3219
      %v3221 = vpop.f32.mrf.mxu0
      %v3222 = vadd.f32 %v2949, %v3221
      %v3223 = vpop.f32.mrf.mxu0
      %3224 = vmatprep.mubr.f32.mxu0 0.0
      %v3225 = vand.u32 %v1356, 4294901760
      %3226 = vmatmul.mubr.f32.gmra.mxu0 %v3225
      %v3227 = vpop.f32.mrf.mxu0
      %v3228 = vadd.f32 %v2955, %v3227
      %v3229 = vpop.f32.mrf.mxu0
      %3230 = vmatprep.mubr.f32.mxu0 0.0
      %v3231 = vand.u32 %v1357, 4294901760
      %3232 = vmatmul.mubr.f32.gmra.mxu0 %v3231
      %v3233 = vpop.f32.mrf.mxu0
      %v3234 = vadd.f32 %v2961, %v3233
      %v3235 = vpop.f32.mrf.mxu0
      %3236 = vmatprep.mubr.f32.mxu0 0.0
      %v3237 = vand.u32 %v1358, 4294901760
      %3238 = vmatmul.mubr.f32.gmra.mxu0 %v3237
      %v3239 = vpop.f32.mrf.mxu0
      %v3240 = vadd.f32 %v2967, %v3239
      %v3241 = vpop.f32.mrf.mxu0
      %3242 = vmatprep.mubr.f32.mxu0 0.0
      %v3243 = vand.u32 %v1359, 4294901760
      %3244 = vmatmul.mubr.f32.gmra.mxu0 %v3243
      %v3245 = vpop.f32.mrf.mxu0
      %v3246 = vadd.f32 %v2973, %v3245
      %v3247 = vpop.f32.mrf.mxu0
      %3248 = vmatprep.mubr.f32.mxu0 0.0
      %v3249 = vand.u32 %v1360, 4294901760
      %3250 = vmatmul.mubr.f32.gmra.mxu0 %v3249
      %v3251 = vpop.f32.mrf.mxu0
      %v3252 = vadd.f32 %v2979, %v3251
      %v3253 = vpop.f32.mrf.mxu0
      %3254 = vmatprep.mubr.f32.mxu0 0.0
      %v3255 = vand.u32 %v1361, 4294901760
      %3256 = vmatmul.mubr.f32.gmra.mxu0 %v3255
      %v3257 = vpop.f32.mrf.mxu0
      %v3258 = vadd.f32 %v2985, %v3257
      %v3259 = vpop.f32.mrf.mxu0
      %3260 = vmatprep.mubr.f32.mxu0 0.0
      %v3261 = vand.u32 %v1362, 4294901760
      %3262 = vmatmul.mubr.f32.gmra.mxu0 %v3261
      %v3263 = vpop.f32.mrf.mxu0
      %v3264 = vadd.f32 %v2991, %v3263
      %v3265 = vpop.f32.mrf.mxu0
      %3266 = vmatprep.mubr.f32.mxu0 0.0
      %v3267 = vand.u32 %v1363, 4294901760
      %3268 = vmatmul.mubr.f32.gmra.mxu0 %v3267
      %v3269 = vpop.f32.mrf.mxu0
      %v3270 = vadd.f32 %v2997, %v3269
      %v3271 = vpop.f32.mrf.mxu0
      %3272 = vmatprep.mubr.f32.mxu0 0.0
      %v3273 = vand.u32 %v1364, 4294901760
      %3274 = vmatmul.mubr.f32.gmra.mxu0 %v3273
      %v3275 = vpop.f32.mrf.mxu0
      %v3276 = vadd.f32 %v3003, %v3275
      %v3277 = vpop.f32.mrf.mxu0
      %3278 = vmatprep.mubr.f32.mxu0 0.0
      %v3279 = vand.u32 %v1365, 4294901760
      %3280 = vmatmul.mubr.f32.gmra.mxu0 %v3279
      %v3281 = vpop.f32.mrf.mxu0
      %v3282 = vadd.f32 %v3009, %v3281
      %v3283 = vpop.f32.mrf.mxu0
      %3284 = vmatprep.mubr.f32.mxu0 0.0
      %v3285 = vand.u32 %v1366, 4294901760
      %3286 = vmatmul.mubr.f32.gmra.mxu0 %v3285
      %v3287 = vpop.f32.mrf.mxu0
      %v3288 = vadd.f32 %v3015, %v3287
      %v3289 = vpop.f32.mrf.mxu0
      %3290 = vmatprep.mubr.f32.mxu0 0.0
      %v3291 = vand.u32 %v1367, 4294901760
      %3292 = vmatmul.mubr.f32.gmra.mxu0 %v3291
      %v3293 = vpop.f32.mrf.mxu0
      %v3294 = vadd.f32 %v3021, %v3293
      %v3295 = vpop.f32.mrf.mxu0
      %3296 = vmatprep.mubr.f32.mxu0 0.0
      %v3297 = vand.u32 %v1368, 4294901760
      %3298 = vmatmul.mubr.f32.gmra.mxu0 %v3297
      %v3299 = vpop.f32.mrf.mxu0
      %v3300 = vadd.f32 %v3027, %v3299
      %v3301 = vpop.f32.mrf.mxu0
      %3302 = vmatprep.mubr.f32.mxu0 0.0
      %v3303 = vand.u32 %v1369, 4294901760
      %3304 = vmatmul.mubr.f32.gmra.mxu0 %v3303
      %v3305 = vpop.f32.mrf.mxu0
      %v3306 = vadd.f32 %v3033, %v3305
      %v3307 = vpop.f32.mrf.mxu0
      %3308 = vmatprep.mubr.f32.mxu0 0.0
      %v3309 = vand.u32 %v1370, 4294901760
      %3310 = vmatmul.mubr.f32.gmra.mxu0 %v3309
      %v3311 = vpop.f32.mrf.mxu0
      %v3312 = vadd.f32 %v3039, %v3311
      %v3313 = vpop.f32.mrf.mxu0
      %3314 = vmatprep.mubr.f32.mxu0 0.0
      %v3315 = vand.u32 %v1371, 4294901760
      %3316 = vmatmul.mubr.f32.gmra.mxu0 %v3315
      %v3317 = vpop.f32.mrf.mxu0
      %v3318 = vadd.f32 %v3045, %v3317
      %v3319 = vpop.f32.mrf.mxu0
      %3320 = vmatprep.mubr.f32.mxu0 0.0
      %v3321 = vand.u32 %v1372, 4294901760
      %3322 = vmatmul.mubr.f32.gmra.mxu0 %v3321
      %v3323 = vpop.f32.mrf.mxu0
      %v3324 = vadd.f32 %v3051, %v3323
      %v3325 = vpop.f32.mrf.mxu0
      %3326 = vmatprep.mubr.f32.mxu0 0.0
      %v3327 = vand.u32 %v1373, 4294901760
      %3328 = vmatmul.mubr.f32.gmra.mxu0 %v3327
      %v3329 = vpop.f32.mrf.mxu0
      %v3330 = vadd.f32 %v3057, %v3329
      %v3331 = vpop.f32.mrf.mxu0
      %3332 = vmatprep.mubr.f32.mxu0 0.0
      %v3333 = vand.u32 %v1374, 4294901760
      %3334 = vmatmul.mubr.f32.gmra.mxu0 %v3333
      %v3335 = vpop.f32.mrf.mxu0
      %v3336 = vadd.f32 %v3063, %v3335
      %v3337 = vpop.f32.mrf.mxu0
      %3338 = vmatprep.mubr.f32.mxu0 0.0
      %v3339 = vand.u32 %v1375, 4294901760
      %3340 = vmatmul.mubr.f32.gmra.mxu0 %v3339
      %v3341 = vpop.f32.mrf.mxu0
      %v3342 = vadd.f32 %v3069, %v3341
      %v3343 = vpop.f32.mrf.mxu0
      %3344 = vmatprep.mubr.f32.mxu0 0.0
      %v3345 = vand.u32 %v1376, 4294901760
      %3346 = vmatmul.mubr.f32.gmra.mxu0 %v3345
      %v3347 = vpop.f32.mrf.mxu0
      %v3348 = vadd.f32 %v3075, %v3347
      %v3349 = vpop.f32.mrf.mxu0
      %3350 = vdwg.mxu0
      %vm3351 = vcmask 261120
      %3352 = vst.msk [vmem:[%s172] sm:$0xff] %vm3351, %v3162
      %3353 = vst.msk [vmem:[%s172 + $0x8] sm:$0xff] %vm3351, %v3168
      %3354 = vst.msk [vmem:[%s172 + $0x10] sm:$0xff] %vm3351, %v3174
      %3355 = vst.msk [vmem:[%s172 + $0x18] sm:$0xff] %vm3351, %v3180
      %3356 = vst.msk [vmem:[%s172 + $0x20] sm:$0xff] %vm3351, %v3186
      %3357 = vst.msk [vmem:[%s172 + $0x28] sm:$0xff] %vm3351, %v3192
      %3358 = vst.msk [vmem:[%s172 + $0x30] sm:$0xff] %vm3351, %v3198
      %3359 = vst.msk [vmem:[%s172 + $0x38] sm:$0xff] %vm3351, %v3204
      %3360 = vst.msk [vmem:[%s172 + $0x40] sm:$0xff] %vm3351, %v3210
      %3361 = vst.msk [vmem:[%s172 + $0x48] sm:$0xff] %vm3351, %v3216
      %3362 = vst.msk [vmem:[%s172 + $0x50] sm:$0xff] %vm3351, %v3222
      %3363 = vst.msk [vmem:[%s172 + $0x58] sm:$0xff] %vm3351, %v3228
      %3364 = vst.msk [vmem:[%s172 + $0x60] sm:$0xff] %vm3351, %v3234
      %3365 = vst.msk [vmem:[%s172 + $0x68] sm:$0xff] %vm3351, %v3240
      %3366 = vst.msk [vmem:[%s172 + $0x70] sm:$0xff] %vm3351, %v3246
      %3367 = vst.msk [vmem:[%s172 + $0x78] sm:$0xff] %vm3351, %v3252
      %3368 = vst.msk [vmem:[%s172 + $0x80] sm:$0xff] %vm3351, %v3258
      %3369 = vst.msk [vmem:[%s172 + $0x88] sm:$0xff] %vm3351, %v3264
      %3370 = vst.msk [vmem:[%s172 + $0x90] sm:$0xff] %vm3351, %v3270
      %3371 = vst.msk [vmem:[%s172 + $0x98] sm:$0xff] %vm3351, %v3276
      %3372 = vst.msk [vmem:[%s172 + $0xa0] sm:$0xff] %vm3351, %v3282
      %3373 = vst.msk [vmem:[%s172 + $0xa8] sm:$0xff] %vm3351, %v3288
      %3374 = vst.msk [vmem:[%s172 + $0xb0] sm:$0xff] %vm3351, %v3294
      %3375 = vst.msk [vmem:[%s172 + $0xb8] sm:$0xff] %vm3351, %v3300
      %3376 = vst.msk [vmem:[%s172 + $0xc0] sm:$0xff] %vm3351, %v3306
      %3377 = vst.msk [vmem:[%s172 + $0xc8] sm:$0xff] %vm3351, %v3312
      %3378 = vst.msk [vmem:[%s172 + $0xd0] sm:$0xff] %vm3351, %v3318
      %3379 = vst.msk [vmem:[%s172 + $0xd8] sm:$0xff] %vm3351, %v3324
      %3380 = vst.msk [vmem:[%s172 + $0xe0] sm:$0xff] %vm3351, %v3330
      %3381 = vst.msk [vmem:[%s172 + $0xe8] sm:$0xff] %vm3351, %v3336
      %3382 = vst.msk [vmem:[%s172 + $0xf0] sm:$0xff] %vm3351, %v3342
      %3383 = vst.msk [vmem:[%s172 + $0xf8] sm:$0xff] %vm3351, %v3348
      %s3384 = smul.u32 32, %s14
      %p3385 = scmp.lt.s32.totalorder %s3384, 63
      %s3386 = scalar_select %p3385, %s3384, 63
      %s3387 = smul.addr %s3386, 8
      %s3388 = scalar_lea.vmem %s3, %s3387
      // Predicated region
      $region33: #{complex_upsample.1} parent=31 // pred_check
        %p3389 = pneg %p100
      $region34: #{complex_upsample.1} parent=31 // pred_check_branch
        %3391 = sbr.rel (%p3389) target = $region36
      $region35: #{complex_upsample.1} parent=31 // pred_region
        %s3392 = smul.u32 32, %s14
      $region36: #{complex_upsample.1} parent=31 // pred_fallthru
        _
    $region32: #{complex_upsample.1} parent=5 // pred_fallthru
      _
    %p3393 = scmp.le.s32.totalorder 2, %s9
    // Predicated region
    $region37: #{complex_upsample.1} parent=5 // pred_check
      %p3394 = pneg %p3393
    $region38: #{complex_upsample.1} parent=5 // pred_check_branch
      %3396 = sbr.rel (%p3394) target = $region40
    $region39: #{complex_upsample.1} parent=5 // pred_region
      %s3397 = ssub.s32 %s9, 2
      // Predicated region
      $region41: #{complex_upsample.1} parent=39 // pred_check
        %p3398 = pneg %p106
      $region42: #{complex_upsample.1} parent=39 // pred_check_branch
        %3400 = sbr.rel (%p3398) target = $region44
      $region43: #{complex_upsample.1} parent=39 // pred_region
        %s3401 = smul.u32 32, %s15
        %p3402 = scmp.lt.s32.totalorder %s3401, 63
        %s3403 = scalar_select %p3402, %s3401, 63
        %s3404 = smul.addr %s3403, 8
        %s3405 = scalar_lea.vmem %s3, %s3404
      $region44: #{complex_upsample.1} parent=39 // pred_fallthru
        _
    $region40: #{complex_upsample.1} parent=5 // pred_fallthru
      _
  $region6: #{complex_upsample.1} parent=0 // loop_footer
    %s13 = sadd.s32 1, %s9
  $region7: #{complex_upsample.1} parent=0 // loop_footer_branch
    %8 = sbr.rel target = $region3
  $region8: #{complex_upsample.1} parent=0 // loop_exit
    _

</llo_original>
